<compile_context>
chip_gen: v7x
topology: tpu7x:2x2x1
jax: 0.10.0
libtpu: 0.0.40
codegen_flags: <defaults>
</compile_context>

<pallas_src>
import jax
import jax.numpy as jnp
from jax import lax
from jax.experimental import pallas as pl
from jax.experimental.pallas import tpu as pltpu

EPS = 1e-5

# Network dimensions implied by LRPModel._get_layer_operations().
CIN, H0, W0 = 4, 16, 16          # input
C1, H1, W1 = 8, 14, 14           # conv1 / relu1 output
C2, H2, W2 = 8, 12, 12           # conv2 / relu2 output
KH, KW = 3, 3
DFC1, DFC2, DOUT = 32, 32, 10

WC0 = W0 * CIN                    # 64   lanes of the input "L" layout
WC1 = W1 * C1                     # 112  lanes of the conv1-output layout
WC2 = W2 * C2                     # 96   lanes of the conv2-output layout
KIN1 = KH * WC0                   # 192  im2row width for conv1
HD = H2 * DFC1                    # 384  merged (h, fc1-unit) axis


def _mm(a, b):
    return jnp.dot(a, b, preferred_element_type=jnp.float32)


def _mm_nt(a, b):
    # a @ b.T without materializing a transpose (contract last dims of both).
    return lax.dot_general(a, b, (((1,), (1,)), ((), ())),
                           preferred_element_type=jnp.float32)


def _cat(parts, axis):
    # Avoid emitting a concatenate primitive for the (common) single-piece case.
    return parts[0] if len(parts) == 1 else jnp.concatenate(parts, axis=axis)


# ------------------------------------------------------------------ kernel --

def _make_kernel(B):
    """Fused forward + LRP kernel for B batch elements per grid step."""

    def kernel(x_ref, w1f_ref, b1_ref,
               w2f_ref, w2fp_ref, b2_ref,
               wfc1t_ref, wfc1pt_ref, mask_ref, sel_ref,
               bfc1_ref, wfc2t_ref, wfc2tp_ref, bfc2_ref,
               wfc3t_ref, wfc3tp_ref, bfc3_ref,
               w2bp_ref, w1bp_ref, z1p_ref,
               o_ref, c2_acc, c1_acc):
        # ------------------------------ forward ------------------------------
        x = x_ref[0]                                        # (B*14, 192) im2row
        # conv1 + relu1: one matmul for all B elements (K=192 stacked bands).
        h1 = jnp.maximum(_mm(x, w1f_ref[...]) + b1_ref[...], 0.0)   # (B*14,112)

        # conv2 + relu2, and the conv2-LRP z+ denominator, sharing LHS slices.
        h2_parts, z2p_parts = [], []
        for b in range(B):
            z = b2_ref[...]                                  # (1, 96) broadcast
            zp = jnp.zeros((H2, WC2), jnp.float32)
            for i in range(KH):
                lhs = h1[b * H1 + i: b * H1 + i + H2, :]     # (12, 112)
                z = z + _mm(lhs, w2f_ref[i])
                zp = zp + _mm(lhs, w2fp_ref[i])              # pre-clamped band
            h2_parts.append(jnp.maximum(z, 0.0))
            z2p_parts.append(zp)
        h2 = _cat(h2_parts, axis=0)                          # (B*12, 96)
        z2p = _cat(z2p_parts, axis=0)                        # (B*12, 96)

        # flatten + fc1 forward via merged weights + block-diag masked reduce.
        mask = mask_ref[...]                                 # (12, 384)
        p_raw = _mm_nt(h2, wfc1t_ref[...])                   # (B*12, 384)
        p_cl = _mm_nt(h2, wfc1pt_ref[...])                   # (clamped weights)
        red_raw_parts, red_cl_parts = [], []
        for b in range(B):
            sl = slice(b * H2, (b + 1) * H2)
            red_raw_parts.append(
                jnp.sum(mask * p_raw[sl, :], axis=0, keepdims=True))
            red_cl_parts.append(
                jnp.sum(mask * p_cl[sl, :], axis=0, keepdims=True))
        red_raw = _cat(red_raw_parts, axis=0)                # (B, 384)
        red_cl = _cat(red_cl_parts, axis=0)
        h3 = _mm(red_raw, sel_ref[...]) + bfc1_ref[...]      # fc1   (B, 32)
        zf1 = _mm(red_cl, sel_ref[...]) + EPS                # z+ denom (B, 32)
        h3r = jnp.maximum(h3, 0.0)                           # relu3

        h4 = _mm(h3r, wfc2t_ref[...]) + bfc2_ref[...]        # fc2   (B, 32)
        h5 = _mm(h4, wfc3t_ref[...]) + bfc3_ref[...]         # fc3   (B, 10)

        # --------------------- relevance propagation ------------------------
        m = jnp.max(h5, axis=-1, keepdims=True)
        e = jnp.exp(h5 - m)
        rel = e / jnp.sum(e, axis=-1, keepdims=True)         # softmax (B, 10)

        # fc3 LRP (activation = fc2 output h4)
        wp3t = wfc3tp_ref[...]                               # (32, 10) clamped
        s = rel / (_mm(h4, wp3t) + EPS)
        rel = h4 * _mm_nt(s, wp3t)                           # (B, 32)

        # fc2 LRP (activation = relu3 output; relu3 LRP is identity)
        wp2t = wfc2tp_ref[...]                               # (32, 32) clamped
        s = rel / (_mm(h3r, wp2t) + EPS)
        rel = h3r * _mm_nt(s, wp2t)                          # (B, 32)

        # fc1 LRP + flatten LRP: relevance directly in layout (B*12, 96)
        s1 = rel / zf1                                       # (B, 32)
        s1_tiled = _mm_nt(s1, sel_ref[...])                  # (B, 384)
        lhs = _cat([mask * s1_tiled[b:b + 1, :] for b in range(B)], axis=0)
        ch = _mm(lhs, wfc1pt_ref[...])                       # (B*12, 96)
        r2 = h2 * ch

        # conv2 LRP (relu2 LRP identity; activation = relu1 output h1)
        s2 = r2 / (z2p + EPS)
        c2_acc[...] = jnp.zeros_like(c2_acc)
        for i in range(KH):
            t = _mm(s2, w2bp_ref[i])                         # (B*12, 112)
            for b in range(B):
                lo = b * H1 + i
                c2_acc[lo:lo + H2, :] = (c2_acc[lo:lo + H2, :]
                                         + t[b * H2:(b + 1) * H2, :])
        r1 = h1 * c2_acc[...]                                # (B*14, 112)

        # conv1 LRP (relu1 LRP identity; activation = ones_like(x), so the
        # z+ denominator z1p is constant and precomputed in the wrapper)
        s1c = r1 / z1p_ref[...]                              # broadcast (1,112)
        c1_acc[...] = jnp.zeros_like(c1_acc)
        for i in range(KH):
            u = _mm(s1c, w1bp_ref[i])                        # (B*14, 64)
            for b in range(B):
                lo = b * H0 + i
                c1_acc[lo:lo + H1, :] = (c1_acc[lo:lo + H1, :]
                                         + u[b * H1:(b + 1) * H1, :])

        # relevance at input = ones * c1 = c1; write lane-dense (16, B*64),
        # channel sum + un-stacking happen in XLA outside the kernel.
        o_ref[0] = _cat([c1_acc[b * H0:(b + 1) * H0, :] for b in range(B)],
                        axis=1)

    return kernel


# ----------------------------------------------- banded weight construction --
# (runs in plain XLA inside jit, once per call; all matrices are tiny)

def _conv_fwd_bands(w, win, wout):
    # bands[i]: (win*Cin, wout*Cout) s.t. conv_fwd = sum_i a_L[i:i+OH,:] @ bands[i]
    cout, cin, kh, kw = w.shape
    bands = []
    for i in range(kh):
        b = jnp.zeros((win * cin, wout * cout), w.dtype)
        for j in range(kw):
            b = b + jnp.kron(jnp.eye(win, wout, k=-j, dtype=w.dtype),
                             w[:, :, i, j].T)
        bands.append(b)
    return jnp.stack(bands)                                  # (kh, win*Cin, wout*Cout)


def _conv_bwd_bands(w, win, wout):
    # bands[i]: (wout*Cout, win*Cin) for the transposed conv (row-shift i)
    cout, cin, kh, kw = w.shape
    bands = []
    for i in range(kh):
        b = jnp.zeros((wout * cout, win * cin), w.dtype)
        for j in range(kw):
            b = b + jnp.kron(jnp.eye(wout, win, k=j, dtype=w.dtype),
                             w[:, :, i, j])
        bands.append(b)
    return jnp.stack(bands)                                  # (kh, wout*Cout, win*Cin)


def _pick_block_batch(n):
    # Largest divisor of n that still leaves >=2 grid steps so the "parallel"
    # grid axis can shard across v7x's two TensorCores; on single-TC chips the
    # grid is just a serial loop, so this only costs a little amortization.
    if n < 2:
        return 1
    best = 1
    for d in range(1, n // 2 + 1):
        if n % d == 0:
            best = d
    return best


# ----------------------------------------------------------------- wrapper --

def init_params(key):
    ks = jax.random.split(key, 10)
    return {
        "w_conv1": 0.1 * jax.random.normal(ks[0], (C1, CIN, KH, KW), jnp.float32),
        "b_conv1": 0.1 * jax.random.normal(ks[1], (C1,), jnp.float32),
        "w_conv2": 0.1 * jax.random.normal(ks[2], (C2, C1, KH, KW), jnp.float32),
        "b_conv2": 0.1 * jax.random.normal(ks[3], (C2,), jnp.float32),
        "w_fc1": 0.05 * jax.random.normal(ks[4], (DFC1, C2 * H2 * W2), jnp.float32),
        "b_fc1": 0.1 * jax.random.normal(ks[5], (DFC1,), jnp.float32),
        "w_fc2": 0.1 * jax.random.normal(ks[6], (DFC2, DFC1), jnp.float32),
        "b_fc2": 0.1 * jax.random.normal(ks[7], (DFC2,), jnp.float32),
        "w_fc3": 0.1 * jax.random.normal(ks[8], (DOUT, DFC2), jnp.float32),
        "b_fc3": 0.1 * jax.random.normal(ks[9], (DOUT,), jnp.float32),
    }


def lrp_model_forward(x, p):
    """Equivalent of LRPModel.forward(x) with top_k = 0.0."""
    N = x.shape[0]
    dt = jnp.float32
    B = _pick_block_batch(N)
    S = N // B
    relu = lambda a: jnp.maximum(a, 0.0)

    # --- weight re-layout + clamp hoisting (tiny, once per call) ---
    w1f = _conv_fwd_bands(p["w_conv1"], W0, W1).reshape(KIN1, WC1)   # (192,112)
    z1p = relu(w1f).sum(axis=0, keepdims=True) + EPS                 # (1,112)
    w1bp = relu(_conv_bwd_bands(p["w_conv1"], W0, W1))               # (3,112,64)
    b1r = jnp.tile(p["b_conv1"], W1)[None, :]                        # (1,112)

    w2f = _conv_fwd_bands(p["w_conv2"], W1, W2)                      # (3,112,96)
    w2fp = relu(w2f)
    w2bp = relu(_conv_bwd_bands(p["w_conv2"], W1, W2))               # (3,96,112)
    b2r = jnp.tile(p["b_conv2"], W2)[None, :]                        # (1,96)

    # fc1 weight in merged layout: [h*32+d, w*8+c] = w_fc1[d, c*144+h*12+w]
    t = p["w_fc1"].reshape(DFC1, C2, H2, W2)
    wfc1t = t.transpose(2, 0, 3, 1).reshape(HD, WC2)                 # (384,96)
    wfc1pt = relu(wfc1t)
    # block-diagonal mask / column selector for the (h, d)-merged axis
    mask = jnp.kron(jnp.eye(H2, dtype=dt), jnp.ones((1, DFC1), dt))  # (12,384)
    sel = jnp.tile(jnp.eye(DFC1, dtype=dt), (H2, 1))                 # (384,32)

    wfc2t = p["w_fc2"].T                                             # (32,32)
    wfc3t = p["w_fc3"].T                                             # (32,10)
    wfc2tp = relu(wfc2t)
    wfc3tp = relu(wfc3t)
    bfc1 = p["b_fc1"][None, :]
    bfc2 = p["b_fc2"][None, :]
    bfc3 = p["b_fc3"][None, :]

    # input: layout L + im2row over the 3 kernel rows, grouped B per grid step
    x_l = x.transpose(0, 2, 3, 1).reshape(N, H0, WC0)
    x_im = jnp.concatenate([x_l[:, i:i + H1, :] for i in range(KH)], axis=-1)
    x_im = x_im.reshape(S, B * H1, KIN1)                             # (S,B*14,192)

    operands = (x_im, w1f, b1r, w2f, w2fp, b2r,
                wfc1t, wfc1pt, mask, sel,
                bfc1, wfc2t, wfc2tp, bfc2, wfc3t, wfc3tp, bfc3,
                w2bp, w1bp, z1p)

    def rep(o):
        if o.ndim == 2:
            return pl.BlockSpec(o.shape, lambda s: (0, 0))
        return pl.BlockSpec(o.shape, lambda s: (0, 0, 0))

    in_specs = [pl.BlockSpec((1, B * H1, KIN1), lambda s: (s, 0, 0))]
    in_specs += [rep(o) for o in operands[1:]]

    out = pl.pallas_call(
        _make_kernel(B),
        out_shape=jax.ShapeDtypeStruct((S, H0, B * WC0), dt),
        grid=(S,),
        in_specs=in_specs,
        out_specs=pl.BlockSpec((1, H0, B * WC0), lambda s: (s, 0, 0)),
        scratch_shapes=[pltpu.VMEM((B * H1, WC1), dt),   # c2 accumulator
                        pltpu.VMEM((B * H0, WC0), dt)],  # c1 accumulator
        compiler_params=pltpu.CompilerParams(
            dimension_semantics=("parallel",)),
    )(*operands)

    # channel sum + un-stacking, done lane-dense outside the kernel:
    # out[s, ih, b*64 + w*4 + c]  ->  (N, 16, 16)
    out = out.reshape(S, H0, B, W0, CIN).transpose(0, 2, 1, 3, 4)
    out = out.reshape(N, H0, W0, CIN).sum(axis=-1)
    # relevance.permute(0,2,3,1).sum(-1).squeeze()  -> already (N, H, W) here
    return jnp.squeeze(out)
    # TODO(synk): .detach().cpu() are host-side no-ops in JAX (jax.device_get if needed).


if __name__ == "__main__":
    key = jax.random.PRNGKey(0)
    k_param, k_x = jax.random.split(key)
    params = init_params(k_param)
    x = jax.random.normal(k_x, (2, CIN, H0, W0), jnp.float32)

    out = jax.jit(lrp_model_forward)(x, params)
    out = jax.block_until_ready(out)

    assert out.shape == (2, H0, W0), out.shape
    assert bool(jnp.all(jnp.isfinite(out))), "non-finite relevance"
    print("KERNEL_OK")
</pallas_src>

<mosaic_0001>
module attributes {stable_mosaic.version = 11 : i64} {
  func.func @kernel(%arg0: i32, %arg1: memref<1x14x192xf32, #tpu.memory_space<vmem>>, %arg2: memref<192x112xf32, #tpu.memory_space<vmem>>, %arg3: memref<1x112xf32, #tpu.memory_space<vmem>>, %arg4: memref<3x112x96xf32, #tpu.memory_space<vmem>>, %arg5: memref<3x112x96xf32, #tpu.memory_space<vmem>>, %arg6: memref<1x96xf32, #tpu.memory_space<vmem>>, %arg7: memref<384x96xf32, #tpu.memory_space<vmem>>, %arg8: memref<384x96xf32, #tpu.memory_space<vmem>>, %arg9: memref<12x384xf32, #tpu.memory_space<vmem>>, %arg10: memref<384x32xf32, #tpu.memory_space<vmem>>, %arg11: memref<1x32xf32, #tpu.memory_space<vmem>>, %arg12: memref<32x32xf32, #tpu.memory_space<vmem>>, %arg13: memref<32x32xf32, #tpu.memory_space<vmem>>, %arg14: memref<1x32xf32, #tpu.memory_space<vmem>>, %arg15: memref<32x10xf32, #tpu.memory_space<vmem>>, %arg16: memref<32x10xf32, #tpu.memory_space<vmem>>, %arg17: memref<1x10xf32, #tpu.memory_space<vmem>>, %arg18: memref<3x96x112xf32, #tpu.memory_space<vmem>>, %arg19: memref<3x112x64xf32, #tpu.memory_space<vmem>>, %arg20: memref<1x112xf32, #tpu.memory_space<vmem>>, %arg21: memref<1x16x64xf32, #tpu.memory_space<vmem>>, %arg22: memref<14x112xf32, #tpu.memory_space<vmem>>, %arg23: memref<16x64xf32, #tpu.memory_space<vmem>>) attributes {dimension_semantics = [#tpu.dimension_semantics<parallel>], iteration_bounds = array<i64: 2>, scalar_prefetch = 0 : i64, scratch_operands = 2 : i64, tpu.core_type = #tpu.core_type<tc>, window_params = [{transform_indices = @transform_0, window_bounds = array<i64: 1, 14, 192>}, {pipeline_mode = #tpu.pipeline_mode<synchronous>, transform_indices = @transform_1, window_bounds = array<i64: 192, 112>}, {pipeline_mode = #tpu.pipeline_mode<synchronous>, transform_indices = @transform_2, window_bounds = array<i64: 1, 112>}, {pipeline_mode = #tpu.pipeline_mode<synchronous>, transform_indices = @transform_3, window_bounds = array<i64: 3, 112, 96>}, {pipeline_mode = #tpu.pipeline_mode<synchronous>, transform_indices = @transform_4, window_bounds = array<i64: 3, 112, 96>}, {pipeline_mode = #tpu.pipeline_mode<synchronous>, transform_indices = @transform_5, window_bounds = array<i64: 1, 96>}, {pipeline_mode = #tpu.pipeline_mode<synchronous>, transform_indices = @transform_6, window_bounds = array<i64: 384, 96>}, {pipeline_mode = #tpu.pipeline_mode<synchronous>, transform_indices = @transform_7, window_bounds = array<i64: 384, 96>}, {pipeline_mode = #tpu.pipeline_mode<synchronous>, transform_indices = @transform_8, window_bounds = array<i64: 12, 384>}, {pipeline_mode = #tpu.pipeline_mode<synchronous>, transform_indices = @transform_9, window_bounds = array<i64: 384, 32>}, {pipeline_mode = #tpu.pipeline_mode<synchronous>, transform_indices = @transform_10, window_bounds = array<i64: 1, 32>}, {pipeline_mode = #tpu.pipeline_mode<synchronous>, transform_indices = @transform_11, window_bounds = array<i64: 32, 32>}, {pipeline_mode = #tpu.pipeline_mode<synchronous>, transform_indices = @transform_12, window_bounds = array<i64: 32, 32>}, {pipeline_mode = #tpu.pipeline_mode<synchronous>, transform_indices = @transform_13, window_bounds = array<i64: 1, 32>}, {pipeline_mode = #tpu.pipeline_mode<synchronous>, transform_indices = @transform_14, window_bounds = array<i64: 32, 10>}, {pipeline_mode = #tpu.pipeline_mode<synchronous>, transform_indices = @transform_15, window_bounds = array<i64: 32, 10>}, {pipeline_mode = #tpu.pipeline_mode<synchronous>, transform_indices = @transform_16, window_bounds = array<i64: 1, 10>}, {pipeline_mode = #tpu.pipeline_mode<synchronous>, transform_indices = @transform_17, window_bounds = array<i64: 3, 96, 112>}, {pipeline_mode = #tpu.pipeline_mode<synchronous>, transform_indices = @transform_18, window_bounds = array<i64: 3, 112, 64>}, {pipeline_mode = #tpu.pipeline_mode<synchronous>, transform_indices = @transform_19, window_bounds = array<i64: 1, 112>}, {transform_indices = @transform_20, window_bounds = array<i64: 1, 16, 64>}]} {
    %c0 = arith.constant 0 : index
    %c0_0 = arith.constant 0 : index
    %c0_1 = arith.constant 0 : index
    %0 = vector.load %arg1[%c0, %c0_0, %c0_1] : memref<1x14x192xf32, #tpu.memory_space<vmem>>, vector<1x14x192xf32>
    %1 = vector.shape_cast %0 : vector<1x14x192xf32> to vector<14x192xf32>
    %c0_2 = arith.constant 0 : index
    %c0_3 = arith.constant 0 : index
    %2 = vector.load %arg2[%c0_2, %c0_3] : memref<192x112xf32, #tpu.memory_space<vmem>>, vector<192x112xf32>
    %cst = arith.constant dense<0.000000e+00> : vector<14x112xf32>
    %3 = tpu.matmul %1, %2, %cst {dimension_numbers = #tpu.dot_dimension_numbers<[1], [0], [0], [1], [0, 0, 1, 1], [], []>} : vector<14x192xf32>, vector<192x112xf32>, vector<14x112xf32> -> vector<14x112xf32>
    %c0_4 = arith.constant 0 : index
    %c0_5 = arith.constant 0 : index
    %4 = vector.load %arg3[%c0_4, %c0_5] : memref<1x112xf32, #tpu.memory_space<vmem>>, vector<1x112xf32>
    %5 = vector.broadcast %4 : vector<1x112xf32> to vector<14x112xf32>
    %6 = arith.addf %3, %5 : vector<14x112xf32>
    %cst_6 = arith.constant 0.000000e+00 : f32
    %7 = vector.broadcast %cst_6 : f32 to vector<14x112xf32>
    %8 = arith.maximumf %6, %7 : vector<14x112xf32>
    %c0_7 = arith.constant 0 : index
    %c0_8 = arith.constant 0 : index
    %9 = vector.load %arg6[%c0_7, %c0_8] : memref<1x96xf32, #tpu.memory_space<vmem>>, vector<1x96xf32>
    %cst_9 = arith.constant 0.000000e+00 : f32
    %10 = vector.broadcast %cst_9 : f32 to vector<12x96xf32>
    %11 = vector.extract_strided_slice %8 {offsets = [0, 0], sizes = [12, 112], strides = [1, 1]} : vector<14x112xf32> to vector<12x112xf32>
    %c0_10 = arith.constant 0 : index
    %c0_11 = arith.constant 0 : index
    %c0_12 = arith.constant 0 : index
    %12 = vector.load %arg4[%c0_10, %c0_11, %c0_12] : memref<3x112x96xf32, #tpu.memory_space<vmem>>, vector<1x112x96xf32>
    %13 = vector.shape_cast %12 : vector<1x112x96xf32> to vector<112x96xf32>
    %cst_13 = arith.constant dense<0.000000e+00> : vector<12x96xf32>
    %14 = tpu.matmul %11, %13, %cst_13 {dimension_numbers = #tpu.dot_dimension_numbers<[1], [0], [0], [1], [0, 0, 1, 1], [], []>} : vector<12x112xf32>, vector<112x96xf32>, vector<12x96xf32> -> vector<12x96xf32>
    %15 = vector.broadcast %9 : vector<1x96xf32> to vector<12x96xf32>
    %16 = arith.addf %15, %14 : vector<12x96xf32>
    %c0_14 = arith.constant 0 : index
    %c0_15 = arith.constant 0 : index
    %c0_16 = arith.constant 0 : index
    %17 = vector.load %arg5[%c0_14, %c0_15, %c0_16] : memref<3x112x96xf32, #tpu.memory_space<vmem>>, vector<1x112x96xf32>
    %18 = vector.shape_cast %17 : vector<1x112x96xf32> to vector<112x96xf32>
    %cst_17 = arith.constant dense<0.000000e+00> : vector<12x96xf32>
    %19 = tpu.matmul %11, %18, %cst_17 {dimension_numbers = #tpu.dot_dimension_numbers<[1], [0], [0], [1], [0, 0, 1, 1], [], []>} : vector<12x112xf32>, vector<112x96xf32>, vector<12x96xf32> -> vector<12x96xf32>
    %20 = arith.addf %10, %19 : vector<12x96xf32>
    %21 = vector.extract_strided_slice %8 {offsets = [1, 0], sizes = [12, 112], strides = [1, 1]} : vector<14x112xf32> to vector<12x112xf32>
    %c1 = arith.constant 1 : index
    %c0_18 = arith.constant 0 : index
    %c0_19 = arith.constant 0 : index
    %22 = vector.load %arg4[%c1, %c0_18, %c0_19] : memref<3x112x96xf32, #tpu.memory_space<vmem>>, vector<1x112x96xf32>
    %23 = vector.shape_cast %22 : vector<1x112x96xf32> to vector<112x96xf32>
    %cst_20 = arith.constant dense<0.000000e+00> : vector<12x96xf32>
    %24 = tpu.matmul %21, %23, %cst_20 {dimension_numbers = #tpu.dot_dimension_numbers<[1], [0], [0], [1], [0, 0, 1, 1], [], []>} : vector<12x112xf32>, vector<112x96xf32>, vector<12x96xf32> -> vector<12x96xf32>
    %25 = arith.addf %16, %24 : vector<12x96xf32>
    %c1_21 = arith.constant 1 : index
    %c0_22 = arith.constant 0 : index
    %c0_23 = arith.constant 0 : index
    %26 = vector.load %arg5[%c1_21, %c0_22, %c0_23] : memref<3x112x96xf32, #tpu.memory_space<vmem>>, vector<1x112x96xf32>
    %27 = vector.shape_cast %26 : vector<1x112x96xf32> to vector<112x96xf32>
    %cst_24 = arith.constant dense<0.000000e+00> : vector<12x96xf32>
    %28 = tpu.matmul %21, %27, %cst_24 {dimension_numbers = #tpu.dot_dimension_numbers<[1], [0], [0], [1], [0, 0, 1, 1], [], []>} : vector<12x112xf32>, vector<112x96xf32>, vector<12x96xf32> -> vector<12x96xf32>
    %29 = arith.addf %20, %28 : vector<12x96xf32>
    %30 = vector.extract_strided_slice %8 {offsets = [2, 0], sizes = [12, 112], strides = [1, 1]} : vector<14x112xf32> to vector<12x112xf32>
    %c2 = arith.constant 2 : index
    %c0_25 = arith.constant 0 : index
    %c0_26 = arith.constant 0 : index
    %31 = vector.load %arg4[%c2, %c0_25, %c0_26] : memref<3x112x96xf32, #tpu.memory_space<vmem>>, vector<1x112x96xf32>
    %32 = vector.shape_cast %31 : vector<1x112x96xf32> to vector<112x96xf32>
    %cst_27 = arith.constant dense<0.000000e+00> : vector<12x96xf32>
    %33 = tpu.matmul %30, %32, %cst_27 {dimension_numbers = #tpu.dot_dimension_numbers<[1], [0], [0], [1], [0, 0, 1, 1], [], []>} : vector<12x112xf32>, vector<112x96xf32>, vector<12x96xf32> -> vector<12x96xf32>
    %34 = arith.addf %25, %33 : vector<12x96xf32>
    %c2_28 = arith.constant 2 : index
    %c0_29 = arith.constant 0 : index
    %c0_30 = arith.constant 0 : index
    %35 = vector.load %arg5[%c2_28, %c0_29, %c0_30] : memref<3x112x96xf32, #tpu.memory_space<vmem>>, vector<1x112x96xf32>
    %36 = vector.shape_cast %35 : vector<1x112x96xf32> to vector<112x96xf32>
    %cst_31 = arith.constant dense<0.000000e+00> : vector<12x96xf32>
    %37 = tpu.matmul %30, %36, %cst_31 {dimension_numbers = #tpu.dot_dimension_numbers<[1], [0], [0], [1], [0, 0, 1, 1], [], []>} : vector<12x112xf32>, vector<112x96xf32>, vector<12x96xf32> -> vector<12x96xf32>
    %38 = arith.addf %29, %37 : vector<12x96xf32>
    %cst_32 = arith.constant 0.000000e+00 : f32
    %39 = vector.broadcast %cst_32 : f32 to vector<12x96xf32>
    %40 = arith.maximumf %34, %39 : vector<12x96xf32>
    %c0_33 = arith.constant 0 : index
    %c0_34 = arith.constant 0 : index
    %41 = vector.load %arg9[%c0_33, %c0_34] : memref<12x384xf32, #tpu.memory_space<vmem>>, vector<12x384xf32>
    %c0_35 = arith.constant 0 : index
    %c0_36 = arith.constant 0 : index
    %42 = vector.load %arg7[%c0_35, %c0_36] : memref<384x96xf32, #tpu.memory_space<vmem>>, vector<384x96xf32>
    %cst_37 = arith.constant dense<0.000000e+00> : vector<12x384xf32>
    %43 = tpu.matmul %40, %42, %cst_37 {dimension_numbers = #tpu.dot_dimension_numbers<[1], [1], [0], [0], [0, 0, 1, 0], [], []>} : vector<12x96xf32>, vector<384x96xf32>, vector<12x384xf32> -> vector<12x384xf32>
    %c0_38 = arith.constant 0 : index
    %c0_39 = arith.constant 0 : index
    %44 = vector.load %arg8[%c0_38, %c0_39] : memref<384x96xf32, #tpu.memory_space<vmem>>, vector<384x96xf32>
    %cst_40 = arith.constant dense<0.000000e+00> : vector<12x384xf32>
    %45 = tpu.matmul %40, %44, %cst_40 {dimension_numbers = #tpu.dot_dimension_numbers<[1], [1], [0], [0], [0, 0, 1, 0], [], []>} : vector<12x96xf32>, vector<384x96xf32>, vector<12x384xf32> -> vector<12x384xf32>
    %46 = arith.mulf %41, %43 : vector<12x384xf32>
    %cst_41 = arith.constant dense<0.000000e+00> : vector<384xf32>
    %47 = vector.multi_reduction <add>, %46, %cst_41 [0] : vector<12x384xf32> to vector<384xf32>
    %48 = vector.shape_cast %47 : vector<384xf32> to vector<1x384xf32>
    %49 = arith.mulf %41, %45 : vector<12x384xf32>
    %cst_42 = arith.constant dense<0.000000e+00> : vector<384xf32>
    %50 = vector.multi_reduction <add>, %49, %cst_42 [0] : vector<12x384xf32> to vector<384xf32>
    %51 = vector.shape_cast %50 : vector<384xf32> to vector<1x384xf32>
    %c0_43 = arith.constant 0 : index
    %c0_44 = arith.constant 0 : index
    %52 = vector.load %arg10[%c0_43, %c0_44] : memref<384x32xf32, #tpu.memory_space<vmem>>, vector<384x32xf32>
    %cst_45 = arith.constant dense<0.000000e+00> : vector<1x32xf32>
    %53 = tpu.matmul %48, %52, %cst_45 {dimension_numbers = #tpu.dot_dimension_numbers<[1], [0], [0], [1], [0, 0, 1, 1], [], []>} : vector<1x384xf32>, vector<384x32xf32>, vector<1x32xf32> -> vector<1x32xf32>
    %c0_46 = arith.constant 0 : index
    %c0_47 = arith.constant 0 : index
    %54 = vector.load %arg11[%c0_46, %c0_47] : memref<1x32xf32, #tpu.memory_space<vmem>>, vector<1x32xf32>
    %55 = arith.addf %53, %54 : vector<1x32xf32>
    %c0_48 = arith.constant 0 : index
    %c0_49 = arith.constant 0 : index
    %56 = vector.load %arg10[%c0_48, %c0_49] : memref<384x32xf32, #tpu.memory_space<vmem>>, vector<384x32xf32>
    %cst_50 = arith.constant dense<0.000000e+00> : vector<1x32xf32>
    %57 = tpu.matmul %51, %56, %cst_50 {dimension_numbers = #tpu.dot_dimension_numbers<[1], [0], [0], [1], [0, 0, 1, 1], [], []>} : vector<1x384xf32>, vector<384x32xf32>, vector<1x32xf32> -> vector<1x32xf32>
    %cst_51 = arith.constant 9.99999974E-6 : f32
    %58 = vector.broadcast %cst_51 : f32 to vector<1x32xf32>
    %59 = arith.addf %57, %58 : vector<1x32xf32>
    %cst_52 = arith.constant 0.000000e+00 : f32
    %60 = vector.broadcast %cst_52 : f32 to vector<1x32xf32>
    %61 = arith.maximumf %55, %60 : vector<1x32xf32>
    %c0_53 = arith.constant 0 : index
    %c0_54 = arith.constant 0 : index
    %62 = vector.load %arg12[%c0_53, %c0_54] : memref<32x32xf32, #tpu.memory_space<vmem>>, vector<32x32xf32>
    %cst_55 = arith.constant dense<0.000000e+00> : vector<1x32xf32>
    %63 = tpu.matmul %61, %62, %cst_55 {dimension_numbers = #tpu.dot_dimension_numbers<[1], [0], [0], [1], [0, 0, 1, 1], [], []>} : vector<1x32xf32>, vector<32x32xf32>, vector<1x32xf32> -> vector<1x32xf32>
    %c0_56 = arith.constant 0 : index
    %c0_57 = arith.constant 0 : index
    %64 = vector.load %arg14[%c0_56, %c0_57] : memref<1x32xf32, #tpu.memory_space<vmem>>, vector<1x32xf32>
    %65 = arith.addf %63, %64 : vector<1x32xf32>
    %c0_58 = arith.constant 0 : index
    %c0_59 = arith.constant 0 : index
    %66 = vector.load %arg15[%c0_58, %c0_59] : memref<32x10xf32, #tpu.memory_space<vmem>>, vector<32x10xf32>
    %cst_60 = arith.constant dense<0.000000e+00> : vector<1x10xf32>
    %67 = tpu.matmul %65, %66, %cst_60 {dimension_numbers = #tpu.dot_dimension_numbers<[1], [0], [0], [1], [0, 0, 1, 1], [], []>} : vector<1x32xf32>, vector<32x10xf32>, vector<1x10xf32> -> vector<1x10xf32>
    %c0_61 = arith.constant 0 : index
    %c0_62 = arith.constant 0 : index
    %68 = vector.load %arg17[%c0_61, %c0_62] : memref<1x10xf32, #tpu.memory_space<vmem>>, vector<1x10xf32>
    %69 = arith.addf %67, %68 : vector<1x10xf32>
    %cst_63 = arith.constant dense<0xFF800000> : vector<1xf32>
    %70 = vector.multi_reduction <maximumf>, %69, %cst_63 [1] : vector<1x10xf32> to vector<1xf32>
    %71 = vector.shape_cast %70 : vector<1xf32> to vector<1x1xf32>
    %72 = vector.broadcast %71 : vector<1x1xf32> to vector<1x10xf32>
    %73 = arith.subf %69, %72 : vector<1x10xf32>
    %74 = math.exp %73 : vector<1x10xf32>
    %cst_64 = arith.constant dense<0.000000e+00> : vector<1xf32>
    %75 = vector.multi_reduction <add>, %74, %cst_64 [1] : vector<1x10xf32> to vector<1xf32>
    %76 = vector.shape_cast %75 : vector<1xf32> to vector<1x1xf32>
    %77 = vector.broadcast %76 : vector<1x1xf32> to vector<1x10xf32>
    %78 = arith.divf %74, %77 : vector<1x10xf32>
    %c0_65 = arith.constant 0 : index
    %c0_66 = arith.constant 0 : index
    %79 = vector.load %arg16[%c0_65, %c0_66] : memref<32x10xf32, #tpu.memory_space<vmem>>, vector<32x10xf32>
    %cst_67 = arith.constant dense<0.000000e+00> : vector<1x10xf32>
    %80 = tpu.matmul %65, %79, %cst_67 {dimension_numbers = #tpu.dot_dimension_numbers<[1], [0], [0], [1], [0, 0, 1, 1], [], []>} : vector<1x32xf32>, vector<32x10xf32>, vector<1x10xf32> -> vector<1x10xf32>
    %cst_68 = arith.constant 9.99999974E-6 : f32
    %81 = vector.broadcast %cst_68 : f32 to vector<1x10xf32>
    %82 = arith.addf %80, %81 : vector<1x10xf32>
    %83 = arith.divf %78, %82 : vector<1x10xf32>
    %cst_69 = arith.constant dense<0.000000e+00> : vector<1x32xf32>
    %84 = tpu.matmul %83, %79, %cst_69 {dimension_numbers = #tpu.dot_dimension_numbers<[1], [1], [0], [0], [0, 0, 1, 0], [], []>} : vector<1x10xf32>, vector<32x10xf32>, vector<1x32xf32> -> vector<1x32xf32>
    %85 = arith.mulf %65, %84 : vector<1x32xf32>
    %c0_70 = arith.constant 0 : index
    %c0_71 = arith.constant 0 : index
    %86 = vector.load %arg13[%c0_70, %c0_71] : memref<32x32xf32, #tpu.memory_space<vmem>>, vector<32x32xf32>
    %cst_72 = arith.constant dense<0.000000e+00> : vector<1x32xf32>
    %87 = tpu.matmul %61, %86, %cst_72 {dimension_numbers = #tpu.dot_dimension_numbers<[1], [0], [0], [1], [0, 0, 1, 1], [], []>} : vector<1x32xf32>, vector<32x32xf32>, vector<1x32xf32> -> vector<1x32xf32>
    %cst_73 = arith.constant 9.99999974E-6 : f32
    %88 = vector.broadcast %cst_73 : f32 to vector<1x32xf32>
    %89 = arith.addf %87, %88 : vector<1x32xf32>
    %90 = arith.divf %85, %89 : vector<1x32xf32>
    %cst_74 = arith.constant dense<0.000000e+00> : vector<1x32xf32>
    %91 = tpu.matmul %90, %86, %cst_74 {dimension_numbers = #tpu.dot_dimension_numbers<[1], [1], [0], [0], [0, 0, 1, 0], [], []>} : vector<1x32xf32>, vector<32x32xf32>, vector<1x32xf32> -> vector<1x32xf32>
    %92 = arith.mulf %61, %91 : vector<1x32xf32>
    %93 = arith.divf %92, %59 : vector<1x32xf32>
    %c0_75 = arith.constant 0 : index
    %c0_76 = arith.constant 0 : index
    %94 = vector.load %arg10[%c0_75, %c0_76] : memref<384x32xf32, #tpu.memory_space<vmem>>, vector<384x32xf32>
    %cst_77 = arith.constant dense<0.000000e+00> : vector<1x384xf32>
    %95 = tpu.matmul %93, %94, %cst_77 {dimension_numbers = #tpu.dot_dimension_numbers<[1], [1], [0], [0], [0, 0, 1, 0], [], []>} : vector<1x32xf32>, vector<384x32xf32>, vector<1x384xf32> -> vector<1x384xf32>
    %96 = vector.broadcast %95 : vector<1x384xf32> to vector<12x384xf32>
    %97 = arith.mulf %41, %96 : vector<12x384xf32>
    %c0_78 = arith.constant 0 : index
    %c0_79 = arith.constant 0 : index
    %98 = vector.load %arg8[%c0_78, %c0_79] : memref<384x96xf32, #tpu.memory_space<vmem>>, vector<384x96xf32>
    %cst_80 = arith.constant dense<0.000000e+00> : vector<12x96xf32>
    %99 = tpu.matmul %97, %98, %cst_80 {dimension_numbers = #tpu.dot_dimension_numbers<[1], [0], [0], [1], [0, 0, 1, 1], [], []>} : vector<12x384xf32>, vector<384x96xf32>, vector<12x96xf32> -> vector<12x96xf32>
    %100 = arith.mulf %40, %99 : vector<12x96xf32>
    %cst_81 = arith.constant 9.99999974E-6 : f32
    %101 = vector.broadcast %cst_81 : f32 to vector<12x96xf32>
    %102 = arith.addf %38, %101 : vector<12x96xf32>
    %103 = arith.divf %100, %102 : vector<12x96xf32>
    %cst_82 = arith.constant 0.000000e+00 : f32
    %104 = vector.broadcast %cst_82 : f32 to vector<14x112xf32>
    %c0_83 = arith.constant 0 : index
    %c0_84 = arith.constant 0 : index
    %105 = vector.load %arg22[%c0_83, %c0_84] : memref<14x112xf32, #tpu.memory_space<vmem>>, vector<14x112xf32>
    tpu.vector_store %arg22[%c0_83, %c0_84], %104 {strides = array<i32>} : memref<14x112xf32, #tpu.memory_space<vmem>>, vector<14x112xf32>,
    %c0_85 = arith.constant 0 : index
    %c0_86 = arith.constant 0 : index
    %c0_87 = arith.constant 0 : index
    %106 = vector.load %arg18[%c0_85, %c0_86, %c0_87] : memref<3x96x112xf32, #tpu.memory_space<vmem>>, vector<1x96x112xf32>
    %107 = vector.shape_cast %106 : vector<1x96x112xf32> to vector<96x112xf32>
    %cst_88 = arith.constant dense<0.000000e+00> : vector<12x112xf32>
    %108 = tpu.matmul %103, %107, %cst_88 {dimension_numbers = #tpu.dot_dimension_numbers<[1], [0], [0], [1], [0, 0, 1, 1], [], []>} : vector<12x96xf32>, vector<96x112xf32>, vector<12x112xf32> -> vector<12x112xf32>
    %c0_89 = arith.constant 0 : index
    %c0_90 = arith.constant 0 : index
    %109 = vector.load %arg22[%c0_89, %c0_90] : memref<14x112xf32, #tpu.memory_space<vmem>>, vector<12x112xf32>
    %110 = arith.addf %109, %108 : vector<12x112xf32>
    %c0_91 = arith.constant 0 : index
    %c0_92 = arith.constant 0 : index
    %111 = vector.load %arg22[%c0_91, %c0_92] : memref<14x112xf32, #tpu.memory_space<vmem>>, vector<12x112xf32>
    tpu.vector_store %arg22[%c0_91, %c0_92], %110 {strides = array<i32>} : memref<14x112xf32, #tpu.memory_space<vmem>>, vector<12x112xf32>,
    %c1_93 = arith.constant 1 : index
    %c0_94 = arith.constant 0 : index
    %c0_95 = arith.constant 0 : index
    %112 = vector.load %arg18[%c1_93, %c0_94, %c0_95] : memref<3x96x112xf32, #tpu.memory_space<vmem>>, vector<1x96x112xf32>
    %113 = vector.shape_cast %112 : vector<1x96x112xf32> to vector<96x112xf32>
    %cst_96 = arith.constant dense<0.000000e+00> : vector<12x112xf32>
    %114 = tpu.matmul %103, %113, %cst_96 {dimension_numbers = #tpu.dot_dimension_numbers<[1], [0], [0], [1], [0, 0, 1, 1], [], []>} : vector<12x96xf32>, vector<96x112xf32>, vector<12x112xf32> -> vector<12x112xf32>
    %c1_97 = arith.constant 1 : index
    %c0_98 = arith.constant 0 : index
    %115 = vector.load %arg22[%c1_97, %c0_98] : memref<14x112xf32, #tpu.memory_space<vmem>>, vector<12x112xf32>
    %116 = arith.addf %115, %114 : vector<12x112xf32>
    %c1_99 = arith.constant 1 : index
    %c0_100 = arith.constant 0 : index
    %117 = vector.load %arg22[%c1_99, %c0_100] : memref<14x112xf32, #tpu.memory_space<vmem>>, vector<12x112xf32>
    tpu.vector_store %arg22[%c1_99, %c0_100], %116 {strides = array<i32>} : memref<14x112xf32, #tpu.memory_space<vmem>>, vector<12x112xf32>,
    %c2_101 = arith.constant 2 : index
    %c0_102 = arith.constant 0 : index
    %c0_103 = arith.constant 0 : index
    %118 = vector.load %arg18[%c2_101, %c0_102, %c0_103] : memref<3x96x112xf32, #tpu.memory_space<vmem>>, vector<1x96x112xf32>
    %119 = vector.shape_cast %118 : vector<1x96x112xf32> to vector<96x112xf32>
    %cst_104 = arith.constant dense<0.000000e+00> : vector<12x112xf32>
    %120 = tpu.matmul %103, %119, %cst_104 {dimension_numbers = #tpu.dot_dimension_numbers<[1], [0], [0], [1], [0, 0, 1, 1], [], []>} : vector<12x96xf32>, vector<96x112xf32>, vector<12x112xf32> -> vector<12x112xf32>
    %c2_105 = arith.constant 2 : index
    %c0_106 = arith.constant 0 : index
    %121 = vector.load %arg22[%c2_105, %c0_106] : memref<14x112xf32, #tpu.memory_space<vmem>>, vector<12x112xf32>
    %122 = arith.addf %121, %120 : vector<12x112xf32>
    %c2_107 = arith.constant 2 : index
    %c0_108 = arith.constant 0 : index
    %123 = vector.load %arg22[%c2_107, %c0_108] : memref<14x112xf32, #tpu.memory_space<vmem>>, vector<12x112xf32>
    tpu.vector_store %arg22[%c2_107, %c0_108], %122 {strides = array<i32>} : memref<14x112xf32, #tpu.memory_space<vmem>>, vector<12x112xf32>,
    %c0_109 = arith.constant 0 : index
    %c0_110 = arith.constant 0 : index
    %124 = vector.load %arg22[%c0_109, %c0_110] : memref<14x112xf32, #tpu.memory_space<vmem>>, vector<14x112xf32>
    %125 = arith.mulf %8, %124 : vector<14x112xf32>
    %c0_111 = arith.constant 0 : index
    %c0_112 = arith.constant 0 : index
    %126 = vector.load %arg20[%c0_111, %c0_112] : memref<1x112xf32, #tpu.memory_space<vmem>>, vector<1x112xf32>
    %127 = vector.broadcast %126 : vector<1x112xf32> to vector<14x112xf32>
    %128 = arith.divf %125, %127 : vector<14x112xf32>
    %cst_113 = arith.constant 0.000000e+00 : f32
    %129 = vector.broadcast %cst_113 : f32 to vector<16x64xf32>
    %c0_114 = arith.constant 0 : index
    %c0_115 = arith.constant 0 : index
    %130 = vector.load %arg23[%c0_114, %c0_115] : memref<16x64xf32, #tpu.memory_space<vmem>>, vector<16x64xf32>
    tpu.vector_store %arg23[%c0_114, %c0_115], %129 {strides = array<i32>} : memref<16x64xf32, #tpu.memory_space<vmem>>, vector<16x64xf32>,
    %c0_116 = arith.constant 0 : index
    %c0_117 = arith.constant 0 : index
    %c0_118 = arith.constant 0 : index
    %131 = vector.load %arg19[%c0_116, %c0_117, %c0_118] : memref<3x112x64xf32, #tpu.memory_space<vmem>>, vector<1x112x64xf32>
    %132 = vector.shape_cast %131 : vector<1x112x64xf32> to vector<112x64xf32>
    %cst_119 = arith.constant dense<0.000000e+00> : vector<14x64xf32>
    %133 = tpu.matmul %128, %132, %cst_119 {dimension_numbers = #tpu.dot_dimension_numbers<[1], [0], [0], [1], [0, 0, 1, 1], [], []>} : vector<14x112xf32>, vector<112x64xf32>, vector<14x64xf32> -> vector<14x64xf32>
    %c0_120 = arith.constant 0 : index
    %c0_121 = arith.constant 0 : index
    %134 = vector.load %arg23[%c0_120, %c0_121] : memref<16x64xf32, #tpu.memory_space<vmem>>, vector<14x64xf32>
    %135 = arith.addf %134, %133 : vector<14x64xf32>
    %c0_122 = arith.constant 0 : index
    %c0_123 = arith.constant 0 : index
    %136 = vector.load %arg23[%c0_122, %c0_123] : memref<16x64xf32, #tpu.memory_space<vmem>>, vector<14x64xf32>
    tpu.vector_store %arg23[%c0_122, %c0_123], %135 {strides = array<i32>} : memref<16x64xf32, #tpu.memory_space<vmem>>, vector<14x64xf32>,
    %c1_124 = arith.constant 1 : index
    %c0_125 = arith.constant 0 : index
    %c0_126 = arith.constant 0 : index
    %137 = vector.load %arg19[%c1_124, %c0_125, %c0_126] : memref<3x112x64xf32, #tpu.memory_space<vmem>>, vector<1x112x64xf32>
    %138 = vector.shape_cast %137 : vector<1x112x64xf32> to vector<112x64xf32>
    %cst_127 = arith.constant dense<0.000000e+00> : vector<14x64xf32>
    %139 = tpu.matmul %128, %138, %cst_127 {dimension_numbers = #tpu.dot_dimension_numbers<[1], [0], [0], [1], [0, 0, 1, 1], [], []>} : vector<14x112xf32>, vector<112x64xf32>, vector<14x64xf32> -> vector<14x64xf32>
    %c1_128 = arith.constant 1 : index
    %c0_129 = arith.constant 0 : index
    %140 = vector.load %arg23[%c1_128, %c0_129] : memref<16x64xf32, #tpu.memory_space<vmem>>, vector<14x64xf32>
    %141 = arith.addf %140, %139 : vector<14x64xf32>
    %c1_130 = arith.constant 1 : index
    %c0_131 = arith.constant 0 : index
    %142 = vector.load %arg23[%c1_130, %c0_131] : memref<16x64xf32, #tpu.memory_space<vmem>>, vector<14x64xf32>
    tpu.vector_store %arg23[%c1_130, %c0_131], %141 {strides = array<i32>} : memref<16x64xf32, #tpu.memory_space<vmem>>, vector<14x64xf32>,
    %c2_132 = arith.constant 2 : index
    %c0_133 = arith.constant 0 : index
    %c0_134 = arith.constant 0 : index
    %143 = vector.load %arg19[%c2_132, %c0_133, %c0_134] : memref<3x112x64xf32, #tpu.memory_space<vmem>>, vector<1x112x64xf32>
    %144 = vector.shape_cast %143 : vector<1x112x64xf32> to vector<112x64xf32>
    %cst_135 = arith.constant dense<0.000000e+00> : vector<14x64xf32>
    %145 = tpu.matmul %128, %144, %cst_135 {dimension_numbers = #tpu.dot_dimension_numbers<[1], [0], [0], [1], [0, 0, 1, 1], [], []>} : vector<14x112xf32>, vector<112x64xf32>, vector<14x64xf32> -> vector<14x64xf32>
    %c2_136 = arith.constant 2 : index
    %c0_137 = arith.constant 0 : index
    %146 = vector.load %arg23[%c2_136, %c0_137] : memref<16x64xf32, #tpu.memory_space<vmem>>, vector<14x64xf32>
    %147 = arith.addf %146, %145 : vector<14x64xf32>
    %c2_138 = arith.constant 2 : index
    %c0_139 = arith.constant 0 : index
    %148 = vector.load %arg23[%c2_138, %c0_139] : memref<16x64xf32, #tpu.memory_space<vmem>>, vector<14x64xf32>
    tpu.vector_store %arg23[%c2_138, %c0_139], %147 {strides = array<i32>} : memref<16x64xf32, #tpu.memory_space<vmem>>, vector<14x64xf32>,
    %c0_140 = arith.constant 0 : index
    %c0_141 = arith.constant 0 : index
    %149 = vector.load %arg23[%c0_140, %c0_141] : memref<16x64xf32, #tpu.memory_space<vmem>>, vector<16x64xf32>
    %c0_142 = arith.constant 0 : index
    %c0_143 = arith.constant 0 : index
    %c0_144 = arith.constant 0 : index
    %150 = vector.load %arg21[%c0_142, %c0_143, %c0_144] : memref<1x16x64xf32, #tpu.memory_space<vmem>>, vector<1x16x64xf32>
    %151 = vector.shape_cast %150 : vector<1x16x64xf32> to vector<16x64xf32>
    %152 = vector.shape_cast %149 : vector<16x64xf32> to vector<1x16x64xf32>
    tpu.vector_store %arg21[%c0_142, %c0_143, %c0_144], %152 {strides = array<i32>} : memref<1x16x64xf32, #tpu.memory_space<vmem>>, vector<1x16x64xf32>,
    return
  }
  func.func @transform_0(%arg0: i32) -> (i32, i32, i32) {
    %c0_i32 = arith.constant 0 : i32
    %c0_i32_0 = arith.constant 0 : i32
    %c0_i32_1 = arith.constant 0 : i32
    return %arg0, %c0_i32, %c0_i32_0 : i32, i32, i32
  }
  func.func @transform_1(%arg0: i32) -> (i32, i32) {
    %c0_i32 = arith.constant 0 : i32
    %c0_i32_0 = arith.constant 0 : i32
    %c0_i32_1 = arith.constant 0 : i32
    return %c0_i32, %c0_i32_0 : i32, i32
  }
  func.func @transform_2(%arg0: i32) -> (i32, i32) {
    %c0_i32 = arith.constant 0 : i32
    %c0_i32_0 = arith.constant 0 : i32
    %c0_i32_1 = arith.constant 0 : i32
    return %c0_i32, %c0_i32_0 : i32, i32
  }
  func.func @transform_3(%arg0: i32) -> (i32, i32, i32) {
    %c0_i32 = arith.constant 0 : i32
    %c0_i32_0 = arith.constant 0 : i32
    %c0_i32_1 = arith.constant 0 : i32
    %c0_i32_2 = arith.constant 0 : i32
    return %c0_i32, %c0_i32_0, %c0_i32_1 : i32, i32, i32
  }
  func.func @transform_4(%arg0: i32) -> (i32, i32, i32) {
    %c0_i32 = arith.constant 0 : i32
    %c0_i32_0 = arith.constant 0 : i32
    %c0_i32_1 = arith.constant 0 : i32
    %c0_i32_2 = arith.constant 0 : i32
    return %c0_i32, %c0_i32_0, %c0_i32_1 : i32, i32, i32
  }
  func.func @transform_5(%arg0: i32) -> (i32, i32) {
    %c0_i32 = arith.constant 0 : i32
    %c0_i32_0 = arith.constant 0 : i32
    %c0_i32_1 = arith.constant 0 : i32
    return %c0_i32, %c0_i32_0 : i32, i32
  }
  func.func @transform_6(%arg0: i32) -> (i32, i32) {
    %c0_i32 = arith.constant 0 : i32
    %c0_i32_0 = arith.constant 0 : i32
    %c0_i32_1 = arith.constant 0 : i32
    return %c0_i32, %c0_i32_0 : i32, i32
  }
  func.func @transform_7(%arg0: i32) -> (i32, i32) {
    %c0_i32 = arith.constant 0 : i32
    %c0_i32_0 = arith.constant 0 : i32
    %c0_i32_1 = arith.constant 0 : i32
    return %c0_i32, %c0_i32_0 : i32, i32
  }
  func.func @transform_8(%arg0: i32) -> (i32, i32) {
    %c0_i32 = arith.constant 0 : i32
    %c0_i32_0 = arith.constant 0 : i32
    %c0_i32_1 = arith.constant 0 : i32
    return %c0_i32, %c0_i32_0 : i32, i32
  }
  func.func @transform_9(%arg0: i32) -> (i32, i32) {
    %c0_i32 = arith.constant 0 : i32
    %c0_i32_0 = arith.constant 0 : i32
    %c0_i32_1 = arith.constant 0 : i32
    return %c0_i32, %c0_i32_0 : i32, i32
  }
  func.func @transform_10(%arg0: i32) -> (i32, i32) {
    %c0_i32 = arith.constant 0 : i32
    %c0_i32_0 = arith.constant 0 : i32
    %c0_i32_1 = arith.constant 0 : i32
    return %c0_i32, %c0_i32_0 : i32, i32
  }
  func.func @transform_11(%arg0: i32) -> (i32, i32) {
    %c0_i32 = arith.constant 0 : i32
    %c0_i32_0 = arith.constant 0 : i32
    %c0_i32_1 = arith.constant 0 : i32
    return %c0_i32, %c0_i32_0 : i32, i32
  }
  func.func @transform_12(%arg0: i32) -> (i32, i32) {
    %c0_i32 = arith.constant 0 : i32
    %c0_i32_0 = arith.constant 0 : i32
    %c0_i32_1 = arith.constant 0 : i32
    return %c0_i32, %c0_i32_0 : i32, i32
  }
  func.func @transform_13(%arg0: i32) -> (i32, i32) {
    %c0_i32 = arith.constant 0 : i32
    %c0_i32_0 = arith.constant 0 : i32
    %c0_i32_1 = arith.constant 0 : i32
    return %c0_i32, %c0_i32_0 : i32, i32
  }
  func.func @transform_14(%arg0: i32) -> (i32, i32) {
    %c0_i32 = arith.constant 0 : i32
    %c0_i32_0 = arith.constant 0 : i32
    %c0_i32_1 = arith.constant 0 : i32
    return %c0_i32, %c0_i32_0 : i32, i32
  }
  func.func @transform_15(%arg0: i32) -> (i32, i32) {
    %c0_i32 = arith.constant 0 : i32
    %c0_i32_0 = arith.constant 0 : i32
    %c0_i32_1 = arith.constant 0 : i32
    return %c0_i32, %c0_i32_0 : i32, i32
  }
  func.func @transform_16(%arg0: i32) -> (i32, i32) {
    %c0_i32 = arith.constant 0 : i32
    %c0_i32_0 = arith.constant 0 : i32
    %c0_i32_1 = arith.constant 0 : i32
    return %c0_i32, %c0_i32_0 : i32, i32
  }
  func.func @transform_17(%arg0: i32) -> (i32, i32, i32) {
    %c0_i32 = arith.constant 0 : i32
    %c0_i32_0 = arith.constant 0 : i32
    %c0_i32_1 = arith.constant 0 : i32
    %c0_i32_2 = arith.constant 0 : i32
    return %c0_i32, %c0_i32_0, %c0_i32_1 : i32, i32, i32
  }
  func.func @transform_18(%arg0: i32) -> (i32, i32, i32) {
    %c0_i32 = arith.constant 0 : i32
    %c0_i32_0 = arith.constant 0 : i32
    %c0_i32_1 = arith.constant 0 : i32
    %c0_i32_2 = arith.constant 0 : i32
    return %c0_i32, %c0_i32_0, %c0_i32_1 : i32, i32, i32
  }
  func.func @transform_19(%arg0: i32) -> (i32, i32) {
    %c0_i32 = arith.constant 0 : i32
    %c0_i32_0 = arith.constant 0 : i32
    %c0_i32_1 = arith.constant 0 : i32
    return %c0_i32, %c0_i32_0 : i32, i32
  }
  func.func @transform_20(%arg0: i32) -> (i32, i32, i32) {
    %c0_i32 = arith.constant 0 : i32
    %c0_i32_0 = arith.constant 0 : i32
    %c0_i32_1 = arith.constant 0 : i32
    return %arg0, %c0_i32, %c0_i32_0 : i32, i32, i32
  }
}

</mosaic_0001>

<llo_original>
// kernel: tile.18
$region0: #{tile.18}
  #allocation0 [shape = 's32[1]{0}', space=sflag, size = 0x4, scoped, tag = 'scoped memory for tile.18']
  %s0 = inlined_call_operand.vmem [shape: f32[8], index: 0, kind: input, shape index: {}]
  %s1 = inlined_call_operand.vmem [shape: f32[14,8], index: 1, kind: output, shape index: {}]
  // Predicated region
  $region2: #{tile.18} parent=0 // pred_check
    _
  $region3: #{tile.18} parent=0 // pred_check_branch
    %3 = sbr.rel (0) target = $region5
  $region4: #{tile.18} parent=0 // pred_region
    _
  $region5: #{tile.18} parent=0 // pred_fallthru
    _
  %v4 = vld [vmem:[%s0] ss:$0 sm:$0xff]
  %5 = vst [vmem:[%s1] sm:$0xff] %v4
  %s6 = scalar_lea.vmem %s1, 8
  %7 = vst [vmem:[%s6] sm:$0xff] %v4

// kernel: tile.19
$region0: #{tile.19}
  %s0 = inlined_call_operand.vmem [shape: f32[14,8], index: 0, kind: input, shape index: {}]
  %s1 = inlined_call_operand.vmem [shape: f32[1,112], index: 1, kind: output, shape index: {}]
  $region1: #{tile.19} parent=0
    #allocation0 [shape = 'u8[4096]{0}', space=vmem, size = 0x1000, scoped, tag = 'scoped mem for output reshape']
    %v2 = vld [vmem:[%s0] sm:$0x1]
    %vm3 = vcmask 64512
    %4 = vst.msk [vmem:[#allocation0] sm:$0x1] %vm3, %v2
    %s5 = scalar_lea.vmem %s0, 13
    %v6 = vld [vmem:[%s5] sm:$0x1]
    %7 = vrot.lane.b32.xlu0 %v6, 104
    %v8 = vpop.permute.xlu0 %7
    %vm9 = vcmask 917312
    %10 = vst.msk [vmem:[#allocation0] sm:$0x1] %vm9, %v8
    %s11 = scalar_lea.vmem %s0, 12
    %v12 = vld [vmem:[%s11] sm:$0x1]
    %13 = vrot.lane.b32.xlu0 %v12, 96
    %v14 = vpop.permute.xlu0 %13
    %vm15 = vcmask 851712
    %16 = vst.msk [vmem:[#allocation0] sm:$0x1] %vm15, %v14
    %s17 = scalar_lea.vmem %s0, 11
    %v18 = vld [vmem:[%s17] sm:$0x1]
    %19 = vrot.lane.b32.xlu0 %v18, 88
    %v20 = vpop.permute.xlu0 %19
    %vm21 = vcmask 786112
    %22 = vst.msk [vmem:[#allocation0] sm:$0x1] %vm21, %v20
    %s23 = scalar_lea.vmem %s0, 10
    %v24 = vld [vmem:[%s23] sm:$0x1]
    %25 = vrot.lane.b32.xlu0 %v24, 80
    %v26 = vpop.permute.xlu0 %25
    %vm27 = vcmask 720512
    %28 = vst.msk [vmem:[#allocation0] sm:$0x1] %vm27, %v26
    %s29 = scalar_lea.vmem %s0, 9
    %v30 = vld [vmem:[%s29] sm:$0x1]
    %31 = vrot.lane.b32.xlu0 %v30, 72
    %v32 = vpop.permute.xlu0 %31
    %vm33 = vcmask 654912
    %34 = vst.msk [vmem:[#allocation0] sm:$0x1] %vm33, %v32
    %s35 = scalar_lea.vmem %s0, 8
    %v36 = vld [vmem:[%s35] sm:$0x1]
    %37 = vrot.lane.b32.xlu0 %v36, 64
    %v38 = vpop.permute.xlu0 %37
    %vm39 = vcmask 589312
    %40 = vst.msk [vmem:[#allocation0] sm:$0x1] %vm39, %v38
    %s41 = scalar_lea.vmem %s0, 7
    %v42 = vld [vmem:[%s41] sm:$0x1]
    %43 = vrot.lane.b32.xlu0 %v42, 56
    %v44 = vpop.permute.xlu0 %43
    %vm45 = vcmask 523712
    %46 = vst.msk [vmem:[#allocation0] sm:$0x1] %vm45, %v44
    %s47 = scalar_lea.vmem %s0, 6
    %v48 = vld [vmem:[%s47] sm:$0x1]
    %49 = vrot.lane.b32.xlu0 %v48, 48
    %v50 = vpop.permute.xlu0 %49
    %vm51 = vcmask 458112
    %52 = vst.msk [vmem:[#allocation0] sm:$0x1] %vm51, %v50
    %s53 = scalar_lea.vmem %s0, 5
    %v54 = vld [vmem:[%s53] sm:$0x1]
    %55 = vrot.lane.b32.xlu0 %v54, 40
    %v56 = vpop.permute.xlu0 %55
    %vm57 = vcmask 392512
    %58 = vst.msk [vmem:[#allocation0] sm:$0x1] %vm57, %v56
    %s59 = scalar_lea.vmem %s0, 4
    %v60 = vld [vmem:[%s59] sm:$0x1]
    %61 = vrot.lane.b32.xlu0 %v60, 32
    %v62 = vpop.permute.xlu0 %61
    %vm63 = vcmask 326912
    %64 = vst.msk [vmem:[#allocation0] sm:$0x1] %vm63, %v62
    %s65 = scalar_lea.vmem %s0, 3
    %v66 = vld [vmem:[%s65] sm:$0x1]
    %67 = vrot.lane.b32.xlu0 %v66, 24
    %v68 = vpop.permute.xlu0 %67
    %vm69 = vcmask 261312
    %70 = vst.msk [vmem:[#allocation0] sm:$0x1] %vm69, %v68
    %s71 = scalar_lea.vmem %s0, 2
    %v72 = vld [vmem:[%s71] sm:$0x1]
    %73 = vrot.lane.b32.xlu0 %v72, 16
    %v74 = vpop.permute.xlu0 %73
    %vm75 = vcmask 195712
    %76 = vst.msk [vmem:[#allocation0] sm:$0x1] %vm75, %v74
    %s77 = scalar_lea.vmem %s0, 1
    %v78 = vld [vmem:[%s77] sm:$0x1]
    %79 = vrot.lane.b32.xlu0 %v78, 8
    %v80 = vpop.permute.xlu0 %79
    %vm81 = vcmask 130112
    %82 = vst.msk [vmem:[#allocation0] sm:$0x1] %vm81, %v80
    %s84 = sshllo.u32 0, 1
    %v86 = vld [vmem:[#allocation0] sm:%s84]
    %s87 = sshllo.u32 0, 1
    %88 = vst [vmem:[%s1] sm:%s87] %v86

// kernel: tile.23
$region0: #{tile.23}
  #allocation0 [shape = 's32[1]{0}', space=sflag, size = 0x4, scoped, tag = 'scoped memory for tile.23']
  %s0 = inlined_call_operand.vmem [shape: f32[8], index: 0, kind: input, shape index: {}]
  %s1 = inlined_call_operand.vmem [shape: f32[12,8], index: 1, kind: output, shape index: {}]
  // Predicated region
  $region2: #{tile.23} parent=0 // pred_check
    _
  $region3: #{tile.23} parent=0 // pred_check_branch
    %3 = sbr.rel (0) target = $region5
  $region4: #{tile.23} parent=0 // pred_region
    _
  $region5: #{tile.23} parent=0 // pred_fallthru
    _
  %v4 = vld [vmem:[%s0] ss:$0 sm:$0xff]
  %5 = vst [vmem:[%s1] sm:$0xff] %v4
  %s6 = scalar_lea.vmem %s1, 8
  %7 = vst [vmem:[%s6] sm:$0xff] %v4

// kernel: tile.24
$region0: #{tile.24}
  %s0 = inlined_call_operand.vmem [shape: f32[12,8], index: 0, kind: input, shape index: {}]
  %s1 = inlined_call_operand.vmem [shape: f32[1,96], index: 1, kind: output, shape index: {}]
  $region1: #{tile.24} parent=0
    #allocation0 [shape = 'u8[4096]{0}', space=vmem, size = 0x1000, scoped, tag = 'scoped mem for output reshape']
    %v2 = vld [vmem:[%s0] sm:$0x1]
    %vm3 = vcmask 64512
    %4 = vst.msk [vmem:[#allocation0] sm:$0x1] %vm3, %v2
    %s5 = scalar_lea.vmem %s0, 11
    %v6 = vld [vmem:[%s5] sm:$0x1]
    %7 = vrot.lane.b32.xlu0 %v6, 88
    %v8 = vpop.permute.xlu0 %7
    %vm9 = vcmask 786112
    %10 = vst.msk [vmem:[#allocation0] sm:$0x1] %vm9, %v8
    %s11 = scalar_lea.vmem %s0, 10
    %v12 = vld [vmem:[%s11] sm:$0x1]
    %13 = vrot.lane.b32.xlu0 %v12, 80
    %v14 = vpop.permute.xlu0 %13
    %vm15 = vcmask 720512
    %16 = vst.msk [vmem:[#allocation0] sm:$0x1] %vm15, %v14
    %s17 = scalar_lea.vmem %s0, 9
    %v18 = vld [vmem:[%s17] sm:$0x1]
    %19 = vrot.lane.b32.xlu0 %v18, 72
    %v20 = vpop.permute.xlu0 %19
    %vm21 = vcmask 654912
    %22 = vst.msk [vmem:[#allocation0] sm:$0x1] %vm21, %v20
    %s23 = scalar_lea.vmem %s0, 8
    %v24 = vld [vmem:[%s23] sm:$0x1]
    %25 = vrot.lane.b32.xlu0 %v24, 64
    %v26 = vpop.permute.xlu0 %25
    %vm27 = vcmask 589312
    %28 = vst.msk [vmem:[#allocation0] sm:$0x1] %vm27, %v26
    %s29 = scalar_lea.vmem %s0, 7
    %v30 = vld [vmem:[%s29] sm:$0x1]
    %31 = vrot.lane.b32.xlu0 %v30, 56
    %v32 = vpop.permute.xlu0 %31
    %vm33 = vcmask 523712
    %34 = vst.msk [vmem:[#allocation0] sm:$0x1] %vm33, %v32
    %s35 = scalar_lea.vmem %s0, 6
    %v36 = vld [vmem:[%s35] sm:$0x1]
    %37 = vrot.lane.b32.xlu0 %v36, 48
    %v38 = vpop.permute.xlu0 %37
    %vm39 = vcmask 458112
    %40 = vst.msk [vmem:[#allocation0] sm:$0x1] %vm39, %v38
    %s41 = scalar_lea.vmem %s0, 5
    %v42 = vld [vmem:[%s41] sm:$0x1]
    %43 = vrot.lane.b32.xlu0 %v42, 40
    %v44 = vpop.permute.xlu0 %43
    %vm45 = vcmask 392512
    %46 = vst.msk [vmem:[#allocation0] sm:$0x1] %vm45, %v44
    %s47 = scalar_lea.vmem %s0, 4
    %v48 = vld [vmem:[%s47] sm:$0x1]
    %49 = vrot.lane.b32.xlu0 %v48, 32
    %v50 = vpop.permute.xlu0 %49
    %vm51 = vcmask 326912
    %52 = vst.msk [vmem:[#allocation0] sm:$0x1] %vm51, %v50
    %s53 = scalar_lea.vmem %s0, 3
    %v54 = vld [vmem:[%s53] sm:$0x1]
    %55 = vrot.lane.b32.xlu0 %v54, 24
    %v56 = vpop.permute.xlu0 %55
    %vm57 = vcmask 261312
    %58 = vst.msk [vmem:[#allocation0] sm:$0x1] %vm57, %v56
    %s59 = scalar_lea.vmem %s0, 2
    %v60 = vld [vmem:[%s59] sm:$0x1]
    %61 = vrot.lane.b32.xlu0 %v60, 16
    %v62 = vpop.permute.xlu0 %61
    %vm63 = vcmask 195712
    %64 = vst.msk [vmem:[#allocation0] sm:$0x1] %vm63, %v62
    %s65 = scalar_lea.vmem %s0, 1
    %v66 = vld [vmem:[%s65] sm:$0x1]
    %67 = vrot.lane.b32.xlu0 %v66, 8
    %v68 = vpop.permute.xlu0 %67
    %vm69 = vcmask 130112
    %70 = vst.msk [vmem:[#allocation0] sm:$0x1] %vm69, %v68
    %s72 = sshllo.u32 0, 1
    %v74 = vld [vmem:[#allocation0] sm:%s72]
    %s75 = sshllo.u32 0, 1
    %76 = vst [vmem:[%s1] sm:%s75] %v74

// kernel: lrp_model_forward.1
$region0: #{lrp_model_forward.1}
  #allocation0 [shape = 'u32[]', space=smem, size = 0x4, offset = 0x4, fixed_abs, tag = 'smem constant byte address 0x4 - core index']
  #allocation1 [shape = 'u32[144,128]{1,0:T(1,128)}', space=vmem, size = 0x12000, scoped, tag = 'internal scratch']
  #allocation2 [shape = 'f32[14,112]{1,0:T(8,128)}', space=vmem, size = 0x2000, scoped, tag = 'scratch operand']
  #allocation3 [shape = 'f32[16,64]{1,0:T(8,128)}', space=vmem, size = 0x2000, scoped, tag = 'scratch operand']
  %s0 = inlined_call_operand.vmem [shape: f32[2,14,192], index: 0, kind: input, shape index: {}]
  %s1 = inlined_call_operand.vmem [shape: f32[192,112], index: 1, kind: input, shape index: {}]
  %s2 = inlined_call_operand.vmem [shape: f32[1,112], index: 2, kind: input, shape index: {}]
  %s3 = inlined_call_operand.vmem [shape: f32[3,112,96], index: 3, kind: input, shape index: {}]
  %s4 = inlined_call_operand.vmem [shape: f32[3,112,96], index: 4, kind: input, shape index: {}]
  %s5 = inlined_call_operand.vmem [shape: f32[1,96], index: 5, kind: input, shape index: {}]
  %s6 = inlined_call_operand.vmem [shape: f32[384,96], index: 6, kind: input, shape index: {}]
  %s7 = inlined_call_operand.vmem [shape: f32[384,96], index: 7, kind: input, shape index: {}]
  %s8 = inlined_call_operand.vmem [shape: f32[12,384], index: 8, kind: input, shape index: {}]
  %s9 = inlined_call_operand.vmem [shape: f32[384,32], index: 9, kind: input, shape index: {}]
  %s10 = inlined_call_operand.vmem [shape: f32[1,32], index: 10, kind: input, shape index: {}]
  %s11 = inlined_call_operand.vmem [shape: f32[32,32], index: 11, kind: input, shape index: {}]
  %s12 = inlined_call_operand.vmem [shape: f32[32,32], index: 12, kind: input, shape index: {}]
  %s13 = inlined_call_operand.vmem [shape: f32[1,32], index: 13, kind: input, shape index: {}]
  %s14 = inlined_call_operand.vmem [shape: f32[32,10], index: 14, kind: input, shape index: {}]
  %s15 = inlined_call_operand.vmem [shape: f32[32,10], index: 15, kind: input, shape index: {}]
  %s16 = inlined_call_operand.vmem [shape: f32[1,10], index: 16, kind: input, shape index: {}]
  %s17 = inlined_call_operand.vmem [shape: f32[3,96,112], index: 17, kind: input, shape index: {}]
  %s18 = inlined_call_operand.vmem [shape: f32[3,112,64], index: 18, kind: input, shape index: {}]
  %s19 = inlined_call_operand.vmem [shape: f32[1,112], index: 19, kind: input, shape index: {}]
  %s20 = inlined_call_operand.vmem [shape: f32[2,16,64], index: 20, kind: output, shape index: {}]
  %s21 = sld [smem:[#allocation0]]
  $region113: #{lrp_model_forward.1} parent=0
    _
  %s23 = ssub.s32 1, %s21
  %s24 = scalar_select 0, %s23, %s21
  loop: start=0, step=1, limit=4
  $region2: #{lrp_model_forward.1} parent=0 // loop_pre_header
    _
  $region3: #{lrp_model_forward.1} parent=0 // loop_header
    %s26 = sphi 0, %s30
    %p27 = scmp.ge.s32.totalorder %s26, 4
    %s36 = sphi 0, %s38
    %s39 = sphi 0, %s36
    %s40 = sphi 0, %s39
    %s56 = sphi 0, %s40
    %s60 = sphi 0, %s60
    %s62 = sphi 0, %s60
    %s63 = sphi 0, %s62
    %s77 = sphi 0, %s63
    %s81 = sphi 0, %s81
    %s83 = sphi 0, %s81
    %s84 = sphi 0, %s83
    %s98 = sphi 0, %s84
    %s102 = sphi 0, %s102
    %s104 = sphi 0, %s102
    %s105 = sphi 0, %s104
    %s119 = sphi 0, %s105
    %s123 = sphi 0, %s123
    %s125 = sphi 0, %s123
    %s126 = sphi 0, %s125
    %s140 = sphi 0, %s126
    %s144 = sphi 0, %s144
    %s146 = sphi 0, %s144
    %s147 = sphi 0, %s146
    %s161 = sphi 0, %s147
    %s165 = sphi 0, %s165
    %s167 = sphi 0, %s165
    %s168 = sphi 0, %s167
    %s182 = sphi 0, %s168
    %s186 = sphi 0, %s186
    %s188 = sphi 0, %s186
    %s189 = sphi 0, %s188
    %s203 = sphi 0, %s189
    %s207 = sphi 0, %s207
    %s209 = sphi 0, %s207
    %s210 = sphi 0, %s209
    %s224 = sphi 0, %s210
    %s228 = sphi 0, %s228
    %s230 = sphi 0, %s228
    %s231 = sphi 0, %s230
    %s245 = sphi 0, %s231
    %s249 = sphi 0, %s249
    %s251 = sphi 0, %s249
    %s252 = sphi 0, %s251
    %s266 = sphi 0, %s252
    %s270 = sphi 0, %s270
    %s272 = sphi 0, %s270
    %s273 = sphi 0, %s272
    %s287 = sphi 0, %s273
    %s291 = sphi 0, %s291
    %s293 = sphi 0, %s291
    %s294 = sphi 0, %s293
    %s308 = sphi 0, %s294
    %s312 = sphi 0, %s312
    %s314 = sphi 0, %s312
    %s315 = sphi 0, %s314
    %s329 = sphi 0, %s315
    %s333 = sphi 0, %s333
    %s335 = sphi 0, %s333
    %s336 = sphi 0, %s335
    %s350 = sphi 0, %s336
    %s354 = sphi 0, %s354
    %s356 = sphi 0, %s354
    %s357 = sphi 0, %s356
    %s371 = sphi 0, %s357
    %s375 = sphi 0, %s375
    %s377 = sphi 0, %s375
    %s378 = sphi 0, %s377
    %s392 = sphi 0, %s378
    %s396 = sphi 0, %s396
    %s398 = sphi 0, %s396
    %s399 = sphi 0, %s398
    %s413 = sphi 0, %s399
    %s417 = sphi 0, %s417
    %s419 = sphi 0, %s417
    %s420 = sphi 0, %s419
    %s434 = sphi 0, %s420
    %s438 = sphi 0, %s438
    %s440 = sphi 0, %s438
    %s441 = sphi 0, %s440
    %s455 = sphi 0, %s441
    %s461 = sphi 0, %s463
    %s464 = sphi 0, %s461
    %s465 = sphi 0, %s464
    %s481 = sphi 0, %s465
  $region4: #{lrp_model_forward.1} parent=0 // loop_header_branch
    %29 = sbr.rel (%p27) target = $region8
  $region5: #{lrp_model_forward.1} parent=0 // loop_body
    %s31 = ssub.s32 %s26, 1
    %s32 = ssub.s32 %s26, 2
    %s33 = sadd.s32 %s26, 1
    %s34 = ssub.s32 %s26, %s33
    %p35 = scmp.eq.s32.totalorder %s34, 0
    %s37 = sadd.s32 %s36, 1
    %s38 = scalar_select %p35, %s36, %s37
    %p41 = pneg %p35
    %p42 = scmp.eq.s32.totalorder %s26, 1
    %p43 = por %p41, %p42
    %p44 = scmp.ne.s32.totalorder %s36, %s39
    %p45 = scmp.eq.s32.totalorder %s26, 0
    %p46 = por %p44, %p45
    %p47 = scmp.ne.s32.totalorder %s36, %s39
    %p48 = scmp.eq.s32.totalorder %s31, 1
    %p49 = por %p47, %p48
    %p50 = scmp.ne.s32.totalorder %s39, %s40
    %p51 = scmp.eq.s32.totalorder %s31, 0
    %p52 = por %p50, %p51
    %p53 = scmp.ne.s32.totalorder %s39, %s40
    %p54 = scmp.eq.s32.totalorder %s32, 1
    %p55 = por %p53, %p54
    %p57 = scmp.ne.s32.totalorder %s40, %s56
    %p58 = scmp.eq.s32.totalorder %s32, 0
    %p59 = por %p57, %p58
    %s61 = sadd.s32 %s60, 1
    %p64 = scmp.eq.s32.totalorder %s26, 1
    %p65 = scmp.ne.s32.totalorder %s60, %s62
    %p66 = scmp.eq.s32.totalorder %s26, 0
    %p67 = por %p65, %p66
    %p68 = scmp.ne.s32.totalorder %s60, %s62
    %p69 = scmp.eq.s32.totalorder %s31, 1
    %p70 = por %p68, %p69
    %p71 = scmp.ne.s32.totalorder %s62, %s63
    %p72 = scmp.eq.s32.totalorder %s31, 0
    %p73 = por %p71, %p72
    %p74 = scmp.ne.s32.totalorder %s62, %s63
    %p75 = scmp.eq.s32.totalorder %s32, 1
    %p76 = por %p74, %p75
    %p78 = scmp.ne.s32.totalorder %s63, %s77
    %p79 = scmp.eq.s32.totalorder %s32, 0
    %p80 = por %p78, %p79
    %s82 = sadd.s32 %s81, 1
    %p85 = scmp.eq.s32.totalorder %s26, 1
    %p86 = scmp.ne.s32.totalorder %s81, %s83
    %p87 = scmp.eq.s32.totalorder %s26, 0
    %p88 = por %p86, %p87
    %p89 = scmp.ne.s32.totalorder %s81, %s83
    %p90 = scmp.eq.s32.totalorder %s31, 1
    %p91 = por %p89, %p90
    %p92 = scmp.ne.s32.totalorder %s83, %s84
    %p93 = scmp.eq.s32.totalorder %s31, 0
    %p94 = por %p92, %p93
    %p95 = scmp.ne.s32.totalorder %s83, %s84
    %p96 = scmp.eq.s32.totalorder %s32, 1
    %p97 = por %p95, %p96
    %p99 = scmp.ne.s32.totalorder %s84, %s98
    %p100 = scmp.eq.s32.totalorder %s32, 0
    %p101 = por %p99, %p100
    %s103 = sadd.s32 %s102, 1
    %p106 = scmp.eq.s32.totalorder %s26, 1
    %p107 = scmp.ne.s32.totalorder %s102, %s104
    %p108 = scmp.eq.s32.totalorder %s26, 0
    %p109 = por %p107, %p108
    %p110 = scmp.ne.s32.totalorder %s102, %s104
    %p111 = scmp.eq.s32.totalorder %s31, 1
    %p112 = por %p110, %p111
    %p113 = scmp.ne.s32.totalorder %s104, %s105
    %p114 = scmp.eq.s32.totalorder %s31, 0
    %p115 = por %p113, %p114
    %p116 = scmp.ne.s32.totalorder %s104, %s105
    %p117 = scmp.eq.s32.totalorder %s32, 1
    %p118 = por %p116, %p117
    %p120 = scmp.ne.s32.totalorder %s105, %s119
    %p121 = scmp.eq.s32.totalorder %s32, 0
    %p122 = por %p120, %p121
    %s124 = sadd.s32 %s123, 1
    %p127 = scmp.eq.s32.totalorder %s26, 1
    %p128 = scmp.ne.s32.totalorder %s123, %s125
    %p129 = scmp.eq.s32.totalorder %s26, 0
    %p130 = por %p128, %p129
    %p131 = scmp.ne.s32.totalorder %s123, %s125
    %p132 = scmp.eq.s32.totalorder %s31, 1
    %p133 = por %p131, %p132
    %p134 = scmp.ne.s32.totalorder %s125, %s126
    %p135 = scmp.eq.s32.totalorder %s31, 0
    %p136 = por %p134, %p135
    %p137 = scmp.ne.s32.totalorder %s125, %s126
    %p138 = scmp.eq.s32.totalorder %s32, 1
    %p139 = por %p137, %p138
    %p141 = scmp.ne.s32.totalorder %s126, %s140
    %p142 = scmp.eq.s32.totalorder %s32, 0
    %p143 = por %p141, %p142
    %s145 = sadd.s32 %s144, 1
    %p148 = scmp.eq.s32.totalorder %s26, 1
    %p149 = scmp.ne.s32.totalorder %s144, %s146
    %p150 = scmp.eq.s32.totalorder %s26, 0
    %p151 = por %p149, %p150
    %p152 = scmp.ne.s32.totalorder %s144, %s146
    %p153 = scmp.eq.s32.totalorder %s31, 1
    %p154 = por %p152, %p153
    %p155 = scmp.ne.s32.totalorder %s146, %s147
    %p156 = scmp.eq.s32.totalorder %s31, 0
    %p157 = por %p155, %p156
    %p158 = scmp.ne.s32.totalorder %s146, %s147
    %p159 = scmp.eq.s32.totalorder %s32, 1
    %p160 = por %p158, %p159
    %p162 = scmp.ne.s32.totalorder %s147, %s161
    %p163 = scmp.eq.s32.totalorder %s32, 0
    %p164 = por %p162, %p163
    %s166 = sadd.s32 %s165, 1
    %p169 = scmp.eq.s32.totalorder %s26, 1
    %p170 = scmp.ne.s32.totalorder %s165, %s167
    %p171 = scmp.eq.s32.totalorder %s26, 0
    %p172 = por %p170, %p171
    %p173 = scmp.ne.s32.totalorder %s165, %s167
    %p174 = scmp.eq.s32.totalorder %s31, 1
    %p175 = por %p173, %p174
    %p176 = scmp.ne.s32.totalorder %s167, %s168
    %p177 = scmp.eq.s32.totalorder %s31, 0
    %p178 = por %p176, %p177
    %p179 = scmp.ne.s32.totalorder %s167, %s168
    %p180 = scmp.eq.s32.totalorder %s32, 1
    %p181 = por %p179, %p180
    %p183 = scmp.ne.s32.totalorder %s168, %s182
    %p184 = scmp.eq.s32.totalorder %s32, 0
    %p185 = por %p183, %p184
    %s187 = sadd.s32 %s186, 1
    %p190 = scmp.eq.s32.totalorder %s26, 1
    %p191 = scmp.ne.s32.totalorder %s186, %s188
    %p192 = scmp.eq.s32.totalorder %s26, 0
    %p193 = por %p191, %p192
    %p194 = scmp.ne.s32.totalorder %s186, %s188
    %p195 = scmp.eq.s32.totalorder %s31, 1
    %p196 = por %p194, %p195
    %p197 = scmp.ne.s32.totalorder %s188, %s189
    %p198 = scmp.eq.s32.totalorder %s31, 0
    %p199 = por %p197, %p198
    %p200 = scmp.ne.s32.totalorder %s188, %s189
    %p201 = scmp.eq.s32.totalorder %s32, 1
    %p202 = por %p200, %p201
    %p204 = scmp.ne.s32.totalorder %s189, %s203
    %p205 = scmp.eq.s32.totalorder %s32, 0
    %p206 = por %p204, %p205
    %s208 = sadd.s32 %s207, 1
    %p211 = scmp.eq.s32.totalorder %s26, 1
    %p212 = scmp.ne.s32.totalorder %s207, %s209
    %p213 = scmp.eq.s32.totalorder %s26, 0
    %p214 = por %p212, %p213
    %p215 = scmp.ne.s32.totalorder %s207, %s209
    %p216 = scmp.eq.s32.totalorder %s31, 1
    %p217 = por %p215, %p216
    %p218 = scmp.ne.s32.totalorder %s209, %s210
    %p219 = scmp.eq.s32.totalorder %s31, 0
    %p220 = por %p218, %p219
    %p221 = scmp.ne.s32.totalorder %s209, %s210
    %p222 = scmp.eq.s32.totalorder %s32, 1
    %p223 = por %p221, %p222
    %p225 = scmp.ne.s32.totalorder %s210, %s224
    %p226 = scmp.eq.s32.totalorder %s32, 0
    %p227 = por %p225, %p226
    %s229 = sadd.s32 %s228, 1
    %p232 = scmp.eq.s32.totalorder %s26, 1
    %p233 = scmp.ne.s32.totalorder %s228, %s230
    %p234 = scmp.eq.s32.totalorder %s26, 0
    %p235 = por %p233, %p234
    %p236 = scmp.ne.s32.totalorder %s228, %s230
    %p237 = scmp.eq.s32.totalorder %s31, 1
    %p238 = por %p236, %p237
    %p239 = scmp.ne.s32.totalorder %s230, %s231
    %p240 = scmp.eq.s32.totalorder %s31, 0
    %p241 = por %p239, %p240
    %p242 = scmp.ne.s32.totalorder %s230, %s231
    %p243 = scmp.eq.s32.totalorder %s32, 1
    %p244 = por %p242, %p243
    %p246 = scmp.ne.s32.totalorder %s231, %s245
    %p247 = scmp.eq.s32.totalorder %s32, 0
    %p248 = por %p246, %p247
    %s250 = sadd.s32 %s249, 1
    %p253 = scmp.eq.s32.totalorder %s26, 1
    %p254 = scmp.ne.s32.totalorder %s249, %s251
    %p255 = scmp.eq.s32.totalorder %s26, 0
    %p256 = por %p254, %p255
    %p257 = scmp.ne.s32.totalorder %s249, %s251
    %p258 = scmp.eq.s32.totalorder %s31, 1
    %p259 = por %p257, %p258
    %p260 = scmp.ne.s32.totalorder %s251, %s252
    %p261 = scmp.eq.s32.totalorder %s31, 0
    %p262 = por %p260, %p261
    %p263 = scmp.ne.s32.totalorder %s251, %s252
    %p264 = scmp.eq.s32.totalorder %s32, 1
    %p265 = por %p263, %p264
    %p267 = scmp.ne.s32.totalorder %s252, %s266
    %p268 = scmp.eq.s32.totalorder %s32, 0
    %p269 = por %p267, %p268
    %s271 = sadd.s32 %s270, 1
    %p274 = scmp.eq.s32.totalorder %s26, 1
    %p275 = scmp.ne.s32.totalorder %s270, %s272
    %p276 = scmp.eq.s32.totalorder %s26, 0
    %p277 = por %p275, %p276
    %p278 = scmp.ne.s32.totalorder %s270, %s272
    %p279 = scmp.eq.s32.totalorder %s31, 1
    %p280 = por %p278, %p279
    %p281 = scmp.ne.s32.totalorder %s272, %s273
    %p282 = scmp.eq.s32.totalorder %s31, 0
    %p283 = por %p281, %p282
    %p284 = scmp.ne.s32.totalorder %s272, %s273
    %p285 = scmp.eq.s32.totalorder %s32, 1
    %p286 = por %p284, %p285
    %p288 = scmp.ne.s32.totalorder %s273, %s287
    %p289 = scmp.eq.s32.totalorder %s32, 0
    %p290 = por %p288, %p289
    %s292 = sadd.s32 %s291, 1
    %p295 = scmp.eq.s32.totalorder %s26, 1
    %p296 = scmp.ne.s32.totalorder %s291, %s293
    %p297 = scmp.eq.s32.totalorder %s26, 0
    %p298 = por %p296, %p297
    %p299 = scmp.ne.s32.totalorder %s291, %s293
    %p300 = scmp.eq.s32.totalorder %s31, 1
    %p301 = por %p299, %p300
    %p302 = scmp.ne.s32.totalorder %s293, %s294
    %p303 = scmp.eq.s32.totalorder %s31, 0
    %p304 = por %p302, %p303
    %p305 = scmp.ne.s32.totalorder %s293, %s294
    %p306 = scmp.eq.s32.totalorder %s32, 1
    %p307 = por %p305, %p306
    %p309 = scmp.ne.s32.totalorder %s294, %s308
    %p310 = scmp.eq.s32.totalorder %s32, 0
    %p311 = por %p309, %p310
    %s313 = sadd.s32 %s312, 1
    %p316 = scmp.eq.s32.totalorder %s26, 1
    %p317 = scmp.ne.s32.totalorder %s312, %s314
    %p318 = scmp.eq.s32.totalorder %s26, 0
    %p319 = por %p317, %p318
    %p320 = scmp.ne.s32.totalorder %s312, %s314
    %p321 = scmp.eq.s32.totalorder %s31, 1
    %p322 = por %p320, %p321
    %p323 = scmp.ne.s32.totalorder %s314, %s315
    %p324 = scmp.eq.s32.totalorder %s31, 0
    %p325 = por %p323, %p324
    %p326 = scmp.ne.s32.totalorder %s314, %s315
    %p327 = scmp.eq.s32.totalorder %s32, 1
    %p328 = por %p326, %p327
    %p330 = scmp.ne.s32.totalorder %s315, %s329
    %p331 = scmp.eq.s32.totalorder %s32, 0
    %p332 = por %p330, %p331
    %s334 = sadd.s32 %s333, 1
    %p337 = scmp.eq.s32.totalorder %s26, 1
    %p338 = scmp.ne.s32.totalorder %s333, %s335
    %p339 = scmp.eq.s32.totalorder %s26, 0
    %p340 = por %p338, %p339
    %p341 = scmp.ne.s32.totalorder %s333, %s335
    %p342 = scmp.eq.s32.totalorder %s31, 1
    %p343 = por %p341, %p342
    %p344 = scmp.ne.s32.totalorder %s335, %s336
    %p345 = scmp.eq.s32.totalorder %s31, 0
    %p346 = por %p344, %p345
    %p347 = scmp.ne.s32.totalorder %s335, %s336
    %p348 = scmp.eq.s32.totalorder %s32, 1
    %p349 = por %p347, %p348
    %p351 = scmp.ne.s32.totalorder %s336, %s350
    %p352 = scmp.eq.s32.totalorder %s32, 0
    %p353 = por %p351, %p352
    %s355 = sadd.s32 %s354, 1
    %p358 = scmp.eq.s32.totalorder %s26, 1
    %p359 = scmp.ne.s32.totalorder %s354, %s356
    %p360 = scmp.eq.s32.totalorder %s26, 0
    %p361 = por %p359, %p360
    %p362 = scmp.ne.s32.totalorder %s354, %s356
    %p363 = scmp.eq.s32.totalorder %s31, 1
    %p364 = por %p362, %p363
    %p365 = scmp.ne.s32.totalorder %s356, %s357
    %p366 = scmp.eq.s32.totalorder %s31, 0
    %p367 = por %p365, %p366
    %p368 = scmp.ne.s32.totalorder %s356, %s357
    %p369 = scmp.eq.s32.totalorder %s32, 1
    %p370 = por %p368, %p369
    %p372 = scmp.ne.s32.totalorder %s357, %s371
    %p373 = scmp.eq.s32.totalorder %s32, 0
    %p374 = por %p372, %p373
    %s376 = sadd.s32 %s375, 1
    %p379 = scmp.eq.s32.totalorder %s26, 1
    %p380 = scmp.ne.s32.totalorder %s375, %s377
    %p381 = scmp.eq.s32.totalorder %s26, 0
    %p382 = por %p380, %p381
    %p383 = scmp.ne.s32.totalorder %s375, %s377
    %p384 = scmp.eq.s32.totalorder %s31, 1
    %p385 = por %p383, %p384
    %p386 = scmp.ne.s32.totalorder %s377, %s378
    %p387 = scmp.eq.s32.totalorder %s31, 0
    %p388 = por %p386, %p387
    %p389 = scmp.ne.s32.totalorder %s377, %s378
    %p390 = scmp.eq.s32.totalorder %s32, 1
    %p391 = por %p389, %p390
    %p393 = scmp.ne.s32.totalorder %s378, %s392
    %p394 = scmp.eq.s32.totalorder %s32, 0
    %p395 = por %p393, %p394
    %s397 = sadd.s32 %s396, 1
    %p400 = scmp.eq.s32.totalorder %s26, 1
    %p401 = scmp.ne.s32.totalorder %s396, %s398
    %p402 = scmp.eq.s32.totalorder %s26, 0
    %p403 = por %p401, %p402
    %p404 = scmp.ne.s32.totalorder %s396, %s398
    %p405 = scmp.eq.s32.totalorder %s31, 1
    %p406 = por %p404, %p405
    %p407 = scmp.ne.s32.totalorder %s398, %s399
    %p408 = scmp.eq.s32.totalorder %s31, 0
    %p409 = por %p407, %p408
    %p410 = scmp.ne.s32.totalorder %s398, %s399
    %p411 = scmp.eq.s32.totalorder %s32, 1
    %p412 = por %p410, %p411
    %p414 = scmp.ne.s32.totalorder %s399, %s413
    %p415 = scmp.eq.s32.totalorder %s32, 0
    %p416 = por %p414, %p415
    %s418 = sadd.s32 %s417, 1
    %p421 = scmp.eq.s32.totalorder %s26, 1
    %p422 = scmp.ne.s32.totalorder %s417, %s419
    %p423 = scmp.eq.s32.totalorder %s26, 0
    %p424 = por %p422, %p423
    %p425 = scmp.ne.s32.totalorder %s417, %s419
    %p426 = scmp.eq.s32.totalorder %s31, 1
    %p427 = por %p425, %p426
    %p428 = scmp.ne.s32.totalorder %s419, %s420
    %p429 = scmp.eq.s32.totalorder %s31, 0
    %p430 = por %p428, %p429
    %p431 = scmp.ne.s32.totalorder %s419, %s420
    %p432 = scmp.eq.s32.totalorder %s32, 1
    %p433 = por %p431, %p432
    %p435 = scmp.ne.s32.totalorder %s420, %s434
    %p436 = scmp.eq.s32.totalorder %s32, 0
    %p437 = por %p435, %p436
    %s439 = sadd.s32 %s438, 1
    %p442 = scmp.eq.s32.totalorder %s26, 1
    %p443 = scmp.ne.s32.totalorder %s438, %s440
    %p444 = scmp.eq.s32.totalorder %s26, 0
    %p445 = por %p443, %p444
    %p446 = scmp.ne.s32.totalorder %s438, %s440
    %p447 = scmp.eq.s32.totalorder %s31, 1
    %p448 = por %p446, %p447
    %p449 = scmp.ne.s32.totalorder %s440, %s441
    %p450 = scmp.eq.s32.totalorder %s31, 0
    %p451 = por %p449, %p450
    %p452 = scmp.ne.s32.totalorder %s440, %s441
    %p453 = scmp.eq.s32.totalorder %s32, 1
    %p454 = por %p452, %p453
    %p456 = scmp.ne.s32.totalorder %s441, %s455
    %p457 = scmp.eq.s32.totalorder %s32, 0
    %p458 = por %p456, %p457
    %s459 = ssub.s32 %s26, %s33
    %p460 = scmp.eq.s32.totalorder %s459, 0
    %s462 = sadd.s32 %s461, 1
    %s463 = scalar_select %p460, %s461, %s462
    %p466 = pneg %p460
    %p467 = scmp.eq.s32.totalorder %s26, 1
    %p468 = por %p466, %p467
    %p469 = scmp.ne.s32.totalorder %s461, %s464
    %p470 = scmp.eq.s32.totalorder %s26, 0
    %p471 = por %p469, %p470
    %p472 = scmp.ne.s32.totalorder %s461, %s464
    %p473 = scmp.eq.s32.totalorder %s31, 1
    %p474 = por %p472, %p473
    %p475 = scmp.ne.s32.totalorder %s464, %s465
    %p476 = scmp.eq.s32.totalorder %s31, 0
    %p477 = por %p475, %p476
    %p478 = scmp.ne.s32.totalorder %s464, %s465
    %p479 = scmp.eq.s32.totalorder %s32, 1
    %p480 = por %p478, %p479
    %p482 = scmp.ne.s32.totalorder %s465, %s481
    %p483 = scmp.eq.s32.totalorder %s32, 0
    %p484 = por %p482, %p483
    %p485 = scmp.le.s32.totalorder 1, %s26
    %p486 = scmp.lt.s32.totalorder %s26, 3
    %p487 = pnand %p485, %p486
    %p488 = pneg %p487
    // Predicated region
    $region9: #{lrp_model_forward.1} parent=5 // pred_check
      _
    $region10: #{lrp_model_forward.1} parent=5 // pred_check_branch
      %490 = sbr.rel (%p487) target = $region12
    $region11: #{lrp_model_forward.1} parent=5 // pred_region
      %s491 = ssub.s32 %s26, 1
      // Predicated region
      $region13: #{lrp_model_forward.1} parent=11 // pred_check
        %p492 = pneg %p73
      $region14: #{lrp_model_forward.1} parent=11 // pred_check_branch
        %494 = sbr.rel (%p492) target = $region16
      $region15: #{lrp_model_forward.1} parent=11 // pred_region
        _
      $region16: #{lrp_model_forward.1} parent=11 // pred_fallthru
        _
      // Predicated region
      $region17: #{lrp_model_forward.1} parent=11 // pred_check
        %p495 = pneg %p94
      $region18: #{lrp_model_forward.1} parent=11 // pred_check_branch
        %497 = sbr.rel (%p495) target = $region20
      $region19: #{lrp_model_forward.1} parent=11 // pred_region
        _
      $region20: #{lrp_model_forward.1} parent=11 // pred_fallthru
        _
      // Predicated region
      $region21: #{lrp_model_forward.1} parent=11 // pred_check
        %p498 = pneg %p115
      $region22: #{lrp_model_forward.1} parent=11 // pred_check_branch
        %500 = sbr.rel (%p498) target = $region24
      $region23: #{lrp_model_forward.1} parent=11 // pred_region
        _
      $region24: #{lrp_model_forward.1} parent=11 // pred_fallthru
        _
      // Predicated region
      $region25: #{lrp_model_forward.1} parent=11 // pred_check
        %p501 = pneg %p136
      $region26: #{lrp_model_forward.1} parent=11 // pred_check_branch
        %503 = sbr.rel (%p501) target = $region28
      $region27: #{lrp_model_forward.1} parent=11 // pred_region
        _
      $region28: #{lrp_model_forward.1} parent=11 // pred_fallthru
        _
      // Predicated region
      $region29: #{lrp_model_forward.1} parent=11 // pred_check
        %p504 = pneg %p157
      $region30: #{lrp_model_forward.1} parent=11 // pred_check_branch
        %506 = sbr.rel (%p504) target = $region32
      $region31: #{lrp_model_forward.1} parent=11 // pred_region
        _
      $region32: #{lrp_model_forward.1} parent=11 // pred_fallthru
        _
      // Predicated region
      $region33: #{lrp_model_forward.1} parent=11 // pred_check
        %p507 = pneg %p178
      $region34: #{lrp_model_forward.1} parent=11 // pred_check_branch
        %509 = sbr.rel (%p507) target = $region36
      $region35: #{lrp_model_forward.1} parent=11 // pred_region
        _
      $region36: #{lrp_model_forward.1} parent=11 // pred_fallthru
        _
      // Predicated region
      $region37: #{lrp_model_forward.1} parent=11 // pred_check
        %p510 = pneg %p199
      $region38: #{lrp_model_forward.1} parent=11 // pred_check_branch
        %512 = sbr.rel (%p510) target = $region40
      $region39: #{lrp_model_forward.1} parent=11 // pred_region
        _
      $region40: #{lrp_model_forward.1} parent=11 // pred_fallthru
        _
      // Predicated region
      $region41: #{lrp_model_forward.1} parent=11 // pred_check
        %p513 = pneg %p220
      $region42: #{lrp_model_forward.1} parent=11 // pred_check_branch
        %515 = sbr.rel (%p513) target = $region44
      $region43: #{lrp_model_forward.1} parent=11 // pred_region
        _
      $region44: #{lrp_model_forward.1} parent=11 // pred_fallthru
        _
      // Predicated region
      $region45: #{lrp_model_forward.1} parent=11 // pred_check
        %p516 = pneg %p241
      $region46: #{lrp_model_forward.1} parent=11 // pred_check_branch
        %518 = sbr.rel (%p516) target = $region48
      $region47: #{lrp_model_forward.1} parent=11 // pred_region
        _
      $region48: #{lrp_model_forward.1} parent=11 // pred_fallthru
        _
      // Predicated region
      $region49: #{lrp_model_forward.1} parent=11 // pred_check
        %p519 = pneg %p262
      $region50: #{lrp_model_forward.1} parent=11 // pred_check_branch
        %521 = sbr.rel (%p519) target = $region52
      $region51: #{lrp_model_forward.1} parent=11 // pred_region
        _
      $region52: #{lrp_model_forward.1} parent=11 // pred_fallthru
        _
      // Predicated region
      $region53: #{lrp_model_forward.1} parent=11 // pred_check
        %p522 = pneg %p283
      $region54: #{lrp_model_forward.1} parent=11 // pred_check_branch
        %524 = sbr.rel (%p522) target = $region56
      $region55: #{lrp_model_forward.1} parent=11 // pred_region
        _
      $region56: #{lrp_model_forward.1} parent=11 // pred_fallthru
        _
      // Predicated region
      $region57: #{lrp_model_forward.1} parent=11 // pred_check
        %p525 = pneg %p304
      $region58: #{lrp_model_forward.1} parent=11 // pred_check_branch
        %527 = sbr.rel (%p525) target = $region60
      $region59: #{lrp_model_forward.1} parent=11 // pred_region
        _
      $region60: #{lrp_model_forward.1} parent=11 // pred_fallthru
        _
      // Predicated region
      $region61: #{lrp_model_forward.1} parent=11 // pred_check
        %p528 = pneg %p325
      $region62: #{lrp_model_forward.1} parent=11 // pred_check_branch
        %530 = sbr.rel (%p528) target = $region64
      $region63: #{lrp_model_forward.1} parent=11 // pred_region
        _
      $region64: #{lrp_model_forward.1} parent=11 // pred_fallthru
        _
      // Predicated region
      $region65: #{lrp_model_forward.1} parent=11 // pred_check
        %p531 = pneg %p346
      $region66: #{lrp_model_forward.1} parent=11 // pred_check_branch
        %533 = sbr.rel (%p531) target = $region68
      $region67: #{lrp_model_forward.1} parent=11 // pred_region
        _
      $region68: #{lrp_model_forward.1} parent=11 // pred_fallthru
        _
      // Predicated region
      $region69: #{lrp_model_forward.1} parent=11 // pred_check
        %p534 = pneg %p367
      $region70: #{lrp_model_forward.1} parent=11 // pred_check_branch
        %536 = sbr.rel (%p534) target = $region72
      $region71: #{lrp_model_forward.1} parent=11 // pred_region
        _
      $region72: #{lrp_model_forward.1} parent=11 // pred_fallthru
        _
      // Predicated region
      $region73: #{lrp_model_forward.1} parent=11 // pred_check
        %p537 = pneg %p388
      $region74: #{lrp_model_forward.1} parent=11 // pred_check_branch
        %539 = sbr.rel (%p537) target = $region76
      $region75: #{lrp_model_forward.1} parent=11 // pred_region
        _
      $region76: #{lrp_model_forward.1} parent=11 // pred_fallthru
        _
      // Predicated region
      $region77: #{lrp_model_forward.1} parent=11 // pred_check
        %p540 = pneg %p409
      $region78: #{lrp_model_forward.1} parent=11 // pred_check_branch
        %542 = sbr.rel (%p540) target = $region80
      $region79: #{lrp_model_forward.1} parent=11 // pred_region
        _
      $region80: #{lrp_model_forward.1} parent=11 // pred_fallthru
        _
      // Predicated region
      $region81: #{lrp_model_forward.1} parent=11 // pred_check
        %p543 = pneg %p430
      $region82: #{lrp_model_forward.1} parent=11 // pred_check_branch
        %545 = sbr.rel (%p543) target = $region84
      $region83: #{lrp_model_forward.1} parent=11 // pred_region
        _
      $region84: #{lrp_model_forward.1} parent=11 // pred_fallthru
        _
      // Predicated region
      $region85: #{lrp_model_forward.1} parent=11 // pred_check
        %p546 = pneg %p451
      $region86: #{lrp_model_forward.1} parent=11 // pred_check_branch
        %548 = sbr.rel (%p546) target = $region88
      $region87: #{lrp_model_forward.1} parent=11 // pred_region
        _
      $region88: #{lrp_model_forward.1} parent=11 // pred_fallthru
        _
    $region12: #{lrp_model_forward.1} parent=5 // pred_fallthru
      _
    %p549 = scmp.lt.s32.totalorder %s26, 2
    // Predicated region
    $region89: #{lrp_model_forward.1} parent=5 // pred_check
      %p550 = pneg %p549
    $region90: #{lrp_model_forward.1} parent=5 // pred_check_branch
      %552 = sbr.rel (%p550) target = $region92
    $region91: #{lrp_model_forward.1} parent=5 // pred_region
      // Predicated region
      $region93: #{lrp_model_forward.1} parent=91 // pred_check
        %p553 = pneg %p46
      $region94: #{lrp_model_forward.1} parent=91 // pred_check_branch
        %555 = sbr.rel (%p553) target = $region96
      $region95: #{lrp_model_forward.1} parent=91 // pred_region
        %p556 = scmp.lt.s32.totalorder %s26, 1
        %s557 = scalar_select %p556, %s26, 1
        %s558 = smul.addr %s557, 4
        %s559 = smul.addr %s558, 8
        %s560 = scalar_lea.vmem %s0, %s559
      $region96: #{lrp_model_forward.1} parent=91 // pred_fallthru
        _
    $region92: #{lrp_model_forward.1} parent=5 // pred_fallthru
      _
    %p561 = scmp.le.s32.totalorder 1, %s26
    %p562 = scmp.lt.s32.totalorder %s26, 3
    %p563 = pnand %p561, %p562
    %p564 = pneg %p563
    // Predicated region
    $region97: #{lrp_model_forward.1} parent=5 // pred_check
      _
    $region98: #{lrp_model_forward.1} parent=5 // pred_check_branch
      %566 = sbr.rel (%p563) target = $region100
    $region99: #{lrp_model_forward.1} parent=5 // pred_region
      %s567 = ssub.s32 %s26, 1
      %p568 = scmp.lt.s32.totalorder %s31, 1
      %s569 = scalar_select %p568, %s31, 1
      %s570 = smul.addr %s569, 4
      %s571 = smul.addr %s570, 8
      %s572 = scalar_lea.vmem %s0, %s571
      %p573 = pneg %p52
      %p574 = pneg %p49
      %p575 = pneg %p73
      %p576 = pneg %p70
      %p577 = pneg %p94
      %p578 = pneg %p91
      %p579 = pneg %p115
      %p580 = pneg %p112
      %p581 = pneg %p136
      %p582 = pneg %p133
      %p583 = pneg %p157
      %p584 = pneg %p154
      %p585 = pneg %p178
      %p586 = pneg %p175
      %p587 = pneg %p199
      %p588 = pneg %p196
      %p589 = pneg %p220
      %p590 = pneg %p217
      %p591 = pneg %p241
      %p592 = pneg %p238
      %p593 = pneg %p262
      %p594 = pneg %p259
      %p595 = pneg %p283
      %p596 = pneg %p280
      %p597 = pneg %p304
      %p598 = pneg %p301
      %p599 = pneg %p325
      %p600 = pneg %p322
      %p601 = pneg %p346
      %p602 = pneg %p343
      %p603 = pneg %p367
      %p604 = pneg %p364
      %p605 = pneg %p388
      %p606 = pneg %p385
      %p607 = pneg %p409
      %p608 = pneg %p406
      %p609 = pneg %p430
      %p610 = pneg %p427
      %p611 = pneg %p451
      %p612 = pneg %p448
      %p613 = pneg %p477
      %p614 = pneg %p474
      %p615 = scmp.lt.s32.totalorder %s31, 1
      %s616 = scalar_select %p615, %s31, 1
      %s617 = smul.addr %s616, 2
      %s618 = smul.addr %s617, 8
      %s619 = scalar_lea.vmem %s20, %s618
      %p620 = scmp.lt.s32.totalorder %s31, 1
      %s621 = scalar_select %p620, %s31, 1
      %s622 = smul.addr %s621, 4
      %s623 = smul.addr %s622, 8
      %s624 = scalar_lea.vmem %s0, %s623
      %p625 = scmp.lt.s32.totalorder %s31, 1
      %s626 = scalar_select %p625, %s31, 1
      %s627 = smul.addr %s626, 2
      %s628 = smul.addr %s627, 8
      %s629 = scalar_lea.vmem %s20, %s628
      %v630 = vld [vmem:[%s624] sm:$0xff]
      %v631 = vld [vmem:[%s624 + $0x8] sm:$0xff]
      %v632 = vld [vmem:[%s624 + $0x10] sm:$0x3f]
      %v633 = vld [vmem:[%s624 + $0x18] sm:$0x3f]
      %v634 = vld [vmem:[%s1] sm:$0xff]
      %v635 = vld [vmem:[%s1 + $0x8] sm:$0xff]
      %v636 = vld [vmem:[%s1 + $0x10] sm:$0xff]
      %v637 = vld [vmem:[%s1 + $0x18] sm:$0xff]
      %v638 = vld [vmem:[%s1 + $0x20] sm:$0xff]
      %v639 = vld [vmem:[%s1 + $0x28] sm:$0xff]
      %v640 = vld [vmem:[%s1 + $0x30] sm:$0xff]
      %v641 = vld [vmem:[%s1 + $0x38] sm:$0xff]
      %v642 = vld [vmem:[%s1 + $0x40] sm:$0xff]
      %v643 = vld [vmem:[%s1 + $0x48] sm:$0xff]
      %v644 = vld [vmem:[%s1 + $0x50] sm:$0xff]
      %v645 = vld [vmem:[%s1 + $0x58] sm:$0xff]
      %v646 = vld [vmem:[%s1 + $0x60] sm:$0xff]
      %v647 = vld [vmem:[%s1 + $0x68] sm:$0xff]
      %v648 = vld [vmem:[%s1 + $0x70] sm:$0xff]
      %v649 = vld [vmem:[%s1 + $0x78] sm:$0xff]
      %v650 = vld [vmem:[%s1 + $0x80] sm:$0xff]
      %v651 = vld [vmem:[%s1 + $0x88] sm:$0xff]
      %v652 = vld [vmem:[%s1 + $0x90] sm:$0xff]
      %v653 = vld [vmem:[%s1 + $0x98] sm:$0xff]
      %v654 = vld [vmem:[%s1 + $0xa0] sm:$0xff]
      %v655 = vld [vmem:[%s1 + $0xa8] sm:$0xff]
      %v656 = vld [vmem:[%s1 + $0xb0] sm:$0xff]
      %v657 = vld [vmem:[%s1 + $0xb8] sm:$0xff]
      %v658 = vld [vmem:[%s2] sm:$0x1]
      %v660 = vlaneseq
      %v661 = vshrl.u32 %v660, 7
      %v662 = vsub.s32 0, %v661
      %v663 = vrot.slane %v658, %v662
      %vm665 = vcmask 523264
      %v667 = vsel %vm665, %v631, 0
      %v670 = vsel %vm665, %v633, 0
      %672 = vmatprep.subr.mxu0 0.0
      %673 = vmatpush1.msra.mxu0 %v634
      %674 = vmatprep.subr.mxu0 0.0
      %675 = vmatpush1.msra.mxu0 %v635
      %676 = vmatprep.subr.mxu0 0.0
      %677 = vmatpush1.msra.mxu0 %v636
      %678 = vmatprep.subr.mxu0 0.0
      %679 = vmatpush1.msra.mxu0 %v637
      %680 = vmatprep.subr.mxu0 0.0
      %681 = vmatpush1.msra.mxu0 %v638
      %682 = vmatprep.subr.mxu0 0.0
      %683 = vmatpush1.msra.mxu0 %v639
      %684 = vmatprep.subr.mxu0 0.0
      %685 = vmatpush1.msra.mxu0 %v640
      %686 = vmatprep.subr.mxu0 0.0
      %687 = vmatpush1.msra.mxu0 %v641
      %688 = vmatprep.subr.mxu0 0.0
      %689 = vmatpush1.msra.mxu0 %v642
      %690 = vmatprep.subr.mxu0 0.0
      %691 = vmatpush1.msra.mxu0 %v643
      %692 = vmatprep.subr.mxu0 0.0
      %693 = vmatpush1.msra.mxu0 %v644
      %694 = vmatprep.subr.mxu0 0.0
      %695 = vmatpush1.msra.mxu0 %v645
      %696 = vmatprep.subr.mxu0 0.0
      %697 = vmatpush1.msra.mxu0 %v646
      %698 = vmatprep.subr.mxu0 0.0
      %699 = vmatpush1.msra.mxu0 %v647
      %700 = vmatprep.subr.mxu0 0.0
      %701 = vmatpush1.msra.mxu0 %v648
      %702 = vmatprep.subr.mxu0 0.0
      %703 = vmatpush1.msra.mxu0 %v649
      %704 = vmatprep.subr.mxu0 0.0
      %705 = vmatpush1.msra.mxu0 %v650
      %706 = vmatprep.subr.mxu0 0.0
      %707 = vmatpush1.msra.mxu0 %v651
      %708 = vmatprep.subr.mxu0 0.0
      %709 = vmatpush1.msra.mxu0 %v652
      %710 = vmatprep.subr.mxu0 0.0
      %711 = vmatpush1.msra.mxu0 %v653
      %712 = vmatprep.subr.mxu0 0.0
      %713 = vmatpush1.msra.mxu0 %v654
      %714 = vmatprep.subr.mxu0 0.0
      %715 = vmatpush1.msra.mxu0 %v655
      %716 = vmatprep.subr.mxu0 0.0
      %717 = vmatpush1.msra.mxu0 %v656
      %718 = vmatprep.subr.mxu0 0.0
      %719 = vmatpush1.msra.mxu0 %v657
      %720 = vmatprep.subr.mxu0 0.0
      %721 = vmatpush1.msra.mxu0 0.0
      %722 = vmatprep.subr.mxu0 0.0
      %723 = vmatpush1.msra.mxu0 0.0
      %724 = vmatprep.subr.mxu0 0.0
      %725 = vmatpush1.msra.mxu0 0.0
      %726 = vmatprep.subr.mxu0 0.0
      %727 = vmatpush1.msra.mxu0 0.0
      %728 = vmatprep.subr.mxu0 0.0
      %729 = vmatpush1.msra.mxu0 0.0
      %730 = vmatprep.subr.mxu0 0.0
      %731 = vmatpush1.msra.mxu0 0.0
      %732 = vmatprep.subr.mxu0 0.0
      %733 = vmatpush1.msra.mxu0 0.0
      %734 = vmatprep.subr.mxu0 0.0
      %735 = vmatpush1.msra.mxu0 0.0
      %736 = vmatprep.mubr.f32.mxu0 %v667
      %737 = vmatmul.mubr.f32.gmra.mrb[0].mxu0 %v630
      %v738 = vpop.f32.mrb[0].mxu0
      %v739 = vadd.f32 %v663, %v738
      %v740 = vpop.f32.mrb[0].mxu0
      %741 = vmatprep.mubr.f32.mxu0 %v670
      %742 = vmatmul.mubr.f32.gmra.mrb[0].mxu0 %v632
      %v743 = vpop.f32.mrb[0].mxu0
      %v744 = vadd.f32 %v663, %v743
      %v745 = vpop.f32.mrb[0].mxu0
      %746 = vdwg.mxu0
      %v747 = vmax.f32 %v739, 0.0
      %v748 = vmax.f32 %v744, 0.0
      %v749 = vld [vmem:[%s5] sm:$0x1]
      %v750 = vld [vmem:[%s3] sm:$0xff]
      %v751 = vld [vmem:[%s3 + $0x8] sm:$0xff]
      %v752 = vld [vmem:[%s3 + $0x10] sm:$0xff]
      %v753 = vld [vmem:[%s3 + $0x18] sm:$0xff]
      %v754 = vld [vmem:[%s3 + $0x20] sm:$0xff]
      %v755 = vld [vmem:[%s3 + $0x28] sm:$0xff]
      %v756 = vld [vmem:[%s3 + $0x30] sm:$0xff]
      %v757 = vld [vmem:[%s3 + $0x38] sm:$0xff]
      %v758 = vld [vmem:[%s3 + $0x40] sm:$0xff]
      %v759 = vld [vmem:[%s3 + $0x48] sm:$0xff]
      %v760 = vld [vmem:[%s3 + $0x50] sm:$0xff]
      %v761 = vld [vmem:[%s3 + $0x58] sm:$0xff]
      %v762 = vld [vmem:[%s3 + $0x60] sm:$0xff]
      %v763 = vld [vmem:[%s3 + $0x68] sm:$0xff]
      %vm764 = vcmask 916480
      %v766 = vsel %vm764, %v747, 0
      %v769 = vsel %vm764, %v748, 0
      %771 = vmatprep.subr.mxu0 0.0
      %772 = vmatpush1.msra.mxu0 %v750
      %773 = vmatprep.subr.mxu0 0.0
      %774 = vmatpush1.msra.mxu0 %v751
      %775 = vmatprep.subr.mxu0 0.0
      %776 = vmatpush1.msra.mxu0 %v752
      %777 = vmatprep.subr.mxu0 0.0
      %778 = vmatpush1.msra.mxu0 %v753
      %779 = vmatprep.subr.mxu0 0.0
      %780 = vmatpush1.msra.mxu0 %v754
      %781 = vmatprep.subr.mxu0 0.0
      %782 = vmatpush1.msra.mxu0 %v755
      %783 = vmatprep.subr.mxu0 0.0
      %784 = vmatpush1.msra.mxu0 %v756
      %785 = vmatprep.subr.mxu0 0.0
      %786 = vmatpush1.msra.mxu0 %v757
      %787 = vmatprep.subr.mxu0 0.0
      %788 = vmatpush1.msra.mxu0 %v758
      %789 = vmatprep.subr.mxu0 0.0
      %790 = vmatpush1.msra.mxu0 %v759
      %791 = vmatprep.subr.mxu0 0.0
      %792 = vmatpush1.msra.mxu0 %v760
      %793 = vmatprep.subr.mxu0 0.0
      %794 = vmatpush1.msra.mxu0 %v761
      %795 = vmatprep.subr.mxu0 0.0
      %796 = vmatpush1.msra.mxu0 %v762
      %797 = vmatprep.subr.mxu0 0.0
      %798 = vmatpush1.msra.mxu0 %v763
      %799 = vmatprep.subr.mxu0 0.0
      %800 = vmatpush1.msra.mxu0 0.0
      %801 = vmatprep.subr.mxu0 0.0
      %802 = vmatpush1.msra.mxu0 0.0
      %803 = vmatprep.subr.mxu0 0.0
      %804 = vmatpush1.msra.mxu0 0.0
      %805 = vmatprep.subr.mxu0 0.0
      %806 = vmatpush1.msra.mxu0 0.0
      %807 = vmatprep.subr.mxu0 0.0
      %808 = vmatpush1.msra.mxu0 0.0
      %809 = vmatprep.subr.mxu0 0.0
      %810 = vmatpush1.msra.mxu0 0.0
      %811 = vmatprep.subr.mxu0 0.0
      %812 = vmatpush1.msra.mxu0 0.0
      %813 = vmatprep.subr.mxu0 0.0
      %814 = vmatpush1.msra.mxu0 0.0
      %815 = vmatprep.subr.mxu0 0.0
      %816 = vmatpush1.msra.mxu0 0.0
      %817 = vmatprep.subr.mxu0 0.0
      %818 = vmatpush1.msra.mxu0 0.0
      %819 = vmatprep.subr.mxu0 0.0
      %820 = vmatpush1.msra.mxu0 0.0
      %821 = vmatprep.subr.mxu0 0.0
      %822 = vmatpush1.msra.mxu0 0.0
      %823 = vmatprep.subr.mxu0 0.0
      %824 = vmatpush1.msra.mxu0 0.0
      %825 = vmatprep.subr.mxu0 0.0
      %826 = vmatpush1.msra.mxu0 0.0
      %827 = vmatprep.subr.mxu0 0.0
      %828 = vmatpush1.msra.mxu0 0.0
      %829 = vmatprep.subr.mxu0 0.0
      %830 = vmatpush1.msra.mxu0 0.0
      %831 = vmatprep.subr.mxu0 0.0
      %832 = vmatpush1.msra.mxu0 0.0
      %833 = vmatprep.subr.mxu0 0.0
      %834 = vmatpush1.msra.mxu0 0.0
      %835 = vmatprep.mubr.f32.mxu0 0.0
      %836 = vmatmul.mubr.f32.gmra.mrb[0].mxu0 %v766
      %v837 = vpop.f32.mrb[0].mxu0
      %v838 = vadd.f32 0.0, %v837
      %v839 = vpop.f32.mrb[0].mxu0
      %840 = vmatprep.mubr.f32.mxu0 0.0
      %841 = vmatmul.mubr.f32.gmra.mrb[0].mxu0 %v769
      %v842 = vpop.f32.mrb[0].mxu0
      %v843 = vadd.f32 0.0, %v842
      %v844 = vpop.f32.mrb[0].mxu0
      %845 = vdwg.mxu0
      %v847 = vlaneseq
      %v848 = vshrl.u32 %v847, 7
      %v849 = vsub.s32 0, %v848
      %v850 = vrot.slane %v749, %v849
      %v852 = vadd.f32 %v850, %v838
      %v853 = vadd.f32 %v850, %v843
      %v854 = vld [vmem:[%s4] sm:$0xff]
      %v855 = vld [vmem:[%s4 + $0x8] sm:$0xff]
      %v856 = vld [vmem:[%s4 + $0x10] sm:$0xff]
      %v857 = vld [vmem:[%s4 + $0x18] sm:$0xff]
      %v858 = vld [vmem:[%s4 + $0x20] sm:$0xff]
      %v859 = vld [vmem:[%s4 + $0x28] sm:$0xff]
      %v860 = vld [vmem:[%s4 + $0x30] sm:$0xff]
      %v861 = vld [vmem:[%s4 + $0x38] sm:$0xff]
      %v862 = vld [vmem:[%s4 + $0x40] sm:$0xff]
      %v863 = vld [vmem:[%s4 + $0x48] sm:$0xff]
      %v864 = vld [vmem:[%s4 + $0x50] sm:$0xff]
      %v865 = vld [vmem:[%s4 + $0x58] sm:$0xff]
      %v866 = vld [vmem:[%s4 + $0x60] sm:$0xff]
      %v867 = vld [vmem:[%s4 + $0x68] sm:$0xff]
      %s868 = scalar_lea.vmem %s3, 112
      %v869 = vld [vmem:[%s868] sm:$0xff]
      %v870 = vld [vmem:[%s868 + $0x8] sm:$0xff]
      %v871 = vld [vmem:[%s868 + $0x10] sm:$0xff]
      %v872 = vld [vmem:[%s868 + $0x18] sm:$0xff]
      %v873 = vld [vmem:[%s868 + $0x20] sm:$0xff]
      %v874 = vld [vmem:[%s868 + $0x28] sm:$0xff]
      %v875 = vld [vmem:[%s868 + $0x30] sm:$0xff]
      %v876 = vld [vmem:[%s868 + $0x38] sm:$0xff]
      %v877 = vld [vmem:[%s868 + $0x40] sm:$0xff]
      %v878 = vld [vmem:[%s868 + $0x48] sm:$0xff]
      %v879 = vld [vmem:[%s868 + $0x50] sm:$0xff]
      %v880 = vld [vmem:[%s868 + $0x58] sm:$0xff]
      %v881 = vld [vmem:[%s868 + $0x60] sm:$0xff]
      %v882 = vld [vmem:[%s868 + $0x68] sm:$0xff]
      %vm883 = vcmask 1046528
      %v884 = vrot.slane %v747, 1
      %v885 = vrot.slane %v748, 1
      %v886 = vsel %vm883, %v884, %v885
      %v887 = vsel %vm764, %v886, 0
      %v889 = vsel %vm764, %v885, 0
      %891 = vmatprep.subr.mxu0 0.0
      %892 = vmatpush1.msra.mxu0 %v869
      %893 = vmatprep.subr.mxu0 0.0
      %894 = vmatpush1.msra.mxu0 %v870
      %895 = vmatprep.subr.mxu0 0.0
      %896 = vmatpush1.msra.mxu0 %v871
      %897 = vmatprep.subr.mxu0 0.0
      %898 = vmatpush1.msra.mxu0 %v872
      %899 = vmatprep.subr.mxu0 0.0
      %900 = vmatpush1.msra.mxu0 %v873
      %901 = vmatprep.subr.mxu0 0.0
      %902 = vmatpush1.msra.mxu0 %v874
      %903 = vmatprep.subr.mxu0 0.0
      %904 = vmatpush1.msra.mxu0 %v875
      %905 = vmatprep.subr.mxu0 0.0
      %906 = vmatpush1.msra.mxu0 %v876
      %907 = vmatprep.subr.mxu0 0.0
      %908 = vmatpush1.msra.mxu0 %v877
      %909 = vmatprep.subr.mxu0 0.0
      %910 = vmatpush1.msra.mxu0 %v878
      %911 = vmatprep.subr.mxu0 0.0
      %912 = vmatpush1.msra.mxu0 %v879
      %913 = vmatprep.subr.mxu0 0.0
      %914 = vmatpush1.msra.mxu0 %v880
      %915 = vmatprep.subr.mxu0 0.0
      %916 = vmatpush1.msra.mxu0 %v881
      %917 = vmatprep.subr.mxu0 0.0
      %918 = vmatpush1.msra.mxu0 %v882
      %919 = vmatprep.subr.mxu0 0.0
      %920 = vmatpush1.msra.mxu0 0.0
      %921 = vmatprep.subr.mxu0 0.0
      %922 = vmatpush1.msra.mxu0 0.0
      %923 = vmatprep.subr.mxu0 0.0
      %924 = vmatpush1.msra.mxu0 0.0
      %925 = vmatprep.subr.mxu0 0.0
      %926 = vmatpush1.msra.mxu0 0.0
      %927 = vmatprep.subr.mxu0 0.0
      %928 = vmatpush1.msra.mxu0 0.0
      %929 = vmatprep.subr.mxu0 0.0
      %930 = vmatpush1.msra.mxu0 0.0
      %931 = vmatprep.subr.mxu0 0.0
      %932 = vmatpush1.msra.mxu0 0.0
      %933 = vmatprep.subr.mxu0 0.0
      %934 = vmatpush1.msra.mxu0 0.0
      %935 = vmatprep.subr.mxu0 0.0
      %936 = vmatpush1.msra.mxu0 0.0
      %937 = vmatprep.subr.mxu0 0.0
      %938 = vmatpush1.msra.mxu0 0.0
      %939 = vmatprep.subr.mxu0 0.0
      %940 = vmatpush1.msra.mxu0 0.0
      %941 = vmatprep.subr.mxu0 0.0
      %942 = vmatpush1.msra.mxu0 0.0
      %943 = vmatprep.subr.mxu0 0.0
      %944 = vmatpush1.msra.mxu0 0.0
      %945 = vmatprep.subr.mxu0 0.0
      %946 = vmatpush1.msra.mxu0 0.0
      %947 = vmatprep.subr.mxu0 0.0
      %948 = vmatpush1.msra.mxu0 0.0
      %949 = vmatprep.subr.mxu0 0.0
      %950 = vmatpush1.msra.mxu0 0.0
      %951 = vmatprep.subr.mxu0 0.0
      %952 = vmatpush1.msra.mxu0 0.0
      %953 = vmatprep.subr.mxu0 0.0
      %954 = vmatpush1.msra.mxu0 0.0
      %955 = vmatprep.mubr.f32.mxu0 0.0
      %956 = vmatmul.mubr.f32.gmra.mrb[0].mxu0 %v887
      %v957 = vpop.f32.mrb[0].mxu0
      %v958 = vadd.f32 0.0, %v957
      %v959 = vpop.f32.mrb[0].mxu0
      %960 = vmatprep.mubr.f32.mxu0 0.0
      %961 = vmatmul.mubr.f32.gmra.mrb[0].mxu0 %v889
      %v962 = vpop.f32.mrb[0].mxu0
      %v963 = vadd.f32 0.0, %v962
      %v964 = vpop.f32.mrb[0].mxu0
      %965 = vdwg.mxu0
      %v966 = vadd.f32 %v852, %v958
      %v967 = vadd.f32 %v853, %v963
      %s968 = scalar_lea.vmem %s4, 112
      %v969 = vld [vmem:[%s968] sm:$0xff]
      %v970 = vld [vmem:[%s968 + $0x8] sm:$0xff]
      %v971 = vld [vmem:[%s968 + $0x10] sm:$0xff]
      %v972 = vld [vmem:[%s968 + $0x18] sm:$0xff]
      %v973 = vld [vmem:[%s968 + $0x20] sm:$0xff]
      %v974 = vld [vmem:[%s968 + $0x28] sm:$0xff]
      %v975 = vld [vmem:[%s968 + $0x30] sm:$0xff]
      %v976 = vld [vmem:[%s968 + $0x38] sm:$0xff]
      %v977 = vld [vmem:[%s968 + $0x40] sm:$0xff]
      %v978 = vld [vmem:[%s968 + $0x48] sm:$0xff]
      %v979 = vld [vmem:[%s968 + $0x50] sm:$0xff]
      %v980 = vld [vmem:[%s968 + $0x58] sm:$0xff]
      %v981 = vld [vmem:[%s968 + $0x60] sm:$0xff]
      %v982 = vld [vmem:[%s968 + $0x68] sm:$0xff]
      %983 = vmatprep.subr.mxu0 0.0
      %984 = vmatpush1.msra.mxu0 %v969
      %985 = vmatprep.subr.mxu0 0.0
      %986 = vmatpush1.msra.mxu0 %v970
      %987 = vmatprep.subr.mxu0 0.0
      %988 = vmatpush1.msra.mxu0 %v971
      %989 = vmatprep.subr.mxu0 0.0
      %990 = vmatpush1.msra.mxu0 %v972
      %991 = vmatprep.subr.mxu0 0.0
      %992 = vmatpush1.msra.mxu0 %v973
      %993 = vmatprep.subr.mxu0 0.0
      %994 = vmatpush1.msra.mxu0 %v974
      %995 = vmatprep.subr.mxu0 0.0
      %996 = vmatpush1.msra.mxu0 %v975
      %997 = vmatprep.subr.mxu0 0.0
      %998 = vmatpush1.msra.mxu0 %v976
      %999 = vmatprep.subr.mxu0 0.0
      %1000 = vmatpush1.msra.mxu0 %v977
      %1001 = vmatprep.subr.mxu0 0.0
      %1002 = vmatpush1.msra.mxu0 %v978
      %1003 = vmatprep.subr.mxu0 0.0
      %1004 = vmatpush1.msra.mxu0 %v979
      %1005 = vmatprep.subr.mxu0 0.0
      %1006 = vmatpush1.msra.mxu0 %v980
      %1007 = vmatprep.subr.mxu0 0.0
      %1008 = vmatpush1.msra.mxu0 %v981
      %1009 = vmatprep.subr.mxu0 0.0
      %1010 = vmatpush1.msra.mxu0 %v982
      %1011 = vmatprep.subr.mxu0 0.0
      %1012 = vmatpush1.msra.mxu0 0.0
      %1013 = vmatprep.subr.mxu0 0.0
      %1014 = vmatpush1.msra.mxu0 0.0
      %1015 = vmatprep.subr.mxu0 0.0
      %1016 = vmatpush1.msra.mxu0 0.0
      %1017 = vmatprep.subr.mxu0 0.0
      %1018 = vmatpush1.msra.mxu0 0.0
      %1019 = vmatprep.subr.mxu0 0.0
      %1020 = vmatpush1.msra.mxu0 0.0
      %1021 = vmatprep.subr.mxu0 0.0
      %1022 = vmatpush1.msra.mxu0 0.0
      %1023 = vmatprep.subr.mxu0 0.0
      %1024 = vmatpush1.msra.mxu0 0.0
      %1025 = vmatprep.subr.mxu0 0.0
      %1026 = vmatpush1.msra.mxu0 0.0
      %1027 = vmatprep.subr.mxu0 0.0
      %1028 = vmatpush1.msra.mxu0 0.0
      %1029 = vmatprep.subr.mxu0 0.0
      %1030 = vmatpush1.msra.mxu0 0.0
      %1031 = vmatprep.subr.mxu0 0.0
      %1032 = vmatpush1.msra.mxu0 0.0
      %1033 = vmatprep.subr.mxu0 0.0
      %1034 = vmatpush1.msra.mxu0 0.0
      %1035 = vmatprep.subr.mxu0 0.0
      %1036 = vmatpush1.msra.mxu0 0.0
      %1037 = vmatprep.subr.mxu0 0.0
      %1038 = vmatpush1.msra.mxu0 0.0
      %1039 = vmatprep.subr.mxu0 0.0
      %1040 = vmatpush1.msra.mxu0 0.0
      %1041 = vmatprep.subr.mxu0 0.0
      %1042 = vmatpush1.msra.mxu0 0.0
      %1043 = vmatprep.subr.mxu0 0.0
      %1044 = vmatpush1.msra.mxu0 0.0
      %1045 = vmatprep.subr.mxu0 0.0
      %1046 = vmatpush1.msra.mxu0 0.0
      %1047 = vmatprep.mubr.f32.mxu0 0.0
      %1048 = vmatmul.mubr.f32.gmra.mrb[0].mxu0 %v887
      %v1049 = vpop.f32.mrb[0].mxu0
      %v1050 = vadd.f32 0.0, %v1049
      %v1051 = vpop.f32.mrb[0].mxu0
      %1052 = vmatprep.mubr.f32.mxu0 0.0
      %1053 = vmatmul.mubr.f32.gmra.mrb[0].mxu0 %v889
      %v1054 = vpop.f32.mrb[0].mxu0
      %v1055 = vadd.f32 0.0, %v1054
      %v1056 = vpop.f32.mrb[0].mxu0
      %1057 = vdwg.mxu0
      %1058 = vmatprep.subr.mxu0 0.0
      %1059 = vmatpush1.msra.mxu0 %v854
      %1060 = vmatprep.subr.mxu0 0.0
      %1061 = vmatpush1.msra.mxu0 %v855
      %1062 = vmatprep.subr.mxu0 0.0
      %1063 = vmatpush1.msra.mxu0 %v856
      %1064 = vmatprep.subr.mxu0 0.0
      %1065 = vmatpush1.msra.mxu0 %v857
      %1066 = vmatprep.subr.mxu0 0.0
      %1067 = vmatpush1.msra.mxu0 %v858
      %1068 = vmatprep.subr.mxu0 0.0
      %1069 = vmatpush1.msra.mxu0 %v859
      %1070 = vmatprep.subr.mxu0 0.0
      %1071 = vmatpush1.msra.mxu0 %v860
      %1072 = vmatprep.subr.mxu0 0.0
      %1073 = vmatpush1.msra.mxu0 %v861
      %1074 = vmatprep.subr.mxu0 0.0
      %1075 = vmatpush1.msra.mxu0 %v862
      %1076 = vmatprep.subr.mxu0 0.0
      %1077 = vmatpush1.msra.mxu0 %v863
      %1078 = vmatprep.subr.mxu0 0.0
      %1079 = vmatpush1.msra.mxu0 %v864
      %1080 = vmatprep.subr.mxu0 0.0
      %1081 = vmatpush1.msra.mxu0 %v865
      %1082 = vmatprep.subr.mxu0 0.0
      %1083 = vmatpush1.msra.mxu0 %v866
      %1084 = vmatprep.subr.mxu0 0.0
      %1085 = vmatpush1.msra.mxu0 %v867
      %1086 = vmatprep.subr.mxu0 0.0
      %1087 = vmatpush1.msra.mxu0 0.0
      %1088 = vmatprep.subr.mxu0 0.0
      %1089 = vmatpush1.msra.mxu0 0.0
      %1090 = vmatprep.subr.mxu0 0.0
      %1091 = vmatpush1.msra.mxu0 0.0
      %1092 = vmatprep.subr.mxu0 0.0
      %1093 = vmatpush1.msra.mxu0 0.0
      %1094 = vmatprep.subr.mxu0 0.0
      %1095 = vmatpush1.msra.mxu0 0.0
      %1096 = vmatprep.subr.mxu0 0.0
      %1097 = vmatpush1.msra.mxu0 0.0
      %1098 = vmatprep.subr.mxu0 0.0
      %1099 = vmatpush1.msra.mxu0 0.0
      %1100 = vmatprep.subr.mxu0 0.0
      %1101 = vmatpush1.msra.mxu0 0.0
      %1102 = vmatprep.subr.mxu0 0.0
      %1103 = vmatpush1.msra.mxu0 0.0
      %1104 = vmatprep.subr.mxu0 0.0
      %1105 = vmatpush1.msra.mxu0 0.0
      %1106 = vmatprep.subr.mxu0 0.0
      %1107 = vmatpush1.msra.mxu0 0.0
      %1108 = vmatprep.subr.mxu0 0.0
      %1109 = vmatpush1.msra.mxu0 0.0
      %1110 = vmatprep.subr.mxu0 0.0
      %1111 = vmatpush1.msra.mxu0 0.0
      %1112 = vmatprep.subr.mxu0 0.0
      %1113 = vmatpush1.msra.mxu0 0.0
      %1114 = vmatprep.subr.mxu0 0.0
      %1115 = vmatpush1.msra.mxu0 0.0
      %1116 = vmatprep.subr.mxu0 0.0
      %1117 = vmatpush1.msra.mxu0 0.0
      %1118 = vmatprep.subr.mxu0 0.0
      %1119 = vmatpush1.msra.mxu0 0.0
      %1120 = vmatprep.subr.mxu0 0.0
      %1121 = vmatpush1.msra.mxu0 0.0
      %1122 = vmatprep.mubr.f32.mxu0 0.0
      %1123 = vmatmul.mubr.f32.gmra.mrb[0].mxu0 %v766
      %v1124 = vpop.f32.mrb[0].mxu0
      %v1125 = vadd.f32 %v1050, %v1124
      %v1126 = vpop.f32.mrb[0].mxu0
      %1127 = vmatprep.mubr.f32.mxu0 0.0
      %1128 = vmatmul.mubr.f32.gmra.mrb[0].mxu0 %v769
      %v1129 = vpop.f32.mrb[0].mxu0
      %v1130 = vadd.f32 %v1055, %v1129
      %v1131 = vpop.f32.mrb[0].mxu0
      %1132 = vdwg.mxu0
      %s1133 = scalar_lea.vmem %s3, 224
      %v1134 = vld [vmem:[%s1133] sm:$0xff]
      %v1135 = vld [vmem:[%s1133 + $0x8] sm:$0xff]
      %v1136 = vld [vmem:[%s1133 + $0x10] sm:$0xff]
      %v1137 = vld [vmem:[%s1133 + $0x18] sm:$0xff]
      %v1138 = vld [vmem:[%s1133 + $0x20] sm:$0xff]
      %v1139 = vld [vmem:[%s1133 + $0x28] sm:$0xff]
      %v1140 = vld [vmem:[%s1133 + $0x30] sm:$0xff]
      %v1141 = vld [vmem:[%s1133 + $0x38] sm:$0xff]
      %v1142 = vld [vmem:[%s1133 + $0x40] sm:$0xff]
      %v1143 = vld [vmem:[%s1133 + $0x48] sm:$0xff]
      %v1144 = vld [vmem:[%s1133 + $0x50] sm:$0xff]
      %v1145 = vld [vmem:[%s1133 + $0x58] sm:$0xff]
      %v1146 = vld [vmem:[%s1133 + $0x60] sm:$0xff]
      %v1147 = vld [vmem:[%s1133 + $0x68] sm:$0xff]
      %vm1148 = vcmask 1045504
      %v1149 = vrot.slane %v747, 2
      %v1150 = vrot.slane %v748, 2
      %v1151 = vsel %vm1148, %v1149, %v1150
      %v1152 = vsel %vm764, %v1151, 0
      %v1154 = vsel %vm764, %v1150, 0
      %1156 = vmatprep.subr.mxu0 0.0
      %1157 = vmatpush1.msra.mxu0 %v1134
      %1158 = vmatprep.subr.mxu0 0.0
      %1159 = vmatpush1.msra.mxu0 %v1135
      %1160 = vmatprep.subr.mxu0 0.0
      %1161 = vmatpush1.msra.mxu0 %v1136
      %1162 = vmatprep.subr.mxu0 0.0
      %1163 = vmatpush1.msra.mxu0 %v1137
      %1164 = vmatprep.subr.mxu0 0.0
      %1165 = vmatpush1.msra.mxu0 %v1138
      %1166 = vmatprep.subr.mxu0 0.0
      %1167 = vmatpush1.msra.mxu0 %v1139
      %1168 = vmatprep.subr.mxu0 0.0
      %1169 = vmatpush1.msra.mxu0 %v1140
      %1170 = vmatprep.subr.mxu0 0.0
      %1171 = vmatpush1.msra.mxu0 %v1141
      %1172 = vmatprep.subr.mxu0 0.0
      %1173 = vmatpush1.msra.mxu0 %v1142
      %1174 = vmatprep.subr.mxu0 0.0
      %1175 = vmatpush1.msra.mxu0 %v1143
      %1176 = vmatprep.subr.mxu0 0.0
      %1177 = vmatpush1.msra.mxu0 %v1144
      %1178 = vmatprep.subr.mxu0 0.0
      %1179 = vmatpush1.msra.mxu0 %v1145
      %1180 = vmatprep.subr.mxu0 0.0
      %1181 = vmatpush1.msra.mxu0 %v1146
      %1182 = vmatprep.subr.mxu0 0.0
      %1183 = vmatpush1.msra.mxu0 %v1147
      %1184 = vmatprep.subr.mxu0 0.0
      %1185 = vmatpush1.msra.mxu0 0.0
      %1186 = vmatprep.subr.mxu0 0.0
      %1187 = vmatpush1.msra.mxu0 0.0
      %1188 = vmatprep.subr.mxu0 0.0
      %1189 = vmatpush1.msra.mxu0 0.0
      %1190 = vmatprep.subr.mxu0 0.0
      %1191 = vmatpush1.msra.mxu0 0.0
      %1192 = vmatprep.subr.mxu0 0.0
      %1193 = vmatpush1.msra.mxu0 0.0
      %1194 = vmatprep.subr.mxu0 0.0
      %1195 = vmatpush1.msra.mxu0 0.0
      %1196 = vmatprep.subr.mxu0 0.0
      %1197 = vmatpush1.msra.mxu0 0.0
      %1198 = vmatprep.subr.mxu0 0.0
      %1199 = vmatpush1.msra.mxu0 0.0
      %1200 = vmatprep.subr.mxu0 0.0
      %1201 = vmatpush1.msra.mxu0 0.0
      %1202 = vmatprep.subr.mxu0 0.0
      %1203 = vmatpush1.msra.mxu0 0.0
      %1204 = vmatprep.subr.mxu0 0.0
      %1205 = vmatpush1.msra.mxu0 0.0
      %1206 = vmatprep.subr.mxu0 0.0
      %1207 = vmatpush1.msra.mxu0 0.0
      %1208 = vmatprep.subr.mxu0 0.0
      %1209 = vmatpush1.msra.mxu0 0.0
      %1210 = vmatprep.subr.mxu0 0.0
      %1211 = vmatpush1.msra.mxu0 0.0
      %1212 = vmatprep.subr.mxu0 0.0
      %1213 = vmatpush1.msra.mxu0 0.0
      %1214 = vmatprep.subr.mxu0 0.0
      %1215 = vmatpush1.msra.mxu0 0.0
      %1216 = vmatprep.subr.mxu0 0.0
      %1217 = vmatpush1.msra.mxu0 0.0
      %1218 = vmatprep.subr.mxu0 0.0
      %1219 = vmatpush1.msra.mxu0 0.0
      %1220 = vmatprep.mubr.f32.mxu0 0.0
      %1221 = vmatmul.mubr.f32.gmra.mrb[0].mxu0 %v1152
      %v1222 = vpop.f32.mrb[0].mxu0
      %v1223 = vadd.f32 0.0, %v1222
      %v1224 = vpop.f32.mrb[0].mxu0
      %1225 = vmatprep.mubr.f32.mxu0 0.0
      %1226 = vmatmul.mubr.f32.gmra.mrb[0].mxu0 %v1154
      %v1227 = vpop.f32.mrb[0].mxu0
      %v1228 = vadd.f32 0.0, %v1227
      %v1229 = vpop.f32.mrb[0].mxu0
      %1230 = vdwg.mxu0
      %v1231 = vadd.f32 %v966, %v1223
      %v1232 = vadd.f32 %v967, %v1228
      %s1233 = scalar_lea.vmem %s4, 224
      %v1234 = vld [vmem:[%s1233] sm:$0xff]
      %v1235 = vld [vmem:[%s1233 + $0x8] sm:$0xff]
      %v1236 = vld [vmem:[%s1233 + $0x10] sm:$0xff]
      %v1237 = vld [vmem:[%s1233 + $0x18] sm:$0xff]
      %v1238 = vld [vmem:[%s1233 + $0x20] sm:$0xff]
      %v1239 = vld [vmem:[%s1233 + $0x28] sm:$0xff]
      %v1240 = vld [vmem:[%s1233 + $0x30] sm:$0xff]
      %v1241 = vld [vmem:[%s1233 + $0x38] sm:$0xff]
      %v1242 = vld [vmem:[%s1233 + $0x40] sm:$0xff]
      %v1243 = vld [vmem:[%s1233 + $0x48] sm:$0xff]
      %v1244 = vld [vmem:[%s1233 + $0x50] sm:$0xff]
      %v1245 = vld [vmem:[%s1233 + $0x58] sm:$0xff]
      %v1246 = vld [vmem:[%s1233 + $0x60] sm:$0xff]
      %v1247 = vld [vmem:[%s1233 + $0x68] sm:$0xff]
      %1248 = vmatprep.subr.mxu0 0.0
      %1249 = vmatpush1.msra.mxu0 %v1234
      %1250 = vmatprep.subr.mxu0 0.0
      %1251 = vmatpush1.msra.mxu0 %v1235
      %1252 = vmatprep.subr.mxu0 0.0
      %1253 = vmatpush1.msra.mxu0 %v1236
      %1254 = vmatprep.subr.mxu0 0.0
      %1255 = vmatpush1.msra.mxu0 %v1237
      %1256 = vmatprep.subr.mxu0 0.0
      %1257 = vmatpush1.msra.mxu0 %v1238
      %1258 = vmatprep.subr.mxu0 0.0
      %1259 = vmatpush1.msra.mxu0 %v1239
      %1260 = vmatprep.subr.mxu0 0.0
      %1261 = vmatpush1.msra.mxu0 %v1240
      %1262 = vmatprep.subr.mxu0 0.0
      %1263 = vmatpush1.msra.mxu0 %v1241
      %1264 = vmatprep.subr.mxu0 0.0
      %1265 = vmatpush1.msra.mxu0 %v1242
      %1266 = vmatprep.subr.mxu0 0.0
      %1267 = vmatpush1.msra.mxu0 %v1243
      %1268 = vmatprep.subr.mxu0 0.0
      %1269 = vmatpush1.msra.mxu0 %v1244
      %1270 = vmatprep.subr.mxu0 0.0
      %1271 = vmatpush1.msra.mxu0 %v1245
      %1272 = vmatprep.subr.mxu0 0.0
      %1273 = vmatpush1.msra.mxu0 %v1246
      %1274 = vmatprep.subr.mxu0 0.0
      %1275 = vmatpush1.msra.mxu0 %v1247
      %1276 = vmatprep.subr.mxu0 0.0
      %1277 = vmatpush1.msra.mxu0 0.0
      %1278 = vmatprep.subr.mxu0 0.0
      %1279 = vmatpush1.msra.mxu0 0.0
      %1280 = vmatprep.subr.mxu0 0.0
      %1281 = vmatpush1.msra.mxu0 0.0
      %1282 = vmatprep.subr.mxu0 0.0
      %1283 = vmatpush1.msra.mxu0 0.0
      %1284 = vmatprep.subr.mxu0 0.0
      %1285 = vmatpush1.msra.mxu0 0.0
      %1286 = vmatprep.subr.mxu0 0.0
      %1287 = vmatpush1.msra.mxu0 0.0
      %1288 = vmatprep.subr.mxu0 0.0
      %1289 = vmatpush1.msra.mxu0 0.0
      %1290 = vmatprep.subr.mxu0 0.0
      %1291 = vmatpush1.msra.mxu0 0.0
      %1292 = vmatprep.subr.mxu0 0.0
      %1293 = vmatpush1.msra.mxu0 0.0
      %1294 = vmatprep.subr.mxu0 0.0
      %1295 = vmatpush1.msra.mxu0 0.0
      %1296 = vmatprep.subr.mxu0 0.0
      %1297 = vmatpush1.msra.mxu0 0.0
      %1298 = vmatprep.subr.mxu0 0.0
      %1299 = vmatpush1.msra.mxu0 0.0
      %1300 = vmatprep.subr.mxu0 0.0
      %1301 = vmatpush1.msra.mxu0 0.0
      %1302 = vmatprep.subr.mxu0 0.0
      %1303 = vmatpush1.msra.mxu0 0.0
      %1304 = vmatprep.subr.mxu0 0.0
      %1305 = vmatpush1.msra.mxu0 0.0
      %1306 = vmatprep.subr.mxu0 0.0
      %1307 = vmatpush1.msra.mxu0 0.0
      %1308 = vmatprep.subr.mxu0 0.0
      %1309 = vmatpush1.msra.mxu0 0.0
      %1310 = vmatprep.subr.mxu0 0.0
      %1311 = vmatpush1.msra.mxu0 0.0
      %1312 = vmatprep.mubr.f32.mxu0 0.0
      %1313 = vmatmul.mubr.f32.gmra.mrb[0].mxu0 %v1152
      %v1314 = vpop.f32.mrb[0].mxu0
      %v1315 = vadd.f32 0.0, %v1314
      %v1316 = vpop.f32.mrb[0].mxu0
      %1317 = vmatprep.mubr.f32.mxu0 0.0
      %1318 = vmatmul.mubr.f32.gmra.mrb[0].mxu0 %v1154
      %v1319 = vpop.f32.mrb[0].mxu0
      %v1320 = vadd.f32 0.0, %v1319
      %v1321 = vpop.f32.mrb[0].mxu0
      %1322 = vdwg.mxu0
      %v1323 = vadd.f32 %v1125, %v1315
      %v1324 = vadd.f32 %v1130, %v1320
      %v1325 = vmax.f32 %v1231, 0.0
      %v1326 = vmax.f32 %v1232, 0.0
      %v1327 = vld [vmem:[%s8] sm:$0xff]
      %v1328 = vld [vmem:[%s8 + $0x8] sm:$0xff]
      %v1329 = vld [vmem:[%s8 + $0x10] sm:$0xff]
      %v1330 = vld [vmem:[%s8 + $0x18] sm:$0xf]
      %v1331 = vld [vmem:[%s8 + $0x20] sm:$0xf]
      %v1332 = vld [vmem:[%s8 + $0x28] sm:$0xf]
      %v1333 = vld [vmem:[%s6] sm:$0xff]
      %v1334 = vld [vmem:[%s6 + $0x8] sm:$0xff]
      %v1335 = vld [vmem:[%s6 + $0x10] sm:$0xff]
      %v1336 = vld [vmem:[%s6 + $0x18] sm:$0xff]
      %v1337 = vld [vmem:[%s6 + $0x20] sm:$0xff]
      %v1338 = vld [vmem:[%s6 + $0x28] sm:$0xff]
      %v1339 = vld [vmem:[%s6 + $0x30] sm:$0xff]
      %v1340 = vld [vmem:[%s6 + $0x38] sm:$0xff]
      %v1341 = vld [vmem:[%s6 + $0x40] sm:$0xff]
      %v1342 = vld [vmem:[%s6 + $0x48] sm:$0xff]
      %v1343 = vld [vmem:[%s6 + $0x50] sm:$0xff]
      %v1344 = vld [vmem:[%s6 + $0x58] sm:$0xff]
      %v1345 = vld [vmem:[%s6 + $0x60] sm:$0xff]
      %v1346 = vld [vmem:[%s6 + $0x68] sm:$0xff]
      %v1347 = vld [vmem:[%s6 + $0x70] sm:$0xff]
      %v1348 = vld [vmem:[%s6 + $0x78] sm:$0xff]
      %v1349 = vld [vmem:[%s6 + $0x80] sm:$0xff]
      %v1350 = vld [vmem:[%s6 + $0x88] sm:$0xff]
      %v1351 = vld [vmem:[%s6 + $0x90] sm:$0xff]
      %v1352 = vld [vmem:[%s6 + $0x98] sm:$0xff]
      %v1353 = vld [vmem:[%s6 + $0xa0] sm:$0xff]
      %v1354 = vld [vmem:[%s6 + $0xa8] sm:$0xff]
      %v1355 = vld [vmem:[%s6 + $0xb0] sm:$0xff]
      %v1356 = vld [vmem:[%s6 + $0xb8] sm:$0xff]
      %v1357 = vld [vmem:[%s6 + $0xc0] sm:$0xff]
      %v1358 = vld [vmem:[%s6 + $0xc8] sm:$0xff]
      %v1359 = vld [vmem:[%s6 + $0xd0] sm:$0xff]
      %v1360 = vld [vmem:[%s6 + $0xd8] sm:$0xff]
      %v1361 = vld [vmem:[%s6 + $0xe0] sm:$0xff]
      %v1362 = vld [vmem:[%s6 + $0xe8] sm:$0xff]
      %v1363 = vld [vmem:[%s6 + $0xf0] sm:$0xff]
      %v1364 = vld [vmem:[%s6 + $0xf8] sm:$0xff]
      %v1365 = vld [vmem:[%s6 + $0x100] sm:$0xff]
      %v1366 = vld [vmem:[%s6 + $0x108] sm:$0xff]
      %v1367 = vld [vmem:[%s6 + $0x110] sm:$0xff]
      %v1368 = vld [vmem:[%s6 + $0x118] sm:$0xff]
      %v1369 = vld [vmem:[%s6 + $0x120] sm:$0xff]
      %v1370 = vld [vmem:[%s6 + $0x128] sm:$0xff]
      %v1371 = vld [vmem:[%s6 + $0x130] sm:$0xff]
      %v1372 = vld [vmem:[%s6 + $0x138] sm:$0xff]
      %v1373 = vld [vmem:[%s6 + $0x140] sm:$0xff]
      %v1374 = vld [vmem:[%s6 + $0x148] sm:$0xff]
      %v1375 = vld [vmem:[%s6 + $0x150] sm:$0xff]
      %v1376 = vld [vmem:[%s6 + $0x158] sm:$0xff]
      %v1377 = vld [vmem:[%s6 + $0x160] sm:$0xff]
      %v1378 = vld [vmem:[%s6 + $0x168] sm:$0xff]
      %v1379 = vld [vmem:[%s6 + $0x170] sm:$0xff]
      %v1380 = vld [vmem:[%s6 + $0x178] sm:$0xff]
      %vm1381 = vcmask 785408
      %v1383 = vsel %vm1381, %v1325, 0
      %v1386 = vsel %vm1381, %v1326, 0
      %v1389 = vsel %vm1381, %v1333, 0
      %v1392 = vsel %vm1381, %v1334, 0
      %v1395 = vsel %vm1381, %v1335, 0
      %v1398 = vsel %vm1381, %v1336, 0
      %v1401 = vsel %vm1381, %v1337, 0
      %v1404 = vsel %vm1381, %v1338, 0
      %v1407 = vsel %vm1381, %v1339, 0
      %v1410 = vsel %vm1381, %v1340, 0
      %v1413 = vsel %vm1381, %v1341, 0
      %v1416 = vsel %vm1381, %v1342, 0
      %v1419 = vsel %vm1381, %v1343, 0
      %v1422 = vsel %vm1381, %v1344, 0
      %v1425 = vsel %vm1381, %v1345, 0
      %v1428 = vsel %vm1381, %v1346, 0
      %v1431 = vsel %vm1381, %v1347, 0
      %v1434 = vsel %vm1381, %v1348, 0
      %v1437 = vsel %vm1381, %v1349, 0
      %v1440 = vsel %vm1381, %v1350, 0
      %v1443 = vsel %vm1381, %v1351, 0
      %v1446 = vsel %vm1381, %v1352, 0
      %v1449 = vsel %vm1381, %v1353, 0
      %v1452 = vsel %vm1381, %v1354, 0
      %v1455 = vsel %vm1381, %v1355, 0
      %v1458 = vsel %vm1381, %v1356, 0
      %v1461 = vsel %vm1381, %v1357, 0
      %v1464 = vsel %vm1381, %v1358, 0
      %v1467 = vsel %vm1381, %v1359, 0
      %v1470 = vsel %vm1381, %v1360, 0
      %v1473 = vsel %vm1381, %v1361, 0
      %v1476 = vsel %vm1381, %v1362, 0
      %v1479 = vsel %vm1381, %v1363, 0
      %v1482 = vsel %vm1381, %v1364, 0
      %v1485 = vsel %vm1381, %v1365, 0
      %v1488 = vsel %vm1381, %v1366, 0
      %v1491 = vsel %vm1381, %v1367, 0
      %v1494 = vsel %vm1381, %v1368, 0
      %v1497 = vsel %vm1381, %v1369, 0
      %v1500 = vsel %vm1381, %v1370, 0
      %v1503 = vsel %vm1381, %v1371, 0
      %v1506 = vsel %vm1381, %v1372, 0
      %v1509 = vsel %vm1381, %v1373, 0
      %v1512 = vsel %vm1381, %v1374, 0
      %v1515 = vsel %vm1381, %v1375, 0
      %v1518 = vsel %vm1381, %v1376, 0
      %v1521 = vsel %vm1381, %v1377, 0
      %v1524 = vsel %vm1381, %v1378, 0
      %v1527 = vsel %vm1381, %v1379, 0
      %v1530 = vsel %vm1381, %v1380, 0
      %1532 = vmatprep.subr.mxu0 0.0
      %1533 = vmatpush1.xpose.msra.mxu0 %v1389
      %1534 = vmatprep.subr.mxu0 0.0
      %1535 = vmatpush1.xpose.msra.mxu0 %v1392
      %1536 = vmatprep.subr.mxu0 0.0
      %1537 = vmatpush1.xpose.msra.mxu0 %v1395
      %1538 = vmatprep.subr.mxu0 0.0
      %1539 = vmatpush1.xpose.msra.mxu0 %v1398
      %1540 = vmatprep.subr.mxu0 0.0
      %1541 = vmatpush1.xpose.msra.mxu0 %v1401
      %1542 = vmatprep.subr.mxu0 0.0
      %1543 = vmatpush1.xpose.msra.mxu0 %v1404
      %1544 = vmatprep.subr.mxu0 0.0
      %1545 = vmatpush1.xpose.msra.mxu0 %v1407
      %1546 = vmatprep.subr.mxu0 0.0
      %1547 = vmatpush1.xpose.msra.mxu0 %v1410
      %1548 = vmatprep.subr.mxu0 0.0
      %1549 = vmatpush1.xpose.msra.mxu0 %v1413
      %1550 = vmatprep.subr.mxu0 0.0
      %1551 = vmatpush1.xpose.msra.mxu0 %v1416
      %1552 = vmatprep.subr.mxu0 0.0
      %1553 = vmatpush1.xpose.msra.mxu0 %v1419
      %1554 = vmatprep.subr.mxu0 0.0
      %1555 = vmatpush1.xpose.msra.mxu0 %v1422
      %1556 = vmatprep.subr.mxu0 0.0
      %1557 = vmatpush1.xpose.msra.mxu0 %v1425
      %1558 = vmatprep.subr.mxu0 0.0
      %1559 = vmatpush1.xpose.msra.mxu0 %v1428
      %1560 = vmatprep.subr.mxu0 0.0
      %1561 = vmatpush1.xpose.msra.mxu0 %v1431
      %1562 = vmatprep.subr.mxu0 0.0
      %1563 = vmatpush1.xpose.msra.mxu0 %v1434
      %1564 = vmatprep.subr.mxu0 0.0
      %1565 = vmatpush1.xpose.msra.mxu0 %v1437
      %1566 = vmatprep.subr.mxu0 0.0
      %1567 = vmatpush1.xpose.msra.mxu0 %v1440
      %1568 = vmatprep.subr.mxu0 0.0
      %1569 = vmatpush1.xpose.msra.mxu0 %v1443
      %1570 = vmatprep.subr.mxu0 0.0
      %1571 = vmatpush1.xpose.msra.mxu0 %v1446
      %1572 = vmatprep.subr.mxu0 0.0
      %1573 = vmatpush1.xpose.msra.mxu0 %v1449
      %1574 = vmatprep.subr.mxu0 0.0
      %1575 = vmatpush1.xpose.msra.mxu0 %v1452
      %1576 = vmatprep.subr.mxu0 0.0
      %1577 = vmatpush1.xpose.msra.mxu0 %v1455
      %1578 = vmatprep.subr.mxu0 0.0
      %1579 = vmatpush1.xpose.msra.mxu0 %v1458
      %1580 = vmatprep.subr.mxu0 0.0
      %1581 = vmatpush1.xpose.msra.mxu0 %v1461
      %1582 = vmatprep.subr.mxu0 0.0
      %1583 = vmatpush1.xpose.msra.mxu0 %v1464
      %1584 = vmatprep.subr.mxu0 0.0
      %1585 = vmatpush1.xpose.msra.mxu0 %v1467
      %1586 = vmatprep.subr.mxu0 0.0
      %1587 = vmatpush1.xpose.msra.mxu0 %v1470
      %1588 = vmatprep.subr.mxu0 0.0
      %1589 = vmatpush1.xpose.msra.mxu0 %v1473
      %1590 = vmatprep.subr.mxu0 0.0
      %1591 = vmatpush1.xpose.msra.mxu0 %v1476
      %1592 = vmatprep.subr.mxu0 0.0
      %1593 = vmatpush1.xpose.msra.mxu0 %v1479
      %1594 = vmatprep.subr.mxu0 0.0
      %1595 = vmatpush1.xpose.msra.mxu0 %v1482
      %1596 = vmatprep.mubr.f32.mxu0 0.0
      %1597 = vmatmul.mubr.f32.gmra.mrb[0].mxu0 %v1383
      %v1598 = vpop.f32.mrb[0].mxu0
      %v1599 = vadd.f32 0.0, %v1598
      %v1600 = vpop.f32.mrb[0].mxu0
      %v1601 = vadd.f32 0.0, %v1600
      %1602 = vmatprep.mubr.f32.mxu0 0.0
      %1603 = vmatmul.mubr.f32.gmra.mrb[0].mxu0 %v1386
      %v1604 = vpop.f32.mrb[0].mxu0
      %v1605 = vadd.f32 0.0, %v1604
      %v1606 = vpop.f32.mrb[0].mxu0
      %v1607 = vadd.f32 0.0, %v1606
      %1608 = vdwg.mxu0
      %1609 = vmatprep.subr.mxu0 0.0
      %1610 = vmatpush1.xpose.msra.mxu0 %v1485
      %1611 = vmatprep.subr.mxu0 0.0
      %1612 = vmatpush1.xpose.msra.mxu0 %v1488
      %1613 = vmatprep.subr.mxu0 0.0
      %1614 = vmatpush1.xpose.msra.mxu0 %v1491
      %1615 = vmatprep.subr.mxu0 0.0
      %1616 = vmatpush1.xpose.msra.mxu0 %v1494
      %1617 = vmatprep.subr.mxu0 0.0
      %1618 = vmatpush1.xpose.msra.mxu0 %v1497
      %1619 = vmatprep.subr.mxu0 0.0
      %1620 = vmatpush1.xpose.msra.mxu0 %v1500
      %1621 = vmatprep.subr.mxu0 0.0
      %1622 = vmatpush1.xpose.msra.mxu0 %v1503
      %1623 = vmatprep.subr.mxu0 0.0
      %1624 = vmatpush1.xpose.msra.mxu0 %v1506
      %1625 = vmatprep.subr.mxu0 0.0
      %1626 = vmatpush1.xpose.msra.mxu0 %v1509
      %1627 = vmatprep.subr.mxu0 0.0
      %1628 = vmatpush1.xpose.msra.mxu0 %v1512
      %1629 = vmatprep.subr.mxu0 0.0
      %1630 = vmatpush1.xpose.msra.mxu0 %v1515
      %1631 = vmatprep.subr.mxu0 0.0
      %1632 = vmatpush1.xpose.msra.mxu0 %v1518
      %1633 = vmatprep.subr.mxu0 0.0
      %1634 = vmatpush1.xpose.msra.mxu0 %v1521
      %1635 = vmatprep.subr.mxu0 0.0
      %1636 = vmatpush1.xpose.msra.mxu0 %v1524
      %1637 = vmatprep.subr.mxu0 0.0
      %1638 = vmatpush1.xpose.msra.mxu0 %v1527
      %1639 = vmatprep.subr.mxu0 0.0
      %1640 = vmatpush1.xpose.msra.mxu0 %v1530
      %1641 = vmatprep.subr.mxu0 0.0
      %1642 = vmatpush1.xpose.msra.mxu0 0.0
      %1643 = vmatprep.subr.mxu0 0.0
      %1644 = vmatpush1.xpose.msra.mxu0 0.0
      %1645 = vmatprep.subr.mxu0 0.0
      %1646 = vmatpush1.xpose.msra.mxu0 0.0
      %1647 = vmatprep.subr.mxu0 0.0
      %1648 = vmatpush1.xpose.msra.mxu0 0.0
      %1649 = vmatprep.subr.mxu0 0.0
      %1650 = vmatpush1.xpose.msra.mxu0 0.0
      %1651 = vmatprep.subr.mxu0 0.0
      %1652 = vmatpush1.xpose.msra.mxu0 0.0
      %1653 = vmatprep.subr.mxu0 0.0
      %1654 = vmatpush1.xpose.msra.mxu0 0.0
      %1655 = vmatprep.subr.mxu0 0.0
      %1656 = vmatpush1.xpose.msra.mxu0 0.0
      %1657 = vmatprep.subr.mxu0 0.0
      %1658 = vmatpush1.xpose.msra.mxu0 0.0
      %1659 = vmatprep.subr.mxu0 0.0
      %1660 = vmatpush1.xpose.msra.mxu0 0.0
      %1661 = vmatprep.subr.mxu0 0.0
      %1662 = vmatpush1.xpose.msra.mxu0 0.0
      %1663 = vmatprep.subr.mxu0 0.0
      %1664 = vmatpush1.xpose.msra.mxu0 0.0
      %1665 = vmatprep.subr.mxu0 0.0
      %1666 = vmatpush1.xpose.msra.mxu0 0.0
      %1667 = vmatprep.subr.mxu0 0.0
      %1668 = vmatpush1.xpose.msra.mxu0 0.0
      %1669 = vmatprep.subr.mxu0 0.0
      %1670 = vmatpush1.xpose.msra.mxu0 0.0
      %1671 = vmatprep.subr.mxu0 0.0
      %1672 = vmatpush1.xpose.msra.mxu0 0.0
      %1673 = vmatprep.mubr.f32.mxu0 0.0
      %1674 = vmatmul.mubr.f32.gmra.mrb[0].mxu0 %v1383
      %v1675 = vpop.f32.mrb[0].mxu0
      %v1676 = vadd.f32 0.0, %v1675
      %v1677 = vpop.f32.mrb[0].mxu0
      %1678 = vmatprep.mubr.f32.mxu0 0.0
      %1679 = vmatmul.mubr.f32.gmra.mrb[0].mxu0 %v1386
      %v1680 = vpop.f32.mrb[0].mxu0
      %v1681 = vadd.f32 0.0, %v1680
      %v1682 = vpop.f32.mrb[0].mxu0
      %1683 = vdwg.mxu0
      %v1684 = vld [vmem:[%s7] sm:$0xff]
      %v1685 = vld [vmem:[%s7 + $0x8] sm:$0xff]
      %v1686 = vld [vmem:[%s7 + $0x10] sm:$0xff]
      %v1687 = vld [vmem:[%s7 + $0x18] sm:$0xff]
      %v1688 = vld [vmem:[%s7 + $0x20] sm:$0xff]
      %v1689 = vld [vmem:[%s7 + $0x28] sm:$0xff]
      %v1690 = vld [vmem:[%s7 + $0x30] sm:$0xff]
      %v1691 = vld [vmem:[%s7 + $0x38] sm:$0xff]
      %v1692 = vld [vmem:[%s7 + $0x40] sm:$0xff]
      %v1693 = vld [vmem:[%s7 + $0x48] sm:$0xff]
      %v1694 = vld [vmem:[%s7 + $0x50] sm:$0xff]
      %v1695 = vld [vmem:[%s7 + $0x58] sm:$0xff]
      %v1696 = vld [vmem:[%s7 + $0x60] sm:$0xff]
      %v1697 = vld [vmem:[%s7 + $0x68] sm:$0xff]
      %v1698 = vld [vmem:[%s7 + $0x70] sm:$0xff]
      %v1699 = vld [vmem:[%s7 + $0x78] sm:$0xff]
      %v1700 = vld [vmem:[%s7 + $0x80] sm:$0xff]
      %v1701 = vld [vmem:[%s7 + $0x88] sm:$0xff]
      %v1702 = vld [vmem:[%s7 + $0x90] sm:$0xff]
      %v1703 = vld [vmem:[%s7 + $0x98] sm:$0xff]
      %v1704 = vld [vmem:[%s7 + $0xa0] sm:$0xff]
      %v1705 = vld [vmem:[%s7 + $0xa8] sm:$0xff]
      %v1706 = vld [vmem:[%s7 + $0xb0] sm:$0xff]
      %v1707 = vld [vmem:[%s7 + $0xb8] sm:$0xff]
      %v1708 = vld [vmem:[%s7 + $0xc0] sm:$0xff]
      %v1709 = vld [vmem:[%s7 + $0xc8] sm:$0xff]
      %v1710 = vld [vmem:[%s7 + $0xd0] sm:$0xff]
      %v1711 = vld [vmem:[%s7 + $0xd8] sm:$0xff]
      %v1712 = vld [vmem:[%s7 + $0xe0] sm:$0xff]
      %v1713 = vld [vmem:[%s7 + $0xe8] sm:$0xff]
      %v1714 = vld [vmem:[%s7 + $0xf0] sm:$0xff]
      %v1715 = vld [vmem:[%s7 + $0xf8] sm:$0xff]
      %v1716 = vld [vmem:[%s7 + $0x100] sm:$0xff]
      %v1717 = vld [vmem:[%s7 + $0x108] sm:$0xff]
      %v1718 = vld [vmem:[%s7 + $0x110] sm:$0xff]
      %v1719 = vld [vmem:[%s7 + $0x118] sm:$0xff]
      %v1720 = vld [vmem:[%s7 + $0x120] sm:$0xff]
      %v1721 = vld [vmem:[%s7 + $0x128] sm:$0xff]
      %v1722 = vld [vmem:[%s7 + $0x130] sm:$0xff]
      %v1723 = vld [vmem:[%s7 + $0x138] sm:$0xff]
      %v1724 = vld [vmem:[%s7 + $0x140] sm:$0xff]
      %v1725 = vld [vmem:[%s7 + $0x148] sm:$0xff]
      %v1726 = vld [vmem:[%s7 + $0x150] sm:$0xff]
      %v1727 = vld [vmem:[%s7 + $0x158] sm:$0xff]
      %v1728 = vld [vmem:[%s7 + $0x160] sm:$0xff]
      %v1729 = vld [vmem:[%s7 + $0x168] sm:$0xff]
      %v1730 = vld [vmem:[%s7 + $0x170] sm:$0xff]
      %v1731 = vld [vmem:[%s7 + $0x178] sm:$0xff]
      %v1733 = vsel %vm1381, %v1684, 0
      %v1736 = vsel %vm1381, %v1685, 0
      %v1739 = vsel %vm1381, %v1686, 0
      %v1742 = vsel %vm1381, %v1687, 0
      %v1745 = vsel %vm1381, %v1688, 0
      %v1748 = vsel %vm1381, %v1689, 0
      %v1751 = vsel %vm1381, %v1690, 0
      %v1754 = vsel %vm1381, %v1691, 0
      %v1757 = vsel %vm1381, %v1692, 0
      %v1760 = vsel %vm1381, %v1693, 0
      %v1763 = vsel %vm1381, %v1694, 0
      %v1766 = vsel %vm1381, %v1695, 0
      %v1769 = vsel %vm1381, %v1696, 0
      %v1772 = vsel %vm1381, %v1697, 0
      %v1775 = vsel %vm1381, %v1698, 0
      %v1778 = vsel %vm1381, %v1699, 0
      %v1781 = vsel %vm1381, %v1700, 0
      %v1784 = vsel %vm1381, %v1701, 0
      %v1787 = vsel %vm1381, %v1702, 0
      %v1790 = vsel %vm1381, %v1703, 0
      %v1793 = vsel %vm1381, %v1704, 0
      %v1796 = vsel %vm1381, %v1705, 0
      %v1799 = vsel %vm1381, %v1706, 0
      %v1802 = vsel %vm1381, %v1707, 0
      %v1805 = vsel %vm1381, %v1708, 0
      %v1808 = vsel %vm1381, %v1709, 0
      %v1811 = vsel %vm1381, %v1710, 0
      %v1814 = vsel %vm1381, %v1711, 0
      %v1817 = vsel %vm1381, %v1712, 0
      %v1820 = vsel %vm1381, %v1713, 0
      %v1823 = vsel %vm1381, %v1714, 0
      %v1826 = vsel %vm1381, %v1715, 0
      %v1829 = vsel %vm1381, %v1716, 0
      %v1832 = vsel %vm1381, %v1717, 0
      %v1835 = vsel %vm1381, %v1718, 0
      %v1838 = vsel %vm1381, %v1719, 0
      %v1841 = vsel %vm1381, %v1720, 0
      %v1844 = vsel %vm1381, %v1721, 0
      %v1847 = vsel %vm1381, %v1722, 0
      %v1850 = vsel %vm1381, %v1723, 0
      %v1853 = vsel %vm1381, %v1724, 0
      %v1856 = vsel %vm1381, %v1725, 0
      %v1859 = vsel %vm1381, %v1726, 0
      %v1862 = vsel %vm1381, %v1727, 0
      %v1865 = vsel %vm1381, %v1728, 0
      %v1868 = vsel %vm1381, %v1729, 0
      %v1871 = vsel %vm1381, %v1730, 0
      %v1874 = vsel %vm1381, %v1731, 0
      %1876 = vmatprep.subr.mxu0 0.0
      %1877 = vmatpush1.xpose.msra.mxu0 %v1733
      %1878 = vmatprep.subr.mxu0 0.0
      %1879 = vmatpush1.xpose.msra.mxu0 %v1736
      %1880 = vmatprep.subr.mxu0 0.0
      %1881 = vmatpush1.xpose.msra.mxu0 %v1739
      %1882 = vmatprep.subr.mxu0 0.0
      %1883 = vmatpush1.xpose.msra.mxu0 %v1742
      %1884 = vmatprep.subr.mxu0 0.0
      %1885 = vmatpush1.xpose.msra.mxu0 %v1745
      %1886 = vmatprep.subr.mxu0 0.0
      %1887 = vmatpush1.xpose.msra.mxu0 %v1748
      %1888 = vmatprep.subr.mxu0 0.0
      %1889 = vmatpush1.xpose.msra.mxu0 %v1751
      %1890 = vmatprep.subr.mxu0 0.0
      %1891 = vmatpush1.xpose.msra.mxu0 %v1754
      %1892 = vmatprep.subr.mxu0 0.0
      %1893 = vmatpush1.xpose.msra.mxu0 %v1757
      %1894 = vmatprep.subr.mxu0 0.0
      %1895 = vmatpush1.xpose.msra.mxu0 %v1760
      %1896 = vmatprep.subr.mxu0 0.0
      %1897 = vmatpush1.xpose.msra.mxu0 %v1763
      %1898 = vmatprep.subr.mxu0 0.0
      %1899 = vmatpush1.xpose.msra.mxu0 %v1766
      %1900 = vmatprep.subr.mxu0 0.0
      %1901 = vmatpush1.xpose.msra.mxu0 %v1769
      %1902 = vmatprep.subr.mxu0 0.0
      %1903 = vmatpush1.xpose.msra.mxu0 %v1772
      %1904 = vmatprep.subr.mxu0 0.0
      %1905 = vmatpush1.xpose.msra.mxu0 %v1775
      %1906 = vmatprep.subr.mxu0 0.0
      %1907 = vmatpush1.xpose.msra.mxu0 %v1778
      %1908 = vmatprep.subr.mxu0 0.0
      %1909 = vmatpush1.xpose.msra.mxu0 %v1781
      %1910 = vmatprep.subr.mxu0 0.0
      %1911 = vmatpush1.xpose.msra.mxu0 %v1784
      %1912 = vmatprep.subr.mxu0 0.0
      %1913 = vmatpush1.xpose.msra.mxu0 %v1787
      %1914 = vmatprep.subr.mxu0 0.0
      %1915 = vmatpush1.xpose.msra.mxu0 %v1790
      %1916 = vmatprep.subr.mxu0 0.0
      %1917 = vmatpush1.xpose.msra.mxu0 %v1793
      %1918 = vmatprep.subr.mxu0 0.0
      %1919 = vmatpush1.xpose.msra.mxu0 %v1796
      %1920 = vmatprep.subr.mxu0 0.0
      %1921 = vmatpush1.xpose.msra.mxu0 %v1799
      %1922 = vmatprep.subr.mxu0 0.0
      %1923 = vmatpush1.xpose.msra.mxu0 %v1802
      %1924 = vmatprep.subr.mxu0 0.0
      %1925 = vmatpush1.xpose.msra.mxu0 %v1805
      %1926 = vmatprep.subr.mxu0 0.0
      %1927 = vmatpush1.xpose.msra.mxu0 %v1808
      %1928 = vmatprep.subr.mxu0 0.0
      %1929 = vmatpush1.xpose.msra.mxu0 %v1811
      %1930 = vmatprep.subr.mxu0 0.0
      %1931 = vmatpush1.xpose.msra.mxu0 %v1814
      %1932 = vmatprep.subr.mxu0 0.0
      %1933 = vmatpush1.xpose.msra.mxu0 %v1817
      %1934 = vmatprep.subr.mxu0 0.0
      %1935 = vmatpush1.xpose.msra.mxu0 %v1820
      %1936 = vmatprep.subr.mxu0 0.0
      %1937 = vmatpush1.xpose.msra.mxu0 %v1823
      %1938 = vmatprep.subr.mxu0 0.0
      %1939 = vmatpush1.xpose.msra.mxu0 %v1826
      %1940 = vmatprep.mubr.f32.mxu0 0.0
      %1941 = vmatmul.mubr.f32.gmra.mrb[0].mxu0 %v1383
      %v1942 = vpop.f32.mrb[0].mxu0
      %v1943 = vadd.f32 0.0, %v1942
      %v1944 = vpop.f32.mrb[0].mxu0
      %v1945 = vadd.f32 0.0, %v1944
      %1946 = vmatprep.mubr.f32.mxu0 0.0
      %1947 = vmatmul.mubr.f32.gmra.mrb[0].mxu0 %v1386
      %v1948 = vpop.f32.mrb[0].mxu0
      %v1949 = vadd.f32 0.0, %v1948
      %v1950 = vpop.f32.mrb[0].mxu0
      %v1951 = vadd.f32 0.0, %v1950
      %1952 = vdwg.mxu0
      %1953 = vmatprep.subr.mxu0 0.0
      %1954 = vmatpush1.xpose.msra.mxu0 %v1829
      %1955 = vmatprep.subr.mxu0 0.0
      %1956 = vmatpush1.xpose.msra.mxu0 %v1832
      %1957 = vmatprep.subr.mxu0 0.0
      %1958 = vmatpush1.xpose.msra.mxu0 %v1835
      %1959 = vmatprep.subr.mxu0 0.0
      %1960 = vmatpush1.xpose.msra.mxu0 %v1838
      %1961 = vmatprep.subr.mxu0 0.0
      %1962 = vmatpush1.xpose.msra.mxu0 %v1841
      %1963 = vmatprep.subr.mxu0 0.0
      %1964 = vmatpush1.xpose.msra.mxu0 %v1844
      %1965 = vmatprep.subr.mxu0 0.0
      %1966 = vmatpush1.xpose.msra.mxu0 %v1847
      %1967 = vmatprep.subr.mxu0 0.0
      %1968 = vmatpush1.xpose.msra.mxu0 %v1850
      %1969 = vmatprep.subr.mxu0 0.0
      %1970 = vmatpush1.xpose.msra.mxu0 %v1853
      %1971 = vmatprep.subr.mxu0 0.0
      %1972 = vmatpush1.xpose.msra.mxu0 %v1856
      %1973 = vmatprep.subr.mxu0 0.0
      %1974 = vmatpush1.xpose.msra.mxu0 %v1859
      %1975 = vmatprep.subr.mxu0 0.0
      %1976 = vmatpush1.xpose.msra.mxu0 %v1862
      %1977 = vmatprep.subr.mxu0 0.0
      %1978 = vmatpush1.xpose.msra.mxu0 %v1865
      %1979 = vmatprep.subr.mxu0 0.0
      %1980 = vmatpush1.xpose.msra.mxu0 %v1868
      %1981 = vmatprep.subr.mxu0 0.0
      %1982 = vmatpush1.xpose.msra.mxu0 %v1871
      %1983 = vmatprep.subr.mxu0 0.0
      %1984 = vmatpush1.xpose.msra.mxu0 %v1874
      %1985 = vmatprep.subr.mxu0 0.0
      %1986 = vmatpush1.xpose.msra.mxu0 0.0
      %1987 = vmatprep.subr.mxu0 0.0
      %1988 = vmatpush1.xpose.msra.mxu0 0.0
      %1989 = vmatprep.subr.mxu0 0.0
      %1990 = vmatpush1.xpose.msra.mxu0 0.0
      %1991 = vmatprep.subr.mxu0 0.0
      %1992 = vmatpush1.xpose.msra.mxu0 0.0
      %1993 = vmatprep.subr.mxu0 0.0
      %1994 = vmatpush1.xpose.msra.mxu0 0.0
      %1995 = vmatprep.subr.mxu0 0.0
      %1996 = vmatpush1.xpose.msra.mxu0 0.0
      %1997 = vmatprep.subr.mxu0 0.0
      %1998 = vmatpush1.xpose.msra.mxu0 0.0
      %1999 = vmatprep.subr.mxu0 0.0
      %2000 = vmatpush1.xpose.msra.mxu0 0.0
      %2001 = vmatprep.subr.mxu0 0.0
      %2002 = vmatpush1.xpose.msra.mxu0 0.0
      %2003 = vmatprep.subr.mxu0 0.0
      %2004 = vmatpush1.xpose.msra.mxu0 0.0
      %2005 = vmatprep.subr.mxu0 0.0
      %2006 = vmatpush1.xpose.msra.mxu0 0.0
      %2007 = vmatprep.subr.mxu0 0.0
      %2008 = vmatpush1.xpose.msra.mxu0 0.0
      %2009 = vmatprep.subr.mxu0 0.0
      %2010 = vmatpush1.xpose.msra.mxu0 0.0
      %2011 = vmatprep.subr.mxu0 0.0
      %2012 = vmatpush1.xpose.msra.mxu0 0.0
      %2013 = vmatprep.subr.mxu0 0.0
      %2014 = vmatpush1.xpose.msra.mxu0 0.0
      %2015 = vmatprep.subr.mxu0 0.0
      %2016 = vmatpush1.xpose.msra.mxu0 0.0
      %2017 = vmatprep.mubr.f32.mxu0 0.0
      %2018 = vmatmul.mubr.f32.gmra.mrb[0].mxu0 %v1383
      %v2019 = vpop.f32.mrb[0].mxu0
      %v2020 = vadd.f32 0.0, %v2019
      %v2021 = vpop.f32.mrb[0].mxu0
      %2022 = vmatprep.mubr.f32.mxu0 0.0
      %2023 = vmatmul.mubr.f32.gmra.mrb[0].mxu0 %v1386
      %v2024 = vpop.f32.mrb[0].mxu0
      %v2025 = vadd.f32 0.0, %v2024
      %v2026 = vpop.f32.mrb[0].mxu0
      %2027 = vdwg.mxu0
      %v2028 = vmul.f32 %v1327, %v1599
      %v2029 = vmul.f32 %v1328, %v1601
      %v2030 = vmul.f32 %v1329, %v1676
      %v2031 = vmul.f32 %v1330, %v1605
      %v2032 = vmul.f32 %v1331, %v1607
      %v2033 = vmul.f32 %v1332, %v1681
      %vm2034 = vcmask 1043456
      %v2035 = vsel %vm2034, %v2031, 0.0
      %v2036 = vadd.f32 %v2028, %v2035
      %v2037 = vrot.slane %v2036, 4
      %v2038 = vadd.f32 %v2036, %v2037
      %v2039 = vrot.slane %v2038, 2
      %v2040 = vadd.f32 %v2038, %v2039
      %v2041 = vrot.slane %v2040, 1
      %v2042 = vadd.f32 %v2040, %v2041
      %v2043 = vsel %vm2034, %v2032, 0.0
      %v2044 = vadd.f32 %v2029, %v2043
      %v2045 = vrot.slane %v2044, 4
      %v2046 = vadd.f32 %v2044, %v2045
      %v2047 = vrot.slane %v2046, 2
      %v2048 = vadd.f32 %v2046, %v2047
      %v2049 = vrot.slane %v2048, 1
      %v2050 = vadd.f32 %v2048, %v2049
      %v2051 = vsel %vm2034, %v2033, 0.0
      %v2052 = vadd.f32 %v2030, %v2051
      %v2053 = vrot.slane %v2052, 4
      %v2054 = vadd.f32 %v2052, %v2053
      %v2055 = vrot.slane %v2054, 2
      %v2056 = vadd.f32 %v2054, %v2055
      %v2057 = vrot.slane %v2056, 1
      %v2058 = vadd.f32 %v2056, %v2057
      %v2059 = vmul.f32 %v1327, %v1943
      %v2060 = vmul.f32 %v1328, %v1945
      %v2061 = vmul.f32 %v1329, %v2020
      %v2062 = vmul.f32 %v1330, %v1949
      %v2063 = vmul.f32 %v1331, %v1951
      %v2064 = vmul.f32 %v1332, %v2025
      %v2065 = vsel %vm2034, %v2062, 0.0
      %v2066 = vadd.f32 %v2059, %v2065
      %v2067 = vrot.slane %v2066, 4
      %v2068 = vadd.f32 %v2066, %v2067
      %v2069 = vrot.slane %v2068, 2
      %v2070 = vadd.f32 %v2068, %v2069
      %v2071 = vrot.slane %v2070, 1
      %v2072 = vadd.f32 %v2070, %v2071
      %v2073 = vsel %vm2034, %v2063, 0.0
      %v2074 = vadd.f32 %v2060, %v2073
      %v2075 = vrot.slane %v2074, 4
      %v2076 = vadd.f32 %v2074, %v2075
      %v2077 = vrot.slane %v2076, 2
      %v2078 = vadd.f32 %v2076, %v2077
      %v2079 = vrot.slane %v2078, 1
      %v2080 = vadd.f32 %v2078, %v2079
      %v2081 = vsel %vm2034, %v2064, 0.0
      %v2082 = vadd.f32 %v2061, %v2081
      %v2083 = vrot.slane %v2082, 4
      %v2084 = vadd.f32 %v2082, %v2083
      %v2085 = vrot.slane %v2084, 2
      %v2086 = vadd.f32 %v2084, %v2085
      %v2087 = vrot.slane %v2086, 1
      %v2088 = vadd.f32 %v2086, %v2087
      %v2089 = vld [vmem:[%s9] sm:$0xff]
      %v2090 = vld [vmem:[%s9 + $0x8] sm:$0xff]
      %v2091 = vld [vmem:[%s9 + $0x10] sm:$0xff]
      %v2092 = vld [vmem:[%s9 + $0x18] sm:$0xff]
      %v2093 = vld [vmem:[%s9 + $0x20] sm:$0xff]
      %v2094 = vld [vmem:[%s9 + $0x28] sm:$0xff]
      %v2095 = vld [vmem:[%s9 + $0x30] sm:$0xff]
      %v2096 = vld [vmem:[%s9 + $0x38] sm:$0xff]
      %v2097 = vld [vmem:[%s9 + $0x40] sm:$0xff]
      %v2098 = vld [vmem:[%s9 + $0x48] sm:$0xff]
      %v2099 = vld [vmem:[%s9 + $0x50] sm:$0xff]
      %v2100 = vld [vmem:[%s9 + $0x58] sm:$0xff]
      %v2101 = vld [vmem:[%s9 + $0x60] sm:$0xff]
      %v2102 = vld [vmem:[%s9 + $0x68] sm:$0xff]
      %v2103 = vld [vmem:[%s9 + $0x70] sm:$0xff]
      %v2104 = vld [vmem:[%s9 + $0x78] sm:$0xff]
      %v2105 = vld [vmem:[%s9 + $0x80] sm:$0xff]
      %v2106 = vld [vmem:[%s9 + $0x88] sm:$0xff]
      %v2107 = vld [vmem:[%s9 + $0x90] sm:$0xff]
      %v2108 = vld [vmem:[%s9 + $0x98] sm:$0xff]
      %v2109 = vld [vmem:[%s9 + $0xa0] sm:$0xff]
      %v2110 = vld [vmem:[%s9 + $0xa8] sm:$0xff]
      %v2111 = vld [vmem:[%s9 + $0xb0] sm:$0xff]
      %v2112 = vld [vmem:[%s9 + $0xb8] sm:$0xff]
      %v2113 = vld [vmem:[%s9 + $0xc0] sm:$0xff]
      %v2114 = vld [vmem:[%s9 + $0xc8] sm:$0xff]
      %v2115 = vld [vmem:[%s9 + $0xd0] sm:$0xff]
      %v2116 = vld [vmem:[%s9 + $0xd8] sm:$0xff]
      %v2117 = vld [vmem:[%s9 + $0xe0] sm:$0xff]
      %v2118 = vld [vmem:[%s9 + $0xe8] sm:$0xff]
      %v2119 = vld [vmem:[%s9 + $0xf0] sm:$0xff]
      %v2120 = vld [vmem:[%s9 + $0xf8] sm:$0xff]
      %v2121 = vld [vmem:[%s9 + $0x100] sm:$0xff]
      %v2122 = vld [vmem:[%s9 + $0x108] sm:$0xff]
      %v2123 = vld [vmem:[%s9 + $0x110] sm:$0xff]
      %v2124 = vld [vmem:[%s9 + $0x118] sm:$0xff]
      %v2125 = vld [vmem:[%s9 + $0x120] sm:$0xff]
      %v2126 = vld [vmem:[%s9 + $0x128] sm:$0xff]
      %v2127 = vld [vmem:[%s9 + $0x130] sm:$0xff]
      %v2128 = vld [vmem:[%s9 + $0x138] sm:$0xff]
      %v2129 = vld [vmem:[%s9 + $0x140] sm:$0xff]
      %v2130 = vld [vmem:[%s9 + $0x148] sm:$0xff]
      %v2131 = vld [vmem:[%s9 + $0x150] sm:$0xff]
      %v2132 = vld [vmem:[%s9 + $0x158] sm:$0xff]
      %v2133 = vld [vmem:[%s9 + $0x160] sm:$0xff]
      %v2134 = vld [vmem:[%s9 + $0x168] sm:$0xff]
      %v2135 = vld [vmem:[%s9 + $0x170] sm:$0xff]
      %v2136 = vld [vmem:[%s9 + $0x178] sm:$0xff]
      %v2137 = vld [vmem:[%s10] sm:$0x1]
      %2138 = vmatprep.subr.mxu0 0.0
      %2139 = vmatpush1.msra.mxu0 %v2089
      %2140 = vmatprep.subr.mxu0 0.0
      %2141 = vmatpush1.msra.mxu0 %v2090
      %2142 = vmatprep.subr.mxu0 0.0
      %2143 = vmatpush1.msra.mxu0 %v2091
      %2144 = vmatprep.subr.mxu0 0.0
      %2145 = vmatpush1.msra.mxu0 %v2092
      %2146 = vmatprep.subr.mxu0 0.0
      %2147 = vmatpush1.msra.mxu0 %v2093
      %2148 = vmatprep.subr.mxu0 0.0
      %2149 = vmatpush1.msra.mxu0 %v2094
      %2150 = vmatprep.subr.mxu0 0.0
      %2151 = vmatpush1.msra.mxu0 %v2095
      %2152 = vmatprep.subr.mxu0 0.0
      %2153 = vmatpush1.msra.mxu0 %v2096
      %2154 = vmatprep.subr.mxu0 0.0
      %2155 = vmatpush1.msra.mxu0 %v2097
      %2156 = vmatprep.subr.mxu0 0.0
      %2157 = vmatpush1.msra.mxu0 %v2098
      %2158 = vmatprep.subr.mxu0 0.0
      %2159 = vmatpush1.msra.mxu0 %v2099
      %2160 = vmatprep.subr.mxu0 0.0
      %2161 = vmatpush1.msra.mxu0 %v2100
      %2162 = vmatprep.subr.mxu0 0.0
      %2163 = vmatpush1.msra.mxu0 %v2101
      %2164 = vmatprep.subr.mxu0 0.0
      %2165 = vmatpush1.msra.mxu0 %v2102
      %2166 = vmatprep.subr.mxu0 0.0
      %2167 = vmatpush1.msra.mxu0 %v2103
      %2168 = vmatprep.subr.mxu0 0.0
      %2169 = vmatpush1.msra.mxu0 %v2104
      %2170 = vmatprep.subr.mxu0 0.0
      %2171 = vmatpush1.msra.mxu0 %v2105
      %2172 = vmatprep.subr.mxu0 0.0
      %2173 = vmatpush1.msra.mxu0 %v2106
      %2174 = vmatprep.subr.mxu0 0.0
      %2175 = vmatpush1.msra.mxu0 %v2107
      %2176 = vmatprep.subr.mxu0 0.0
      %2177 = vmatpush1.msra.mxu0 %v2108
      %2178 = vmatprep.subr.mxu0 0.0
      %2179 = vmatpush1.msra.mxu0 %v2109
      %2180 = vmatprep.subr.mxu0 0.0
      %2181 = vmatpush1.msra.mxu0 %v2110
      %2182 = vmatprep.subr.mxu0 0.0
      %2183 = vmatpush1.msra.mxu0 %v2111
      %2184 = vmatprep.subr.mxu0 0.0
      %2185 = vmatpush1.msra.mxu0 %v2112
      %2186 = vmatprep.subr.mxu0 0.0
      %2187 = vmatpush1.msra.mxu0 %v2113
      %2188 = vmatprep.subr.mxu0 0.0
      %2189 = vmatpush1.msra.mxu0 %v2114
      %2190 = vmatprep.subr.mxu0 0.0
      %2191 = vmatpush1.msra.mxu0 %v2115
      %2192 = vmatprep.subr.mxu0 0.0
      %2193 = vmatpush1.msra.mxu0 %v2116
      %2194 = vmatprep.subr.mxu0 0.0
      %2195 = vmatpush1.msra.mxu0 %v2117
      %2196 = vmatprep.subr.mxu0 0.0
      %2197 = vmatpush1.msra.mxu0 %v2118
      %2198 = vmatprep.subr.mxu0 0.0
      %2199 = vmatpush1.msra.mxu0 %v2119
      %2200 = vmatprep.subr.mxu0 0.0
      %2201 = vmatpush1.msra.mxu0 %v2120
      %2202 = vmatprep.mubr.f32.mxu0 %v2050
      %2203 = vmatmul.mubr.f32.gmra.mrb[0].mxu0 %v2042
      %v2204 = vpop.f32.mrb[0].mxu0
      %v2205 = vadd.f32 %v2137, %v2204
      %v2206 = vpop.f32.mrb[0].mxu0
      %2207 = vdwg.mxu0
      %2208 = vmatprep.subr.mxu0 0.0
      %2209 = vmatpush1.msra.mxu0 %v2121
      %2210 = vmatprep.subr.mxu0 0.0
      %2211 = vmatpush1.msra.mxu0 %v2122
      %2212 = vmatprep.subr.mxu0 0.0
      %2213 = vmatpush1.msra.mxu0 %v2123
      %2214 = vmatprep.subr.mxu0 0.0
      %2215 = vmatpush1.msra.mxu0 %v2124
      %2216 = vmatprep.subr.mxu0 0.0
      %2217 = vmatpush1.msra.mxu0 %v2125
      %2218 = vmatprep.subr.mxu0 0.0
      %2219 = vmatpush1.msra.mxu0 %v2126
      %2220 = vmatprep.subr.mxu0 0.0
      %2221 = vmatpush1.msra.mxu0 %v2127
      %2222 = vmatprep.subr.mxu0 0.0
      %2223 = vmatpush1.msra.mxu0 %v2128
      %2224 = vmatprep.subr.mxu0 0.0
      %2225 = vmatpush1.msra.mxu0 %v2129
      %2226 = vmatprep.subr.mxu0 0.0
      %2227 = vmatpush1.msra.mxu0 %v2130
      %2228 = vmatprep.subr.mxu0 0.0
      %2229 = vmatpush1.msra.mxu0 %v2131
      %2230 = vmatprep.subr.mxu0 0.0
      %2231 = vmatpush1.msra.mxu0 %v2132
      %2232 = vmatprep.subr.mxu0 0.0
      %2233 = vmatpush1.msra.mxu0 %v2133
      %2234 = vmatprep.subr.mxu0 0.0
      %2235 = vmatpush1.msra.mxu0 %v2134
      %2236 = vmatprep.subr.mxu0 0.0
      %2237 = vmatpush1.msra.mxu0 %v2135
      %2238 = vmatprep.subr.mxu0 0.0
      %2239 = vmatpush1.msra.mxu0 %v2136
      %2240 = vmatprep.subr.mxu0 0.0
      %2241 = vmatpush1.msra.mxu0 0.0
      %2242 = vmatprep.subr.mxu0 0.0
      %2243 = vmatpush1.msra.mxu0 0.0
      %2244 = vmatprep.subr.mxu0 0.0
      %2245 = vmatpush1.msra.mxu0 0.0
      %2246 = vmatprep.subr.mxu0 0.0
      %2247 = vmatpush1.msra.mxu0 0.0
      %2248 = vmatprep.subr.mxu0 0.0
      %2249 = vmatpush1.msra.mxu0 0.0
      %2250 = vmatprep.subr.mxu0 0.0
      %2251 = vmatpush1.msra.mxu0 0.0
      %2252 = vmatprep.subr.mxu0 0.0
      %2253 = vmatpush1.msra.mxu0 0.0
      %2254 = vmatprep.subr.mxu0 0.0
      %2255 = vmatpush1.msra.mxu0 0.0
      %2256 = vmatprep.subr.mxu0 0.0
      %2257 = vmatpush1.msra.mxu0 0.0
      %2258 = vmatprep.subr.mxu0 0.0
      %2259 = vmatpush1.msra.mxu0 0.0
      %2260 = vmatprep.subr.mxu0 0.0
      %2261 = vmatpush1.msra.mxu0 0.0
      %2262 = vmatprep.subr.mxu0 0.0
      %2263 = vmatpush1.msra.mxu0 0.0
      %2264 = vmatprep.subr.mxu0 0.0
      %2265 = vmatpush1.msra.mxu0 0.0
      %2266 = vmatprep.subr.mxu0 0.0
      %2267 = vmatpush1.msra.mxu0 0.0
      %2268 = vmatprep.subr.mxu0 0.0
      %2269 = vmatpush1.msra.mxu0 0.0
      %2270 = vmatprep.subr.mxu0 0.0
      %2271 = vmatpush1.msra.mxu0 0.0
      %2272 = vmatprep.mubr.f32.mxu0 0.0
      %2273 = vmatmul.mubr.f32.gmra.mrb[0].mxu0 %v2058
      %v2274 = vpop.f32.mrb[0].mxu0
      %v2275 = vadd.f32 %v2205, %v2274
      %v2276 = vpop.f32.mrb[0].mxu0
      %2277 = vdwg.mxu0
      %2278 = vmatprep.subr.mxu0 0.0
      %2279 = vmatpush1.msra.mxu0 %v2089
      %2280 = vmatprep.subr.mxu0 0.0
      %2281 = vmatpush1.msra.mxu0 %v2090
      %2282 = vmatprep.subr.mxu0 0.0
      %2283 = vmatpush1.msra.mxu0 %v2091
      %2284 = vmatprep.subr.mxu0 0.0
      %2285 = vmatpush1.msra.mxu0 %v2092
      %2286 = vmatprep.subr.mxu0 0.0
      %2287 = vmatpush1.msra.mxu0 %v2093
      %2288 = vmatprep.subr.mxu0 0.0
      %2289 = vmatpush1.msra.mxu0 %v2094
      %2290 = vmatprep.subr.mxu0 0.0
      %2291 = vmatpush1.msra.mxu0 %v2095
      %2292 = vmatprep.subr.mxu0 0.0
      %2293 = vmatpush1.msra.mxu0 %v2096
      %2294 = vmatprep.subr.mxu0 0.0
      %2295 = vmatpush1.msra.mxu0 %v2097
      %2296 = vmatprep.subr.mxu0 0.0
      %2297 = vmatpush1.msra.mxu0 %v2098
      %2298 = vmatprep.subr.mxu0 0.0
      %2299 = vmatpush1.msra.mxu0 %v2099
      %2300 = vmatprep.subr.mxu0 0.0
      %2301 = vmatpush1.msra.mxu0 %v2100
      %2302 = vmatprep.subr.mxu0 0.0
      %2303 = vmatpush1.msra.mxu0 %v2101
      %2304 = vmatprep.subr.mxu0 0.0
      %2305 = vmatpush1.msra.mxu0 %v2102
      %2306 = vmatprep.subr.mxu0 0.0
      %2307 = vmatpush1.msra.mxu0 %v2103
      %2308 = vmatprep.subr.mxu0 0.0
      %2309 = vmatpush1.msra.mxu0 %v2104
      %2310 = vmatprep.subr.mxu0 0.0
      %2311 = vmatpush1.msra.mxu0 %v2105
      %2312 = vmatprep.subr.mxu0 0.0
      %2313 = vmatpush1.msra.mxu0 %v2106
      %2314 = vmatprep.subr.mxu0 0.0
      %2315 = vmatpush1.msra.mxu0 %v2107
      %2316 = vmatprep.subr.mxu0 0.0
      %2317 = vmatpush1.msra.mxu0 %v2108
      %2318 = vmatprep.subr.mxu0 0.0
      %2319 = vmatpush1.msra.mxu0 %v2109
      %2320 = vmatprep.subr.mxu0 0.0
      %2321 = vmatpush1.msra.mxu0 %v2110
      %2322 = vmatprep.subr.mxu0 0.0
      %2323 = vmatpush1.msra.mxu0 %v2111
      %2324 = vmatprep.subr.mxu0 0.0
      %2325 = vmatpush1.msra.mxu0 %v2112
      %2326 = vmatprep.subr.mxu0 0.0
      %2327 = vmatpush1.msra.mxu0 %v2113
      %2328 = vmatprep.subr.mxu0 0.0
      %2329 = vmatpush1.msra.mxu0 %v2114
      %2330 = vmatprep.subr.mxu0 0.0
      %2331 = vmatpush1.msra.mxu0 %v2115
      %2332 = vmatprep.subr.mxu0 0.0
      %2333 = vmatpush1.msra.mxu0 %v2116
      %2334 = vmatprep.subr.mxu0 0.0
      %2335 = vmatpush1.msra.mxu0 %v2117
      %2336 = vmatprep.subr.mxu0 0.0
      %2337 = vmatpush1.msra.mxu0 %v2118
      %2338 = vmatprep.subr.mxu0 0.0
      %2339 = vmatpush1.msra.mxu0 %v2119
      %2340 = vmatprep.subr.mxu0 0.0
      %2341 = vmatpush1.msra.mxu0 %v2120
      %2342 = vmatprep.mubr.f32.mxu0 %v2080
      %2343 = vmatmul.mubr.f32.gmra.mrb[0].mxu0 %v2072
      %v2344 = vpop.f32.mrb[0].mxu0
      %v2345 = vadd.f32 1e-05, %v2344
      %v2346 = vpop.f32.mrb[0].mxu0
      %2347 = vdwg.mxu0
      %2348 = vmatprep.subr.mxu0 0.0
      %2349 = vmatpush1.msra.mxu0 %v2121
      %2350 = vmatprep.subr.mxu0 0.0
      %2351 = vmatpush1.msra.mxu0 %v2122
      %2352 = vmatprep.subr.mxu0 0.0
      %2353 = vmatpush1.msra.mxu0 %v2123
      %2354 = vmatprep.subr.mxu0 0.0
      %2355 = vmatpush1.msra.mxu0 %v2124
      %2356 = vmatprep.subr.mxu0 0.0
      %2357 = vmatpush1.msra.mxu0 %v2125
      %2358 = vmatprep.subr.mxu0 0.0
      %2359 = vmatpush1.msra.mxu0 %v2126
      %2360 = vmatprep.subr.mxu0 0.0
      %2361 = vmatpush1.msra.mxu0 %v2127
      %2362 = vmatprep.subr.mxu0 0.0
      %2363 = vmatpush1.msra.mxu0 %v2128
      %2364 = vmatprep.subr.mxu0 0.0
      %2365 = vmatpush1.msra.mxu0 %v2129
      %2366 = vmatprep.subr.mxu0 0.0
      %2367 = vmatpush1.msra.mxu0 %v2130
      %2368 = vmatprep.subr.mxu0 0.0
      %2369 = vmatpush1.msra.mxu0 %v2131
      %2370 = vmatprep.subr.mxu0 0.0
      %2371 = vmatpush1.msra.mxu0 %v2132
      %2372 = vmatprep.subr.mxu0 0.0
      %2373 = vmatpush1.msra.mxu0 %v2133
      %2374 = vmatprep.subr.mxu0 0.0
      %2375 = vmatpush1.msra.mxu0 %v2134
      %2376 = vmatprep.subr.mxu0 0.0
      %2377 = vmatpush1.msra.mxu0 %v2135
      %2378 = vmatprep.subr.mxu0 0.0
      %2379 = vmatpush1.msra.mxu0 %v2136
      %2380 = vmatprep.subr.mxu0 0.0
      %2381 = vmatpush1.msra.mxu0 0.0
      %2382 = vmatprep.subr.mxu0 0.0
      %2383 = vmatpush1.msra.mxu0 0.0
      %2384 = vmatprep.subr.mxu0 0.0
      %2385 = vmatpush1.msra.mxu0 0.0
      %2386 = vmatprep.subr.mxu0 0.0
      %2387 = vmatpush1.msra.mxu0 0.0
      %2388 = vmatprep.subr.mxu0 0.0
      %2389 = vmatpush1.msra.mxu0 0.0
      %2390 = vmatprep.subr.mxu0 0.0
      %2391 = vmatpush1.msra.mxu0 0.0
      %2392 = vmatprep.subr.mxu0 0.0
      %2393 = vmatpush1.msra.mxu0 0.0
      %2394 = vmatprep.subr.mxu0 0.0
      %2395 = vmatpush1.msra.mxu0 0.0
      %2396 = vmatprep.subr.mxu0 0.0
      %2397 = vmatpush1.msra.mxu0 0.0
      %2398 = vmatprep.subr.mxu0 0.0
      %2399 = vmatpush1.msra.mxu0 0.0
      %2400 = vmatprep.subr.mxu0 0.0
      %2401 = vmatpush1.msra.mxu0 0.0
      %2402 = vmatprep.subr.mxu0 0.0
      %2403 = vmatpush1.msra.mxu0 0.0
      %2404 = vmatprep.subr.mxu0 0.0
      %2405 = vmatpush1.msra.mxu0 0.0
      %2406 = vmatprep.subr.mxu0 0.0
      %2407 = vmatpush1.msra.mxu0 0.0
      %2408 = vmatprep.subr.mxu0 0.0
      %2409 = vmatpush1.msra.mxu0 0.0
      %2410 = vmatprep.subr.mxu0 0.0
      %2411 = vmatpush1.msra.mxu0 0.0
      %2412 = vmatprep.mubr.f32.mxu0 0.0
      %2413 = vmatmul.mubr.f32.gmra.mrb[0].mxu0 %v2088
      %v2414 = vpop.f32.mrb[0].mxu0
      %v2415 = vadd.f32 %v2345, %v2414
      %v2416 = vpop.f32.mrb[0].mxu0
      %2417 = vdwg.mxu0
      %v2418 = vmax.f32 %v2275, 0.0
      %v2419 = vld [vmem:[%s11] sm:$0xff]
      %v2420 = vld [vmem:[%s11 + $0x8] sm:$0xff]
      %v2421 = vld [vmem:[%s11 + $0x10] sm:$0xff]
      %v2422 = vld [vmem:[%s11 + $0x18] sm:$0xff]
      %v2423 = vld [vmem:[%s13] sm:$0x1]
      %vm2424 = vcmask 261120
      %v2426 = vsel %vm2424, %v2418, 0
      %2428 = vmatprep.subr.mxu0 0.0
      %2429 = vmatpush1.msra.mxu0 %v2419
      %2430 = vmatprep.subr.mxu0 0.0
      %2431 = vmatpush1.msra.mxu0 %v2420
      %2432 = vmatprep.subr.mxu0 0.0
      %2433 = vmatpush1.msra.mxu0 %v2421
      %2434 = vmatprep.subr.mxu0 0.0
      %2435 = vmatpush1.msra.mxu0 %v2422
      %2436 = vmatprep.subr.mxu0 0.0
      %2437 = vmatpush1.msra.mxu0 0.0
      %2438 = vmatprep.subr.mxu0 0.0
      %2439 = vmatpush1.msra.mxu0 0.0
      %2440 = vmatprep.subr.mxu0 0.0
      %2441 = vmatpush1.msra.mxu0 0.0
      %2442 = vmatprep.subr.mxu0 0.0
      %2443 = vmatpush1.msra.mxu0 0.0
      %2444 = vmatprep.subr.mxu0 0.0
      %2445 = vmatpush1.msra.mxu0 0.0
      %2446 = vmatprep.subr.mxu0 0.0
      %2447 = vmatpush1.msra.mxu0 0.0
      %2448 = vmatprep.subr.mxu0 0.0
      %2449 = vmatpush1.msra.mxu0 0.0
      %2450 = vmatprep.subr.mxu0 0.0
      %2451 = vmatpush1.msra.mxu0 0.0
      %2452 = vmatprep.subr.mxu0 0.0
      %2453 = vmatpush1.msra.mxu0 0.0
      %2454 = vmatprep.subr.mxu0 0.0
      %2455 = vmatpush1.msra.mxu0 0.0
      %2456 = vmatprep.subr.mxu0 0.0
      %2457 = vmatpush1.msra.mxu0 0.0
      %2458 = vmatprep.subr.mxu0 0.0
      %2459 = vmatpush1.msra.mxu0 0.0
      %2460 = vmatprep.subr.mxu0 0.0
      %2461 = vmatpush1.msra.mxu0 0.0
      %2462 = vmatprep.subr.mxu0 0.0
      %2463 = vmatpush1.msra.mxu0 0.0
      %2464 = vmatprep.subr.mxu0 0.0
      %2465 = vmatpush1.msra.mxu0 0.0
      %2466 = vmatprep.subr.mxu0 0.0
      %2467 = vmatpush1.msra.mxu0 0.0
      %2468 = vmatprep.subr.mxu0 0.0
      %2469 = vmatpush1.msra.mxu0 0.0
      %2470 = vmatprep.subr.mxu0 0.0
      %2471 = vmatpush1.msra.mxu0 0.0
      %2472 = vmatprep.subr.mxu0 0.0
      %2473 = vmatpush1.msra.mxu0 0.0
      %2474 = vmatprep.subr.mxu0 0.0
      %2475 = vmatpush1.msra.mxu0 0.0
      %2476 = vmatprep.subr.mxu0 0.0
      %2477 = vmatpush1.msra.mxu0 0.0
      %2478 = vmatprep.subr.mxu0 0.0
      %2479 = vmatpush1.msra.mxu0 0.0
      %2480 = vmatprep.subr.mxu0 0.0
      %2481 = vmatpush1.msra.mxu0 0.0
      %2482 = vmatprep.subr.mxu0 0.0
      %2483 = vmatpush1.msra.mxu0 0.0
      %2484 = vmatprep.subr.mxu0 0.0
      %2485 = vmatpush1.msra.mxu0 0.0
      %2486 = vmatprep.subr.mxu0 0.0
      %2487 = vmatpush1.msra.mxu0 0.0
      %2488 = vmatprep.subr.mxu0 0.0
      %2489 = vmatpush1.msra.mxu0 0.0
      %2490 = vmatprep.subr.mxu0 0.0
      %2491 = vmatpush1.msra.mxu0 0.0
      %2492 = vmatprep.mubr.f32.mxu0 0.0
      %2493 = vmatmul.mubr.f32.gmra.mrb[0].mxu0 %v2426
      %v2494 = vpop.f32.mrb[0].mxu0
      %v2495 = vadd.f32 %v2423, %v2494
      %v2496 = vpop.f32.mrb[0].mxu0
      %2497 = vdwg.mxu0
      %v2498 = vld [vmem:[%s14] sm:$0xff]
      %v2499 = vld [vmem:[%s14 + $0x8] sm:$0xff]
      %v2500 = vld [vmem:[%s14 + $0x10] sm:$0xff]
      %v2501 = vld [vmem:[%s14 + $0x18] sm:$0xff]
      %v2502 = vld [vmem:[%s16] sm:$0x1]
      %v2504 = vsel %vm2424, %v2495, 0
      %2506 = vmatprep.subr.mxu0 0.0
      %2507 = vmatpush1.msra.mxu0 %v2498
      %2508 = vmatprep.subr.mxu0 0.0
      %2509 = vmatpush1.msra.mxu0 %v2499
      %2510 = vmatprep.subr.mxu0 0.0
      %2511 = vmatpush1.msra.mxu0 %v2500
      %2512 = vmatprep.subr.mxu0 0.0
      %2513 = vmatpush1.msra.mxu0 %v2501
      %2514 = vmatprep.subr.mxu0 0.0
      %2515 = vmatpush1.msra.mxu0 0.0
      %2516 = vmatprep.subr.mxu0 0.0
      %2517 = vmatpush1.msra.mxu0 0.0
      %2518 = vmatprep.subr.mxu0 0.0
      %2519 = vmatpush1.msra.mxu0 0.0
      %2520 = vmatprep.subr.mxu0 0.0
      %2521 = vmatpush1.msra.mxu0 0.0
      %2522 = vmatprep.subr.mxu0 0.0
      %2523 = vmatpush1.msra.mxu0 0.0
      %2524 = vmatprep.subr.mxu0 0.0
      %2525 = vmatpush1.msra.mxu0 0.0
      %2526 = vmatprep.subr.mxu0 0.0
      %2527 = vmatpush1.msra.mxu0 0.0
      %2528 = vmatprep.subr.mxu0 0.0
      %2529 = vmatpush1.msra.mxu0 0.0
      %2530 = vmatprep.subr.mxu0 0.0
      %2531 = vmatpush1.msra.mxu0 0.0
      %2532 = vmatprep.subr.mxu0 0.0
      %2533 = vmatpush1.msra.mxu0 0.0
      %2534 = vmatprep.subr.mxu0 0.0
      %2535 = vmatpush1.msra.mxu0 0.0
      %2536 = vmatprep.subr.mxu0 0.0
      %2537 = vmatpush1.msra.mxu0 0.0
      %2538 = vmatprep.subr.mxu0 0.0
      %2539 = vmatpush1.msra.mxu0 0.0
      %2540 = vmatprep.subr.mxu0 0.0
      %2541 = vmatpush1.msra.mxu0 0.0
      %2542 = vmatprep.subr.mxu0 0.0
      %2543 = vmatpush1.msra.mxu0 0.0
      %2544 = vmatprep.subr.mxu0 0.0
      %2545 = vmatpush1.msra.mxu0 0.0
      %2546 = vmatprep.subr.mxu0 0.0
      %2547 = vmatpush1.msra.mxu0 0.0
      %2548 = vmatprep.subr.mxu0 0.0
      %2549 = vmatpush1.msra.mxu0 0.0
      %2550 = vmatprep.subr.mxu0 0.0
      %2551 = vmatpush1.msra.mxu0 0.0
      %2552 = vmatprep.subr.mxu0 0.0
      %2553 = vmatpush1.msra.mxu0 0.0
      %2554 = vmatprep.subr.mxu0 0.0
      %2555 = vmatpush1.msra.mxu0 0.0
      %2556 = vmatprep.subr.mxu0 0.0
      %2557 = vmatpush1.msra.mxu0 0.0
      %2558 = vmatprep.subr.mxu0 0.0
      %2559 = vmatpush1.msra.mxu0 0.0
      %2560 = vmatprep.subr.mxu0 0.0
      %2561 = vmatpush1.msra.mxu0 0.0
      %2562 = vmatprep.subr.mxu0 0.0
      %2563 = vmatpush1.msra.mxu0 0.0
      %2564 = vmatprep.subr.mxu0 0.0
      %2565 = vmatpush1.msra.mxu0 0.0
      %2566 = vmatprep.subr.mxu0 0.0
      %2567 = vmatpush1.msra.mxu0 0.0
      %2568 = vmatprep.subr.mxu0 0.0
      %2569 = vmatpush1.msra.mxu0 0.0
      %2570 = vmatprep.mubr.f32.mxu0 0.0
      %2571 = vmatmul.mubr.f32.gmra.mrb[0].mxu0 %v2504
      %v2572 = vpop.f32.mrb[0].mxu0
      %v2573 = vadd.f32 %v2502, %v2572
      %v2574 = vpop.f32.mrb[0].mxu0
      %2575 = vdwg.mxu0
      %vm2576 = vcmask 73728
      %v2577 = vsel %vm2576, %v2573, -inf
      %2578 = vmax.xlane.f32.xlu0 %v2577
      %v2579 = vpop.xlane.xlu0 %2578
      %v2580 = vsub.f32 %v2573, %v2579
      %v2581 = vmul.f32 %v2580, 1.442695
      %v2582 = vpow.pop %v2581
      %v2583 = vsel %vm2576, %v2582, 0.0
      %2584 = vadd.xlane.f32.xlu0 %v2583
      %v2585 = vpop.xlane.xlu0 %2584
      %v2586 = vrcp.pop %v2585
      %v2587 = vmul.f32 %v2582, %v2586
      %v2588 = vld [vmem:[%s15] sm:$0xff]
      %v2589 = vld [vmem:[%s15 + $0x8] sm:$0xff]
      %v2590 = vld [vmem:[%s15 + $0x10] sm:$0xff]
      %v2591 = vld [vmem:[%s15 + $0x18] sm:$0xff]
      %2592 = vmatprep.subr.mxu0 0.0
      %2593 = vmatpush1.msra.mxu0 %v2588
      %2594 = vmatprep.subr.mxu0 0.0
      %2595 = vmatpush1.msra.mxu0 %v2589
      %2596 = vmatprep.subr.mxu0 0.0
      %2597 = vmatpush1.msra.mxu0 %v2590
      %2598 = vmatprep.subr.mxu0 0.0
      %2599 = vmatpush1.msra.mxu0 %v2591
      %2600 = vmatprep.subr.mxu0 0.0
      %2601 = vmatpush1.msra.mxu0 0.0
      %2602 = vmatprep.subr.mxu0 0.0
      %2603 = vmatpush1.msra.mxu0 0.0
      %2604 = vmatprep.subr.mxu0 0.0
      %2605 = vmatpush1.msra.mxu0 0.0
      %2606 = vmatprep.subr.mxu0 0.0
      %2607 = vmatpush1.msra.mxu0 0.0
      %2608 = vmatprep.subr.mxu0 0.0
      %2609 = vmatpush1.msra.mxu0 0.0
      %2610 = vmatprep.subr.mxu0 0.0
      %2611 = vmatpush1.msra.mxu0 0.0
      %2612 = vmatprep.subr.mxu0 0.0
      %2613 = vmatpush1.msra.mxu0 0.0
      %2614 = vmatprep.subr.mxu0 0.0
      %2615 = vmatpush1.msra.mxu0 0.0
      %2616 = vmatprep.subr.mxu0 0.0
      %2617 = vmatpush1.msra.mxu0 0.0
      %2618 = vmatprep.subr.mxu0 0.0
      %2619 = vmatpush1.msra.mxu0 0.0
      %2620 = vmatprep.subr.mxu0 0.0
      %2621 = vmatpush1.msra.mxu0 0.0
      %2622 = vmatprep.subr.mxu0 0.0
      %2623 = vmatpush1.msra.mxu0 0.0
      %2624 = vmatprep.subr.mxu0 0.0
      %2625 = vmatpush1.msra.mxu0 0.0
      %2626 = vmatprep.subr.mxu0 0.0
      %2627 = vmatpush1.msra.mxu0 0.0
      %2628 = vmatprep.subr.mxu0 0.0
      %2629 = vmatpush1.msra.mxu0 0.0
      %2630 = vmatprep.subr.mxu0 0.0
      %2631 = vmatpush1.msra.mxu0 0.0
      %2632 = vmatprep.subr.mxu0 0.0
      %2633 = vmatpush1.msra.mxu0 0.0
      %2634 = vmatprep.subr.mxu0 0.0
      %2635 = vmatpush1.msra.mxu0 0.0
      %2636 = vmatprep.subr.mxu0 0.0
      %2637 = vmatpush1.msra.mxu0 0.0
      %2638 = vmatprep.subr.mxu0 0.0
      %2639 = vmatpush1.msra.mxu0 0.0
      %2640 = vmatprep.subr.mxu0 0.0
      %2641 = vmatpush1.msra.mxu0 0.0
      %2642 = vmatprep.subr.mxu0 0.0
      %2643 = vmatpush1.msra.mxu0 0.0
      %2644 = vmatprep.subr.mxu0 0.0
      %2645 = vmatpush1.msra.mxu0 0.0
      %2646 = vmatprep.subr.mxu0 0.0
      %2647 = vmatpush1.msra.mxu0 0.0
      %2648 = vmatprep.subr.mxu0 0.0
      %2649 = vmatpush1.msra.mxu0 0.0
      %2650 = vmatprep.subr.mxu0 0.0
      %2651 = vmatpush1.msra.mxu0 0.0
      %2652 = vmatprep.subr.mxu0 0.0
      %2653 = vmatpush1.msra.mxu0 0.0
      %2654 = vmatprep.subr.mxu0 0.0
      %2655 = vmatpush1.msra.mxu0 0.0
      %2656 = vmatprep.mubr.f32.mxu0 0.0
      %2657 = vmatmul.mubr.f32.gmra.mrb[0].mxu0 %v2504
      %v2658 = vpop.f32.mrb[0].mxu0
      %v2659 = vadd.f32 1e-05, %v2658
      %v2660 = vpop.f32.mrb[0].mxu0
      %2661 = vdwg.mxu0
      %v2662 = vrcp.pop %v2659
      %v2663 = vmul.f32 %v2587, %v2662
      %vm2664 = vcmask 80896
      %v2666 = vsel %vm2664, %v2663, 0
      %v2669 = vsel %vm2664, %v2588, 0
      %v2672 = vsel %vm2664, %v2589, 0
      %v2675 = vsel %vm2664, %v2590, 0
      %v2678 = vsel %vm2664, %v2591, 0
      %2680 = vmatprep.subr.mxu0 0.0
      %2681 = vmatpush1.xpose.msra.mxu0 %v2669
      %2682 = vmatprep.subr.mxu0 0.0
      %2683 = vmatpush1.xpose.msra.mxu0 %v2672
      %2684 = vmatprep.subr.mxu0 0.0
      %2685 = vmatpush1.xpose.msra.mxu0 %v2675
      %2686 = vmatprep.subr.mxu0 0.0
      %2687 = vmatpush1.xpose.msra.mxu0 %v2678
      %2688 = vmatprep.subr.mxu0 0.0
      %2689 = vmatpush1.xpose.msra.mxu0 0.0
      %2690 = vmatprep.subr.mxu0 0.0
      %2691 = vmatpush1.xpose.msra.mxu0 0.0
      %2692 = vmatprep.subr.mxu0 0.0
      %2693 = vmatpush1.xpose.msra.mxu0 0.0
      %2694 = vmatprep.subr.mxu0 0.0
      %2695 = vmatpush1.xpose.msra.mxu0 0.0
      %2696 = vmatprep.subr.mxu0 0.0
      %2697 = vmatpush1.xpose.msra.mxu0 0.0
      %2698 = vmatprep.subr.mxu0 0.0
      %2699 = vmatpush1.xpose.msra.mxu0 0.0
      %2700 = vmatprep.subr.mxu0 0.0
      %2701 = vmatpush1.xpose.msra.mxu0 0.0
      %2702 = vmatprep.subr.mxu0 0.0
      %2703 = vmatpush1.xpose.msra.mxu0 0.0
      %2704 = vmatprep.subr.mxu0 0.0
      %2705 = vmatpush1.xpose.msra.mxu0 0.0
      %2706 = vmatprep.subr.mxu0 0.0
      %2707 = vmatpush1.xpose.msra.mxu0 0.0
      %2708 = vmatprep.subr.mxu0 0.0
      %2709 = vmatpush1.xpose.msra.mxu0 0.0
      %2710 = vmatprep.subr.mxu0 0.0
      %2711 = vmatpush1.xpose.msra.mxu0 0.0
      %2712 = vmatprep.subr.mxu0 0.0
      %2713 = vmatpush1.xpose.msra.mxu0 0.0
      %2714 = vmatprep.subr.mxu0 0.0
      %2715 = vmatpush1.xpose.msra.mxu0 0.0
      %2716 = vmatprep.subr.mxu0 0.0
      %2717 = vmatpush1.xpose.msra.mxu0 0.0
      %2718 = vmatprep.subr.mxu0 0.0
      %2719 = vmatpush1.xpose.msra.mxu0 0.0
      %2720 = vmatprep.subr.mxu0 0.0
      %2721 = vmatpush1.xpose.msra.mxu0 0.0
      %2722 = vmatprep.subr.mxu0 0.0
      %2723 = vmatpush1.xpose.msra.mxu0 0.0
      %2724 = vmatprep.subr.mxu0 0.0
      %2725 = vmatpush1.xpose.msra.mxu0 0.0
      %2726 = vmatprep.subr.mxu0 0.0
      %2727 = vmatpush1.xpose.msra.mxu0 0.0
      %2728 = vmatprep.subr.mxu0 0.0
      %2729 = vmatpush1.xpose.msra.mxu0 0.0
      %2730 = vmatprep.subr.mxu0 0.0
      %2731 = vmatpush1.xpose.msra.mxu0 0.0
      %2732 = vmatprep.subr.mxu0 0.0
      %2733 = vmatpush1.xpose.msra.mxu0 0.0
      %2734 = vmatprep.subr.mxu0 0.0
      %2735 = vmatpush1.xpose.msra.mxu0 0.0
      %2736 = vmatprep.subr.mxu0 0.0
      %2737 = vmatpush1.xpose.msra.mxu0 0.0
      %2738 = vmatprep.subr.mxu0 0.0
      %2739 = vmatpush1.xpose.msra.mxu0 0.0
      %2740 = vmatprep.subr.mxu0 0.0
      %2741 = vmatpush1.xpose.msra.mxu0 0.0
      %2742 = vmatprep.subr.mxu0 0.0
      %2743 = vmatpush1.xpose.msra.mxu0 0.0
      %2744 = vmatprep.mubr.f32.mxu0 0.0
      %2745 = vmatmul.mubr.f32.gmra.mrb[0].mxu0 %v2666
      %v2746 = vpop.f32.mrb[0].mxu0
      %v2747 = vadd.f32 0.0, %v2746
      %v2748 = vpop.f32.mrb[0].mxu0
      %2749 = vdwg.mxu0
      %v2750 = vmul.f32 %v2495, %v2747
      %v2751 = vld [vmem:[%s12] sm:$0xff]
      %v2752 = vld [vmem:[%s12 + $0x8] sm:$0xff]
      %v2753 = vld [vmem:[%s12 + $0x10] sm:$0xff]
      %v2754 = vld [vmem:[%s12 + $0x18] sm:$0xff]
      %2755 = vmatprep.subr.mxu0 0.0
      %2756 = vmatpush1.msra.mxu0 %v2751
      %2757 = vmatprep.subr.mxu0 0.0
      %2758 = vmatpush1.msra.mxu0 %v2752
      %2759 = vmatprep.subr.mxu0 0.0
      %2760 = vmatpush1.msra.mxu0 %v2753
      %2761 = vmatprep.subr.mxu0 0.0
      %2762 = vmatpush1.msra.mxu0 %v2754
      %2763 = vmatprep.subr.mxu0 0.0
      %2764 = vmatpush1.msra.mxu0 0.0
      %2765 = vmatprep.subr.mxu0 0.0
      %2766 = vmatpush1.msra.mxu0 0.0
      %2767 = vmatprep.subr.mxu0 0.0
      %2768 = vmatpush1.msra.mxu0 0.0
      %2769 = vmatprep.subr.mxu0 0.0
      %2770 = vmatpush1.msra.mxu0 0.0
      %2771 = vmatprep.subr.mxu0 0.0
      %2772 = vmatpush1.msra.mxu0 0.0
      %2773 = vmatprep.subr.mxu0 0.0
      %2774 = vmatpush1.msra.mxu0 0.0
      %2775 = vmatprep.subr.mxu0 0.0
      %2776 = vmatpush1.msra.mxu0 0.0
      %2777 = vmatprep.subr.mxu0 0.0
      %2778 = vmatpush1.msra.mxu0 0.0
      %2779 = vmatprep.subr.mxu0 0.0
      %2780 = vmatpush1.msra.mxu0 0.0
      %2781 = vmatprep.subr.mxu0 0.0
      %2782 = vmatpush1.msra.mxu0 0.0
      %2783 = vmatprep.subr.mxu0 0.0
      %2784 = vmatpush1.msra.mxu0 0.0
      %2785 = vmatprep.subr.mxu0 0.0
      %2786 = vmatpush1.msra.mxu0 0.0
      %2787 = vmatprep.subr.mxu0 0.0
      %2788 = vmatpush1.msra.mxu0 0.0
      %2789 = vmatprep.subr.mxu0 0.0
      %2790 = vmatpush1.msra.mxu0 0.0
      %2791 = vmatprep.subr.mxu0 0.0
      %2792 = vmatpush1.msra.mxu0 0.0
      %2793 = vmatprep.subr.mxu0 0.0
      %2794 = vmatpush1.msra.mxu0 0.0
      %2795 = vmatprep.subr.mxu0 0.0
      %2796 = vmatpush1.msra.mxu0 0.0
      %2797 = vmatprep.subr.mxu0 0.0
      %2798 = vmatpush1.msra.mxu0 0.0
      %2799 = vmatprep.subr.mxu0 0.0
      %2800 = vmatpush1.msra.mxu0 0.0
      %2801 = vmatprep.subr.mxu0 0.0
      %2802 = vmatpush1.msra.mxu0 0.0
      %2803 = vmatprep.subr.mxu0 0.0
      %2804 = vmatpush1.msra.mxu0 0.0
      %2805 = vmatprep.subr.mxu0 0.0
      %2806 = vmatpush1.msra.mxu0 0.0
      %2807 = vmatprep.subr.mxu0 0.0
      %2808 = vmatpush1.msra.mxu0 0.0
      %2809 = vmatprep.subr.mxu0 0.0
      %2810 = vmatpush1.msra.mxu0 0.0
      %2811 = vmatprep.subr.mxu0 0.0
      %2812 = vmatpush1.msra.mxu0 0.0
      %2813 = vmatprep.subr.mxu0 0.0
      %2814 = vmatpush1.msra.mxu0 0.0
      %2815 = vmatprep.subr.mxu0 0.0
      %2816 = vmatpush1.msra.mxu0 0.0
      %2817 = vmatprep.subr.mxu0 0.0
      %2818 = vmatpush1.msra.mxu0 0.0
      %2819 = vmatprep.mubr.f32.mxu0 0.0
      %2820 = vmatmul.mubr.f32.gmra.mrb[0].mxu0 %v2426
      %v2821 = vpop.f32.mrb[0].mxu0
      %v2822 = vadd.f32 1e-05, %v2821
      %v2823 = vpop.f32.mrb[0].mxu0
      %2824 = vdwg.mxu0
      %v2825 = vrcp.pop %v2822
      %v2826 = vmul.f32 %v2750, %v2825
      %v2828 = vsel %vm2424, %v2826, 0
      %v2831 = vsel %vm2424, %v2751, 0
      %v2834 = vsel %vm2424, %v2752, 0
      %v2837 = vsel %vm2424, %v2753, 0
      %v2840 = vsel %vm2424, %v2754, 0
      %2842 = vmatprep.subr.mxu0 0.0
      %2843 = vmatpush1.xpose.msra.mxu0 %v2831
      %2844 = vmatprep.subr.mxu0 0.0
      %2845 = vmatpush1.xpose.msra.mxu0 %v2834
      %2846 = vmatprep.subr.mxu0 0.0
      %2847 = vmatpush1.xpose.msra.mxu0 %v2837
      %2848 = vmatprep.subr.mxu0 0.0
      %2849 = vmatpush1.xpose.msra.mxu0 %v2840
      %2850 = vmatprep.subr.mxu0 0.0
      %2851 = vmatpush1.xpose.msra.mxu0 0.0
      %2852 = vmatprep.subr.mxu0 0.0
      %2853 = vmatpush1.xpose.msra.mxu0 0.0
      %2854 = vmatprep.subr.mxu0 0.0
      %2855 = vmatpush1.xpose.msra.mxu0 0.0
      %2856 = vmatprep.subr.mxu0 0.0
      %2857 = vmatpush1.xpose.msra.mxu0 0.0
      %2858 = vmatprep.subr.mxu0 0.0
      %2859 = vmatpush1.xpose.msra.mxu0 0.0
      %2860 = vmatprep.subr.mxu0 0.0
      %2861 = vmatpush1.xpose.msra.mxu0 0.0
      %2862 = vmatprep.subr.mxu0 0.0
      %2863 = vmatpush1.xpose.msra.mxu0 0.0
      %2864 = vmatprep.subr.mxu0 0.0
      %2865 = vmatpush1.xpose.msra.mxu0 0.0
      %2866 = vmatprep.subr.mxu0 0.0
      %2867 = vmatpush1.xpose.msra.mxu0 0.0
      %2868 = vmatprep.subr.mxu0 0.0
      %2869 = vmatpush1.xpose.msra.mxu0 0.0
      %2870 = vmatprep.subr.mxu0 0.0
      %2871 = vmatpush1.xpose.msra.mxu0 0.0
      %2872 = vmatprep.subr.mxu0 0.0
      %2873 = vmatpush1.xpose.msra.mxu0 0.0
      %2874 = vmatprep.subr.mxu0 0.0
      %2875 = vmatpush1.xpose.msra.mxu0 0.0
      %2876 = vmatprep.subr.mxu0 0.0
      %2877 = vmatpush1.xpose.msra.mxu0 0.0
      %2878 = vmatprep.subr.mxu0 0.0
      %2879 = vmatpush1.xpose.msra.mxu0 0.0
      %2880 = vmatprep.subr.mxu0 0.0
      %2881 = vmatpush1.xpose.msra.mxu0 0.0
      %2882 = vmatprep.subr.mxu0 0.0
      %2883 = vmatpush1.xpose.msra.mxu0 0.0
      %2884 = vmatprep.subr.mxu0 0.0
      %2885 = vmatpush1.xpose.msra.mxu0 0.0
      %2886 = vmatprep.subr.mxu0 0.0
      %2887 = vmatpush1.xpose.msra.mxu0 0.0
      %2888 = vmatprep.subr.mxu0 0.0
      %2889 = vmatpush1.xpose.msra.mxu0 0.0
      %2890 = vmatprep.subr.mxu0 0.0
      %2891 = vmatpush1.xpose.msra.mxu0 0.0
      %2892 = vmatprep.subr.mxu0 0.0
      %2893 = vmatpush1.xpose.msra.mxu0 0.0
      %2894 = vmatprep.subr.mxu0 0.0
      %2895 = vmatpush1.xpose.msra.mxu0 0.0
      %2896 = vmatprep.subr.mxu0 0.0
      %2897 = vmatpush1.xpose.msra.mxu0 0.0
      %2898 = vmatprep.subr.mxu0 0.0
      %2899 = vmatpush1.xpose.msra.mxu0 0.0
      %2900 = vmatprep.subr.mxu0 0.0
      %2901 = vmatpush1.xpose.msra.mxu0 0.0
      %2902 = vmatprep.subr.mxu0 0.0
      %2903 = vmatpush1.xpose.msra.mxu0 0.0
      %2904 = vmatprep.subr.mxu0 0.0
      %2905 = vmatpush1.xpose.msra.mxu0 0.0
      %2906 = vmatprep.mubr.f32.mxu0 0.0
      %2907 = vmatmul.mubr.f32.gmra.mrb[0].mxu0 %v2828
      %v2908 = vpop.f32.mrb[0].mxu0
      %v2909 = vadd.f32 0.0, %v2908
      %v2910 = vpop.f32.mrb[0].mxu0
      %2911 = vdwg.mxu0
      %v2912 = vmul.f32 %v2418, %v2909
      %v2913 = vrcp.pop %v2415
      %v2914 = vmul.f32 %v2912, %v2913
      %v2916 = vsel %vm2424, %v2914, 0
      %v2919 = vsel %vm2424, %v2089, 0
      %v2922 = vsel %vm2424, %v2090, 0
      %v2925 = vsel %vm2424, %v2091, 0
      %v2928 = vsel %vm2424, %v2092, 0
      %v2931 = vsel %vm2424, %v2093, 0
      %v2934 = vsel %vm2424, %v2094, 0
      %v2937 = vsel %vm2424, %v2095, 0
      %v2940 = vsel %vm2424, %v2096, 0
      %v2943 = vsel %vm2424, %v2097, 0
      %v2946 = vsel %vm2424, %v2098, 0
      %v2949 = vsel %vm2424, %v2099, 0
      %v2952 = vsel %vm2424, %v2100, 0
      %v2955 = vsel %vm2424, %v2101, 0
      %v2958 = vsel %vm2424, %v2102, 0
      %v2961 = vsel %vm2424, %v2103, 0
      %v2964 = vsel %vm2424, %v2104, 0
      %v2967 = vsel %vm2424, %v2105, 0
      %v2970 = vsel %vm2424, %v2106, 0
      %v2973 = vsel %vm2424, %v2107, 0
      %v2976 = vsel %vm2424, %v2108, 0
      %v2979 = vsel %vm2424, %v2109, 0
      %v2982 = vsel %vm2424, %v2110, 0
      %v2985 = vsel %vm2424, %v2111, 0
      %v2988 = vsel %vm2424, %v2112, 0
      %v2991 = vsel %vm2424, %v2113, 0
      %v2994 = vsel %vm2424, %v2114, 0
      %v2997 = vsel %vm2424, %v2115, 0
      %v3000 = vsel %vm2424, %v2116, 0
      %v3003 = vsel %vm2424, %v2117, 0
      %v3006 = vsel %vm2424, %v2118, 0
      %v3009 = vsel %vm2424, %v2119, 0
      %v3012 = vsel %vm2424, %v2120, 0
      %v3015 = vsel %vm2424, %v2121, 0
      %v3018 = vsel %vm2424, %v2122, 0
      %v3021 = vsel %vm2424, %v2123, 0
      %v3024 = vsel %vm2424, %v2124, 0
      %v3027 = vsel %vm2424, %v2125, 0
      %v3030 = vsel %vm2424, %v2126, 0
      %v3033 = vsel %vm2424, %v2127, 0
      %v3036 = vsel %vm2424, %v2128, 0
      %v3039 = vsel %vm2424, %v2129, 0
      %v3042 = vsel %vm2424, %v2130, 0
      %v3045 = vsel %vm2424, %v2131, 0
      %v3048 = vsel %vm2424, %v2132, 0
      %v3051 = vsel %vm2424, %v2133, 0
      %v3054 = vsel %vm2424, %v2134, 0
      %v3057 = vsel %vm2424, %v2135, 0
      %v3060 = vsel %vm2424, %v2136, 0
      %3062 = vmatprep.subr.mxu0 0.0
      %3063 = vmatpush1.xpose.msra.mxu0 %v2919
      %3064 = vmatprep.subr.mxu0 0.0
      %3065 = vmatpush1.xpose.msra.mxu0 %v2922
      %3066 = vmatprep.subr.mxu0 0.0
      %3067 = vmatpush1.xpose.msra.mxu0 %v2925
      %3068 = vmatprep.subr.mxu0 0.0
      %3069 = vmatpush1.xpose.msra.mxu0 %v2928
      %3070 = vmatprep.subr.mxu0 0.0
      %3071 = vmatpush1.xpose.msra.mxu0 %v2931
      %3072 = vmatprep.subr.mxu0 0.0
      %3073 = vmatpush1.xpose.msra.mxu0 %v2934
      %3074 = vmatprep.subr.mxu0 0.0
      %3075 = vmatpush1.xpose.msra.mxu0 %v2937
      %3076 = vmatprep.subr.mxu0 0.0
      %3077 = vmatpush1.xpose.msra.mxu0 %v2940
      %3078 = vmatprep.subr.mxu0 0.0
      %3079 = vmatpush1.xpose.msra.mxu0 %v2943
      %3080 = vmatprep.subr.mxu0 0.0
      %3081 = vmatpush1.xpose.msra.mxu0 %v2946
      %3082 = vmatprep.subr.mxu0 0.0
      %3083 = vmatpush1.xpose.msra.mxu0 %v2949
      %3084 = vmatprep.subr.mxu0 0.0
      %3085 = vmatpush1.xpose.msra.mxu0 %v2952
      %3086 = vmatprep.subr.mxu0 0.0
      %3087 = vmatpush1.xpose.msra.mxu0 %v2955
      %3088 = vmatprep.subr.mxu0 0.0
      %3089 = vmatpush1.xpose.msra.mxu0 %v2958
      %3090 = vmatprep.subr.mxu0 0.0
      %3091 = vmatpush1.xpose.msra.mxu0 %v2961
      %3092 = vmatprep.subr.mxu0 0.0
      %3093 = vmatpush1.xpose.msra.mxu0 %v2964
      %3094 = vmatprep.subr.mxu0 0.0
      %3095 = vmatpush1.xpose.msra.mxu0 %v2967
      %3096 = vmatprep.subr.mxu0 0.0
      %3097 = vmatpush1.xpose.msra.mxu0 %v2970
      %3098 = vmatprep.subr.mxu0 0.0
      %3099 = vmatpush1.xpose.msra.mxu0 %v2973
      %3100 = vmatprep.subr.mxu0 0.0
      %3101 = vmatpush1.xpose.msra.mxu0 %v2976
      %3102 = vmatprep.subr.mxu0 0.0
      %3103 = vmatpush1.xpose.msra.mxu0 %v2979
      %3104 = vmatprep.subr.mxu0 0.0
      %3105 = vmatpush1.xpose.msra.mxu0 %v2982
      %3106 = vmatprep.subr.mxu0 0.0
      %3107 = vmatpush1.xpose.msra.mxu0 %v2985
      %3108 = vmatprep.subr.mxu0 0.0
      %3109 = vmatpush1.xpose.msra.mxu0 %v2988
      %3110 = vmatprep.subr.mxu0 0.0
      %3111 = vmatpush1.xpose.msra.mxu0 %v2991
      %3112 = vmatprep.subr.mxu0 0.0
      %3113 = vmatpush1.xpose.msra.mxu0 %v2994
      %3114 = vmatprep.subr.mxu0 0.0
      %3115 = vmatpush1.xpose.msra.mxu0 %v2997
      %3116 = vmatprep.subr.mxu0 0.0
      %3117 = vmatpush1.xpose.msra.mxu0 %v3000
      %3118 = vmatprep.subr.mxu0 0.0
      %3119 = vmatpush1.xpose.msra.mxu0 %v3003
      %3120 = vmatprep.subr.mxu0 0.0
      %3121 = vmatpush1.xpose.msra.mxu0 %v3006
      %3122 = vmatprep.subr.mxu0 0.0
      %3123 = vmatpush1.xpose.msra.mxu0 %v3009
      %3124 = vmatprep.subr.mxu0 0.0
      %3125 = vmatpush1.xpose.msra.mxu0 %v3012
      %3126 = vmatprep.mubr.f32.mxu0 0.0
      %3127 = vmatmul.mubr.f32.gmra.mrb[0].mxu0 %v2916
      %v3128 = vpop.f32.mrb[0].mxu0
      %v3129 = vadd.f32 0.0, %v3128
      %v3130 = vpop.f32.mrb[0].mxu0
      %v3131 = vadd.f32 0.0, %v3130
      %3132 = vdwg.mxu0
      %3133 = vmatprep.subr.mxu0 0.0
      %3134 = vmatpush1.xpose.msra.mxu0 %v3015
      %3135 = vmatprep.subr.mxu0 0.0
      %3136 = vmatpush1.xpose.msra.mxu0 %v3018
      %3137 = vmatprep.subr.mxu0 0.0
      %3138 = vmatpush1.xpose.msra.mxu0 %v3021
      %3139 = vmatprep.subr.mxu0 0.0
      %3140 = vmatpush1.xpose.msra.mxu0 %v3024
      %3141 = vmatprep.subr.mxu0 0.0
      %3142 = vmatpush1.xpose.msra.mxu0 %v3027
      %3143 = vmatprep.subr.mxu0 0.0
      %3144 = vmatpush1.xpose.msra.mxu0 %v3030
      %3145 = vmatprep.subr.mxu0 0.0
      %3146 = vmatpush1.xpose.msra.mxu0 %v3033
      %3147 = vmatprep.subr.mxu0 0.0
      %3148 = vmatpush1.xpose.msra.mxu0 %v3036
      %3149 = vmatprep.subr.mxu0 0.0
      %3150 = vmatpush1.xpose.msra.mxu0 %v3039
      %3151 = vmatprep.subr.mxu0 0.0
      %3152 = vmatpush1.xpose.msra.mxu0 %v3042
      %3153 = vmatprep.subr.mxu0 0.0
      %3154 = vmatpush1.xpose.msra.mxu0 %v3045
      %3155 = vmatprep.subr.mxu0 0.0
      %3156 = vmatpush1.xpose.msra.mxu0 %v3048
      %3157 = vmatprep.subr.mxu0 0.0
      %3158 = vmatpush1.xpose.msra.mxu0 %v3051
      %3159 = vmatprep.subr.mxu0 0.0
      %3160 = vmatpush1.xpose.msra.mxu0 %v3054
      %3161 = vmatprep.subr.mxu0 0.0
      %3162 = vmatpush1.xpose.msra.mxu0 %v3057
      %3163 = vmatprep.subr.mxu0 0.0
      %3164 = vmatpush1.xpose.msra.mxu0 %v3060
      %3165 = vmatprep.subr.mxu0 0.0
      %3166 = vmatpush1.xpose.msra.mxu0 0.0
      %3167 = vmatprep.subr.mxu0 0.0
      %3168 = vmatpush1.xpose.msra.mxu0 0.0
      %3169 = vmatprep.subr.mxu0 0.0
      %3170 = vmatpush1.xpose.msra.mxu0 0.0
      %3171 = vmatprep.subr.mxu0 0.0
      %3172 = vmatpush1.xpose.msra.mxu0 0.0
      %3173 = vmatprep.subr.mxu0 0.0
      %3174 = vmatpush1.xpose.msra.mxu0 0.0
      %3175 = vmatprep.subr.mxu0 0.0
      %3176 = vmatpush1.xpose.msra.mxu0 0.0
      %3177 = vmatprep.subr.mxu0 0.0
      %3178 = vmatpush1.xpose.msra.mxu0 0.0
      %3179 = vmatprep.subr.mxu0 0.0
      %3180 = vmatpush1.xpose.msra.mxu0 0.0
      %3181 = vmatprep.subr.mxu0 0.0
      %3182 = vmatpush1.xpose.msra.mxu0 0.0
      %3183 = vmatprep.subr.mxu0 0.0
      %3184 = vmatpush1.xpose.msra.mxu0 0.0
      %3185 = vmatprep.subr.mxu0 0.0
      %3186 = vmatpush1.xpose.msra.mxu0 0.0
      %3187 = vmatprep.subr.mxu0 0.0
      %3188 = vmatpush1.xpose.msra.mxu0 0.0
      %3189 = vmatprep.subr.mxu0 0.0
      %3190 = vmatpush1.xpose.msra.mxu0 0.0
      %3191 = vmatprep.subr.mxu0 0.0
      %3192 = vmatpush1.xpose.msra.mxu0 0.0
      %3193 = vmatprep.subr.mxu0 0.0
      %3194 = vmatpush1.xpose.msra.mxu0 0.0
      %3195 = vmatprep.subr.mxu0 0.0
      %3196 = vmatpush1.xpose.msra.mxu0 0.0
      %3197 = vmatprep.mubr.f32.mxu0 0.0
      %3198 = vmatmul.mubr.f32.gmra.mrb[0].mxu0 %v2916
      %v3199 = vpop.f32.mrb[0].mxu0
      %v3200 = vadd.f32 0.0, %v3199
      %v3201 = vpop.f32.mrb[0].mxu0
      %3202 = vdwg.mxu0
      %v3203 = vlaneseq
      %v3204 = vshrl.u32 %v3203, 7
      %v3205 = vsub.s32 0, %v3204
      %v3206 = vrot.slane %v3129, %v3205
      %v3207 = vlaneseq
      %v3208 = vshrl.u32 %v3207, 7
      %v3209 = vsub.s32 0, %v3208
      %v3210 = vrot.slane %v3131, %v3209
      %v3211 = vlaneseq
      %v3212 = vshrl.u32 %v3211, 7
      %v3213 = vsub.s32 0, %v3212
      %v3214 = vrot.slane %v3200, %v3213
      %v3215 = vmul.f32 %v1327, %v3206
      %v3216 = vmul.f32 %v1328, %v3210
      %v3217 = vmul.f32 %v1329, %v3214
      %v3218 = vmul.f32 %v1330, %v3206
      %v3219 = vmul.f32 %v1331, %v3210
      %v3220 = vmul.f32 %v1332, %v3214
      %3221 = vmatprep.subr.mxu0 0.0
      %3222 = vmatpush1.msra.mxu0 %v1684
      %3223 = vmatprep.subr.mxu0 0.0
      %3224 = vmatpush1.msra.mxu0 %v1685
      %3225 = vmatprep.subr.mxu0 0.0
      %3226 = vmatpush1.msra.mxu0 %v1686
      %3227 = vmatprep.subr.mxu0 0.0
      %3228 = vmatpush1.msra.mxu0 %v1687
      %3229 = vmatprep.subr.mxu0 0.0
      %3230 = vmatpush1.msra.mxu0 %v1688
      %3231 = vmatprep.subr.mxu0 0.0
      %3232 = vmatpush1.msra.mxu0 %v1689
      %3233 = vmatprep.subr.mxu0 0.0
      %3234 = vmatpush1.msra.mxu0 %v1690
      %3235 = vmatprep.subr.mxu0 0.0
      %3236 = vmatpush1.msra.mxu0 %v1691
      %3237 = vmatprep.subr.mxu0 0.0
      %3238 = vmatpush1.msra.mxu0 %v1692
      %3239 = vmatprep.subr.mxu0 0.0
      %3240 = vmatpush1.msra.mxu0 %v1693
      %3241 = vmatprep.subr.mxu0 0.0
      %3242 = vmatpush1.msra.mxu0 %v1694
      %3243 = vmatprep.subr.mxu0 0.0
      %3244 = vmatpush1.msra.mxu0 %v1695
      %3245 = vmatprep.subr.mxu0 0.0
      %3246 = vmatpush1.msra.mxu0 %v1696
      %3247 = vmatprep.subr.mxu0 0.0
      %3248 = vmatpush1.msra.mxu0 %v1697
      %3249 = vmatprep.subr.mxu0 0.0
      %3250 = vmatpush1.msra.mxu0 %v1698
      %3251 = vmatprep.subr.mxu0 0.0
      %3252 = vmatpush1.msra.mxu0 %v1699
      %3253 = vmatprep.subr.mxu0 0.0
      %3254 = vmatpush1.msra.mxu0 %v1700
      %3255 = vmatprep.subr.mxu0 0.0
      %3256 = vmatpush1.msra.mxu0 %v1701
      %3257 = vmatprep.subr.mxu0 0.0
      %3258 = vmatpush1.msra.mxu0 %v1702
      %3259 = vmatprep.subr.mxu0 0.0
      %3260 = vmatpush1.msra.mxu0 %v1703
      %3261 = vmatprep.subr.mxu0 0.0
      %3262 = vmatpush1.msra.mxu0 %v1704
      %3263 = vmatprep.subr.mxu0 0.0
      %3264 = vmatpush1.msra.mxu0 %v1705
      %3265 = vmatprep.subr.mxu0 0.0
      %3266 = vmatpush1.msra.mxu0 %v1706
      %3267 = vmatprep.subr.mxu0 0.0
      %3268 = vmatpush1.msra.mxu0 %v1707
      %3269 = vmatprep.subr.mxu0 0.0
      %3270 = vmatpush1.msra.mxu0 %v1708
      %3271 = vmatprep.subr.mxu0 0.0
      %3272 = vmatpush1.msra.mxu0 %v1709
      %3273 = vmatprep.subr.mxu0 0.0
      %3274 = vmatpush1.msra.mxu0 %v1710
      %3275 = vmatprep.subr.mxu0 0.0
      %3276 = vmatpush1.msra.mxu0 %v1711
      %3277 = vmatprep.subr.mxu0 0.0
      %3278 = vmatpush1.msra.mxu0 %v1712
      %3279 = vmatprep.subr.mxu0 0.0
      %3280 = vmatpush1.msra.mxu0 %v1713
      %3281 = vmatprep.subr.mxu0 0.0
      %3282 = vmatpush1.msra.mxu0 %v1714
      %3283 = vmatprep.subr.mxu0 0.0
      %3284 = vmatpush1.msra.mxu0 %v1715
      %3285 = vmatprep.mubr.f32.mxu0 %v3216
      %3286 = vmatmul.mubr.f32.gmra.mrb[0].mxu0 %v3215
      %v3287 = vpop.f32.mrb[0].mxu0
      %v3288 = vadd.f32 0.0, %v3287
      %v3289 = vpop.f32.mrb[0].mxu0
      %3290 = vmatprep.mubr.f32.mxu0 %v3219
      %3291 = vmatmul.mubr.f32.gmra.mrb[0].mxu0 %v3218
      %v3292 = vpop.f32.mrb[0].mxu0
      %v3293 = vadd.f32 0.0, %v3292
      %v3294 = vpop.f32.mrb[0].mxu0
      %3295 = vdwg.mxu0
      %3296 = vmatprep.subr.mxu0 0.0
      %3297 = vmatpush1.msra.mxu0 %v1716
      %3298 = vmatprep.subr.mxu0 0.0
      %3299 = vmatpush1.msra.mxu0 %v1717
      %3300 = vmatprep.subr.mxu0 0.0
      %3301 = vmatpush1.msra.mxu0 %v1718
      %3302 = vmatprep.subr.mxu0 0.0
      %3303 = vmatpush1.msra.mxu0 %v1719
      %3304 = vmatprep.subr.mxu0 0.0
      %3305 = vmatpush1.msra.mxu0 %v1720
      %3306 = vmatprep.subr.mxu0 0.0
      %3307 = vmatpush1.msra.mxu0 %v1721
      %3308 = vmatprep.subr.mxu0 0.0
      %3309 = vmatpush1.msra.mxu0 %v1722
      %3310 = vmatprep.subr.mxu0 0.0
      %3311 = vmatpush1.msra.mxu0 %v1723
      %3312 = vmatprep.subr.mxu0 0.0
      %3313 = vmatpush1.msra.mxu0 %v1724
      %3314 = vmatprep.subr.mxu0 0.0
      %3315 = vmatpush1.msra.mxu0 %v1725
      %3316 = vmatprep.subr.mxu0 0.0
      %3317 = vmatpush1.msra.mxu0 %v1726
      %3318 = vmatprep.subr.mxu0 0.0
      %3319 = vmatpush1.msra.mxu0 %v1727
      %3320 = vmatprep.subr.mxu0 0.0
      %3321 = vmatpush1.msra.mxu0 %v1728
      %3322 = vmatprep.subr.mxu0 0.0
      %3323 = vmatpush1.msra.mxu0 %v1729
      %3324 = vmatprep.subr.mxu0 0.0
      %3325 = vmatpush1.msra.mxu0 %v1730
      %3326 = vmatprep.subr.mxu0 0.0
      %3327 = vmatpush1.msra.mxu0 %v1731
      %3328 = vmatprep.subr.mxu0 0.0
      %3329 = vmatpush1.msra.mxu0 0.0
      %3330 = vmatprep.subr.mxu0 0.0
      %3331 = vmatpush1.msra.mxu0 0.0
      %3332 = vmatprep.subr.mxu0 0.0
      %3333 = vmatpush1.msra.mxu0 0.0
      %3334 = vmatprep.subr.mxu0 0.0
      %3335 = vmatpush1.msra.mxu0 0.0
      %3336 = vmatprep.subr.mxu0 0.0
      %3337 = vmatpush1.msra.mxu0 0.0
      %3338 = vmatprep.subr.mxu0 0.0
      %3339 = vmatpush1.msra.mxu0 0.0
      %3340 = vmatprep.subr.mxu0 0.0
      %3341 = vmatpush1.msra.mxu0 0.0
      %3342 = vmatprep.subr.mxu0 0.0
      %3343 = vmatpush1.msra.mxu0 0.0
      %3344 = vmatprep.subr.mxu0 0.0
      %3345 = vmatpush1.msra.mxu0 0.0
      %3346 = vmatprep.subr.mxu0 0.0
      %3347 = vmatpush1.msra.mxu0 0.0
      %3348 = vmatprep.subr.mxu0 0.0
      %3349 = vmatpush1.msra.mxu0 0.0
      %3350 = vmatprep.subr.mxu0 0.0
      %3351 = vmatpush1.msra.mxu0 0.0
      %3352 = vmatprep.subr.mxu0 0.0
      %3353 = vmatpush1.msra.mxu0 0.0
      %3354 = vmatprep.subr.mxu0 0.0
      %3355 = vmatpush1.msra.mxu0 0.0
      %3356 = vmatprep.subr.mxu0 0.0
      %3357 = vmatpush1.msra.mxu0 0.0
      %3358 = vmatprep.subr.mxu0 0.0
      %3359 = vmatpush1.msra.mxu0 0.0
      %3360 = vmatprep.mubr.f32.mxu0 0.0
      %3361 = vmatmul.mubr.f32.gmra.mrb[0].mxu0 %v3217
      %v3362 = vpop.f32.mrb[0].mxu0
      %v3363 = vadd.f32 %v3288, %v3362
      %v3364 = vpop.f32.mrb[0].mxu0
      %3365 = vmatprep.mubr.f32.mxu0 0.0
      %3366 = vmatmul.mubr.f32.gmra.mrb[0].mxu0 %v3220
      %v3367 = vpop.f32.mrb[0].mxu0
      %v3368 = vadd.f32 %v3293, %v3367
      %v3369 = vpop.f32.mrb[0].mxu0
      %3370 = vdwg.mxu0
      %v3371 = vmul.f32 %v1325, %v3363
      %v3372 = vmul.f32 %v1326, %v3368
      %v3373 = vadd.f32 %v1323, 1e-05
      %v3374 = vadd.f32 %v1324, 1e-05
      %v3375 = vrcp.pop %v3373
      %v3376 = vmul.f32 %v3371, %v3375
      %v3377 = vrcp.pop %v3374
      %v3378 = vmul.f32 %v3372, %v3377
      %3379 = vst.msk [vmem:[#allocation2] sm:$0xff] %vm764, 0.0
      %vm3380 = vcmask 914432
      %3381 = vst.msk [vmem:[#allocation2 + $0x8] sm:$0x3f] %vm3380, 0.0
      %v3382 = vld [vmem:[%s17] sm:$0xff]
      %v3383 = vld [vmem:[%s17 + $0x8] sm:$0xff]
      %v3384 = vld [vmem:[%s17 + $0x10] sm:$0xff]
      %v3385 = vld [vmem:[%s17 + $0x18] sm:$0xff]
      %v3386 = vld [vmem:[%s17 + $0x20] sm:$0xff]
      %v3387 = vld [vmem:[%s17 + $0x28] sm:$0xff]
      %v3388 = vld [vmem:[%s17 + $0x30] sm:$0xff]
      %v3389 = vld [vmem:[%s17 + $0x38] sm:$0xff]
      %v3390 = vld [vmem:[%s17 + $0x40] sm:$0xff]
      %v3391 = vld [vmem:[%s17 + $0x48] sm:$0xff]
      %v3392 = vld [vmem:[%s17 + $0x50] sm:$0xff]
      %v3393 = vld [vmem:[%s17 + $0x58] sm:$0xff]
      %v3395 = vsel %vm1381, %v3376, 0
      %v3398 = vsel %vm1381, %v3378, 0
      %3400 = vmatprep.subr.mxu0 0.0
      %3401 = vmatpush1.msra.mxu0 %v3382
      %3402 = vmatprep.subr.mxu0 0.0
      %3403 = vmatpush1.msra.mxu0 %v3383
      %3404 = vmatprep.subr.mxu0 0.0
      %3405 = vmatpush1.msra.mxu0 %v3384
      %3406 = vmatprep.subr.mxu0 0.0
      %3407 = vmatpush1.msra.mxu0 %v3385
      %3408 = vmatprep.subr.mxu0 0.0
      %3409 = vmatpush1.msra.mxu0 %v3386
      %3410 = vmatprep.subr.mxu0 0.0
      %3411 = vmatpush1.msra.mxu0 %v3387
      %3412 = vmatprep.subr.mxu0 0.0
      %3413 = vmatpush1.msra.mxu0 %v3388
      %3414 = vmatprep.subr.mxu0 0.0
      %3415 = vmatpush1.msra.mxu0 %v3389
      %3416 = vmatprep.subr.mxu0 0.0
      %3417 = vmatpush1.msra.mxu0 %v3390
      %3418 = vmatprep.subr.mxu0 0.0
      %3419 = vmatpush1.msra.mxu0 %v3391
      %3420 = vmatprep.subr.mxu0 0.0
      %3421 = vmatpush1.msra.mxu0 %v3392
      %3422 = vmatprep.subr.mxu0 0.0
      %3423 = vmatpush1.msra.mxu0 %v3393
      %3424 = vmatprep.subr.mxu0 0.0
      %3425 = vmatpush1.msra.mxu0 0.0
      %3426 = vmatprep.subr.mxu0 0.0
      %3427 = vmatpush1.msra.mxu0 0.0
      %3428 = vmatprep.subr.mxu0 0.0
      %3429 = vmatpush1.msra.mxu0 0.0
      %3430 = vmatprep.subr.mxu0 0.0
      %3431 = vmatpush1.msra.mxu0 0.0
      %3432 = vmatprep.subr.mxu0 0.0
      %3433 = vmatpush1.msra.mxu0 0.0
      %3434 = vmatprep.subr.mxu0 0.0
      %3435 = vmatpush1.msra.mxu0 0.0
      %3436 = vmatprep.subr.mxu0 0.0
      %3437 = vmatpush1.msra.mxu0 0.0
      %3438 = vmatprep.subr.mxu0 0.0
      %3439 = vmatpush1.msra.mxu0 0.0
      %3440 = vmatprep.subr.mxu0 0.0
      %3441 = vmatpush1.msra.mxu0 0.0
      %3442 = vmatprep.subr.mxu0 0.0
      %3443 = vmatpush1.msra.mxu0 0.0
      %3444 = vmatprep.subr.mxu0 0.0
      %3445 = vmatpush1.msra.mxu0 0.0
      %3446 = vmatprep.subr.mxu0 0.0
      %3447 = vmatpush1.msra.mxu0 0.0
      %3448 = vmatprep.subr.mxu0 0.0
      %3449 = vmatpush1.msra.mxu0 0.0
      %3450 = vmatprep.subr.mxu0 0.0
      %3451 = vmatpush1.msra.mxu0 0.0
      %3452 = vmatprep.subr.mxu0 0.0
      %3453 = vmatpush1.msra.mxu0 0.0
      %3454 = vmatprep.subr.mxu0 0.0
      %3455 = vmatpush1.msra.mxu0 0.0
      %3456 = vmatprep.subr.mxu0 0.0
      %3457 = vmatpush1.msra.mxu0 0.0
      %3458 = vmatprep.subr.mxu0 0.0
      %3459 = vmatpush1.msra.mxu0 0.0
      %3460 = vmatprep.subr.mxu0 0.0
      %3461 = vmatpush1.msra.mxu0 0.0
      %3462 = vmatprep.subr.mxu0 0.0
      %3463 = vmatpush1.msra.mxu0 0.0
      %3464 = vmatprep.mubr.f32.mxu0 0.0
      %3465 = vmatmul.mubr.f32.gmra.mrb[0].mxu0 %v3395
      %v3466 = vpop.f32.mrb[0].mxu0
      %v3467 = vadd.f32 0.0, %v3466
      %v3468 = vpop.f32.mrb[0].mxu0
      %3469 = vmatprep.mubr.f32.mxu0 0.0
      %3470 = vmatmul.mubr.f32.gmra.mrb[0].mxu0 %v3398
      %v3471 = vpop.f32.mrb[0].mxu0
      %v3472 = vadd.f32 0.0, %v3471
      %v3473 = vpop.f32.mrb[0].mxu0
      %3474 = vdwg.mxu0
      %v3475 = vld [vmem:[#allocation2] sm:$0xff]
      %v3476 = vld [vmem:[#allocation2 + $0x8] sm:$0xf]
      %v3477 = vadd.f32 %v3475, %v3467
      %v3478 = vadd.f32 %v3476, %v3472
      %3479 = vst.msk [vmem:[#allocation2] sm:$0xff] %vm764, %v3477
      %vm3480 = vcmask 912384
      %3481 = vst.msk [vmem:[#allocation2 + $0x8] sm:$0xf] %vm3480, %v3478
      %s3482 = scalar_lea.vmem %s17, 96
      %v3483 = vld [vmem:[%s3482] sm:$0xff]
      %v3484 = vld [vmem:[%s3482 + $0x8] sm:$0xff]
      %v3485 = vld [vmem:[%s3482 + $0x10] sm:$0xff]
      %v3486 = vld [vmem:[%s3482 + $0x18] sm:$0xff]
      %v3487 = vld [vmem:[%s3482 + $0x20] sm:$0xff]
      %v3488 = vld [vmem:[%s3482 + $0x28] sm:$0xff]
      %v3489 = vld [vmem:[%s3482 + $0x30] sm:$0xff]
      %v3490 = vld [vmem:[%s3482 + $0x38] sm:$0xff]
      %v3491 = vld [vmem:[%s3482 + $0x40] sm:$0xff]
      %v3492 = vld [vmem:[%s3482 + $0x48] sm:$0xff]
      %v3493 = vld [vmem:[%s3482 + $0x50] sm:$0xff]
      %v3494 = vld [vmem:[%s3482 + $0x58] sm:$0xff]
      %3495 = vmatprep.subr.mxu0 0.0
      %3496 = vmatpush1.msra.mxu0 %v3483
      %3497 = vmatprep.subr.mxu0 0.0
      %3498 = vmatpush1.msra.mxu0 %v3484
      %3499 = vmatprep.subr.mxu0 0.0
      %3500 = vmatpush1.msra.mxu0 %v3485
      %3501 = vmatprep.subr.mxu0 0.0
      %3502 = vmatpush1.msra.mxu0 %v3486
      %3503 = vmatprep.subr.mxu0 0.0
      %3504 = vmatpush1.msra.mxu0 %v3487
      %3505 = vmatprep.subr.mxu0 0.0
      %3506 = vmatpush1.msra.mxu0 %v3488
      %3507 = vmatprep.subr.mxu0 0.0
      %3508 = vmatpush1.msra.mxu0 %v3489
      %3509 = vmatprep.subr.mxu0 0.0
      %3510 = vmatpush1.msra.mxu0 %v3490
      %3511 = vmatprep.subr.mxu0 0.0
      %3512 = vmatpush1.msra.mxu0 %v3491
      %3513 = vmatprep.subr.mxu0 0.0
      %3514 = vmatpush1.msra.mxu0 %v3492
      %3515 = vmatprep.subr.mxu0 0.0
      %3516 = vmatpush1.msra.mxu0 %v3493
      %3517 = vmatprep.subr.mxu0 0.0
      %3518 = vmatpush1.msra.mxu0 %v3494
      %3519 = vmatprep.subr.mxu0 0.0
      %3520 = vmatpush1.msra.mxu0 0.0
      %3521 = vmatprep.subr.mxu0 0.0
      %3522 = vmatpush1.msra.mxu0 0.0
      %3523 = vmatprep.subr.mxu0 0.0
      %3524 = vmatpush1.msra.mxu0 0.0
      %3525 = vmatprep.subr.mxu0 0.0
      %3526 = vmatpush1.msra.mxu0 0.0
      %3527 = vmatprep.subr.mxu0 0.0
      %3528 = vmatpush1.msra.mxu0 0.0
      %3529 = vmatprep.subr.mxu0 0.0
      %3530 = vmatpush1.msra.mxu0 0.0
      %3531 = vmatprep.subr.mxu0 0.0
      %3532 = vmatpush1.msra.mxu0 0.0
      %3533 = vmatprep.subr.mxu0 0.0
      %3534 = vmatpush1.msra.mxu0 0.0
      %3535 = vmatprep.subr.mxu0 0.0
      %3536 = vmatpush1.msra.mxu0 0.0
      %3537 = vmatprep.subr.mxu0 0.0
      %3538 = vmatpush1.msra.mxu0 0.0
      %3539 = vmatprep.subr.mxu0 0.0
      %3540 = vmatpush1.msra.mxu0 0.0
      %3541 = vmatprep.subr.mxu0 0.0
      %3542 = vmatpush1.msra.mxu0 0.0
      %3543 = vmatprep.subr.mxu0 0.0
      %3544 = vmatpush1.msra.mxu0 0.0
      %3545 = vmatprep.subr.mxu0 0.0
      %3546 = vmatpush1.msra.mxu0 0.0
      %3547 = vmatprep.subr.mxu0 0.0
      %3548 = vmatpush1.msra.mxu0 0.0
      %3549 = vmatprep.subr.mxu0 0.0
      %3550 = vmatpush1.msra.mxu0 0.0
      %3551 = vmatprep.subr.mxu0 0.0
      %3552 = vmatpush1.msra.mxu0 0.0
      %3553 = vmatprep.subr.mxu0 0.0
      %3554 = vmatpush1.msra.mxu0 0.0
      %3555 = vmatprep.subr.mxu0 0.0
      %3556 = vmatpush1.msra.mxu0 0.0
      %3557 = vmatprep.subr.mxu0 0.0
      %3558 = vmatpush1.msra.mxu0 0.0
      %3559 = vmatprep.mubr.f32.mxu0 0.0
      %3560 = vmatmul.mubr.f32.gmra.mrb[0].mxu0 %v3395
      %v3561 = vpop.f32.mrb[0].mxu0
      %v3562 = vadd.f32 0.0, %v3561
      %v3563 = vpop.f32.mrb[0].mxu0
      %3564 = vmatprep.mubr.f32.mxu0 0.0
      %3565 = vmatmul.mubr.f32.gmra.mrb[0].mxu0 %v3398
      %v3566 = vpop.f32.mrb[0].mxu0
      %v3567 = vadd.f32 0.0, %v3566
      %v3568 = vpop.f32.mrb[0].mxu0
      %3569 = vdwg.mxu0
      %v3570 = vld [vmem:[#allocation2 + $0x1] sm:$0xff]
      %v3571 = vld [vmem:[#allocation2 + $0x9] sm:$0xf]
      %v3572 = vadd.f32 %v3570, %v3562
      %v3573 = vadd.f32 %v3571, %v3567
      %3574 = vst.msk [vmem:[#allocation2 + $0x1] sm:$0xff] %vm764, %v3572
      %3575 = vst.msk [vmem:[#allocation2 + $0x9] sm:$0xf] %vm3480, %v3573
      %s3576 = scalar_lea.vmem %s17, 192
      %v3577 = vld [vmem:[%s3576] sm:$0xff]
      %v3578 = vld [vmem:[%s3576 + $0x8] sm:$0xff]
      %v3579 = vld [vmem:[%s3576 + $0x10] sm:$0xff]
      %v3580 = vld [vmem:[%s3576 + $0x18] sm:$0xff]
      %v3581 = vld [vmem:[%s3576 + $0x20] sm:$0xff]
      %v3582 = vld [vmem:[%s3576 + $0x28] sm:$0xff]
      %v3583 = vld [vmem:[%s3576 + $0x30] sm:$0xff]
      %v3584 = vld [vmem:[%s3576 + $0x38] sm:$0xff]
      %v3585 = vld [vmem:[%s3576 + $0x40] sm:$0xff]
      %v3586 = vld [vmem:[%s3576 + $0x48] sm:$0xff]
      %v3587 = vld [vmem:[%s3576 + $0x50] sm:$0xff]
      %v3588 = vld [vmem:[%s3576 + $0x58] sm:$0xff]
      %3589 = vmatprep.subr.mxu0 0.0
      %3590 = vmatpush1.msra.mxu0 %v3577
      %3591 = vmatprep.subr.mxu0 0.0
      %3592 = vmatpush1.msra.mxu0 %v3578
      %3593 = vmatprep.subr.mxu0 0.0
      %3594 = vmatpush1.msra.mxu0 %v3579
      %3595 = vmatprep.subr.mxu0 0.0
      %3596 = vmatpush1.msra.mxu0 %v3580
      %3597 = vmatprep.subr.mxu0 0.0
      %3598 = vmatpush1.msra.mxu0 %v3581
      %3599 = vmatprep.subr.mxu0 0.0
      %3600 = vmatpush1.msra.mxu0 %v3582
      %3601 = vmatprep.subr.mxu0 0.0
      %3602 = vmatpush1.msra.mxu0 %v3583
      %3603 = vmatprep.subr.mxu0 0.0
      %3604 = vmatpush1.msra.mxu0 %v3584
      %3605 = vmatprep.subr.mxu0 0.0
      %3606 = vmatpush1.msra.mxu0 %v3585
      %3607 = vmatprep.subr.mxu0 0.0
      %3608 = vmatpush1.msra.mxu0 %v3586
      %3609 = vmatprep.subr.mxu0 0.0
      %3610 = vmatpush1.msra.mxu0 %v3587
      %3611 = vmatprep.subr.mxu0 0.0
      %3612 = vmatpush1.msra.mxu0 %v3588
      %3613 = vmatprep.subr.mxu0 0.0
      %3614 = vmatpush1.msra.mxu0 0.0
      %3615 = vmatprep.subr.mxu0 0.0
      %3616 = vmatpush1.msra.mxu0 0.0
      %3617 = vmatprep.subr.mxu0 0.0
      %3618 = vmatpush1.msra.mxu0 0.0
      %3619 = vmatprep.subr.mxu0 0.0
      %3620 = vmatpush1.msra.mxu0 0.0
      %3621 = vmatprep.subr.mxu0 0.0
      %3622 = vmatpush1.msra.mxu0 0.0
      %3623 = vmatprep.subr.mxu0 0.0
      %3624 = vmatpush1.msra.mxu0 0.0
      %3625 = vmatprep.subr.mxu0 0.0
      %3626 = vmatpush1.msra.mxu0 0.0
      %3627 = vmatprep.subr.mxu0 0.0
      %3628 = vmatpush1.msra.mxu0 0.0
      %3629 = vmatprep.subr.mxu0 0.0
      %3630 = vmatpush1.msra.mxu0 0.0
      %3631 = vmatprep.subr.mxu0 0.0
      %3632 = vmatpush1.msra.mxu0 0.0
      %3633 = vmatprep.subr.mxu0 0.0
      %3634 = vmatpush1.msra.mxu0 0.0
      %3635 = vmatprep.subr.mxu0 0.0
      %3636 = vmatpush1.msra.mxu0 0.0
      %3637 = vmatprep.subr.mxu0 0.0
      %3638 = vmatpush1.msra.mxu0 0.0
      %3639 = vmatprep.subr.mxu0 0.0
      %3640 = vmatpush1.msra.mxu0 0.0
      %3641 = vmatprep.subr.mxu0 0.0
      %3642 = vmatpush1.msra.mxu0 0.0
      %3643 = vmatprep.subr.mxu0 0.0
      %3644 = vmatpush1.msra.mxu0 0.0
      %3645 = vmatprep.subr.mxu0 0.0
      %3646 = vmatpush1.msra.mxu0 0.0
      %3647 = vmatprep.subr.mxu0 0.0
      %3648 = vmatpush1.msra.mxu0 0.0
      %3649 = vmatprep.subr.mxu0 0.0
      %3650 = vmatpush1.msra.mxu0 0.0
      %3651 = vmatprep.subr.mxu0 0.0
      %3652 = vmatpush1.msra.mxu0 0.0
      %3653 = vmatprep.mubr.f32.mxu0 0.0
      %3654 = vmatmul.mubr.f32.gmra.mrb[0].mxu0 %v3395
      %v3655 = vpop.f32.mrb[0].mxu0
      %v3656 = vadd.f32 0.0, %v3655
      %v3657 = vpop.f32.mrb[0].mxu0
      %3658 = vmatprep.mubr.f32.mxu0 0.0
      %3659 = vmatmul.mubr.f32.gmra.mrb[0].mxu0 %v3398
      %v3660 = vpop.f32.mrb[0].mxu0
      %v3661 = vadd.f32 0.0, %v3660
      %v3662 = vpop.f32.mrb[0].mxu0
      %3663 = vdwg.mxu0
      %v3664 = vld [vmem:[#allocation2 + $0x2] sm:$0xff]
      %v3665 = vld [vmem:[#allocation2 + $0xa] sm:$0xf]
      %v3666 = vadd.f32 %v3664, %v3656
      %v3667 = vadd.f32 %v3665, %v3661
      %3668 = vst.msk [vmem:[#allocation2 + $0x2] sm:$0xff] %vm764, %v3666
      %3669 = vst.msk [vmem:[#allocation2 + $0xa] sm:$0xf] %vm3480, %v3667
      %v3670 = vld [vmem:[#allocation2] sm:$0xff]
      %v3671 = vld [vmem:[#allocation2 + $0x8] sm:$0x3f]
      %v3672 = vmul.f32 %v747, %v3670
      %v3673 = vmul.f32 %v748, %v3671
      %v3674 = vld [vmem:[%s19] sm:$0x1]
      %v3676 = vlaneseq
      %v3677 = vshrl.u32 %v3676, 7
      %v3678 = vsub.s32 0, %v3677
      %v3679 = vrot.slane %v3674, %v3678
      %v3681 = vrcp.pop %v3679
      %v3682 = vmul.f32 %v3672, %v3681
      %v3683 = vmul.f32 %v3673, %v3681
      %3684 = vst.msk [vmem:[#allocation3] sm:$0xff] %vm665, 0.0
      %3685 = vst.msk [vmem:[#allocation3 + $0x8] sm:$0xff] %vm665, 0.0
      %v3686 = vld [vmem:[%s18] sm:$0xff]
      %v3687 = vld [vmem:[%s18 + $0x8] sm:$0xff]
      %v3688 = vld [vmem:[%s18 + $0x10] sm:$0xff]
      %v3689 = vld [vmem:[%s18 + $0x18] sm:$0xff]
      %v3690 = vld [vmem:[%s18 + $0x20] sm:$0xff]
      %v3691 = vld [vmem:[%s18 + $0x28] sm:$0xff]
      %v3692 = vld [vmem:[%s18 + $0x30] sm:$0xff]
      %v3693 = vld [vmem:[%s18 + $0x38] sm:$0xff]
      %v3694 = vld [vmem:[%s18 + $0x40] sm:$0xff]
      %v3695 = vld [vmem:[%s18 + $0x48] sm:$0xff]
      %v3696 = vld [vmem:[%s18 + $0x50] sm:$0xff]
      %v3697 = vld [vmem:[%s18 + $0x58] sm:$0xff]
      %v3698 = vld [vmem:[%s18 + $0x60] sm:$0xff]
      %v3699 = vld [vmem:[%s18 + $0x68] sm:$0xff]
      %v3701 = vsel %vm764, %v3682, 0
      %v3704 = vsel %vm764, %v3683, 0
      %3706 = vmatprep.subr.mxu0 0.0
      %3707 = vmatpush1.msra.mxu0 %v3686
      %3708 = vmatprep.subr.mxu0 0.0
      %3709 = vmatpush1.msra.mxu0 %v3687
      %3710 = vmatprep.subr.mxu0 0.0
      %3711 = vmatpush1.msra.mxu0 %v3688
      %3712 = vmatprep.subr.mxu0 0.0
      %3713 = vmatpush1.msra.mxu0 %v3689
      %3714 = vmatprep.subr.mxu0 0.0
      %3715 = vmatpush1.msra.mxu0 %v3690
      %3716 = vmatprep.subr.mxu0 0.0
      %3717 = vmatpush1.msra.mxu0 %v3691
      %3718 = vmatprep.subr.mxu0 0.0
      %3719 = vmatpush1.msra.mxu0 %v3692
      %3720 = vmatprep.subr.mxu0 0.0
      %3721 = vmatpush1.msra.mxu0 %v3693
      %3722 = vmatprep.subr.mxu0 0.0
      %3723 = vmatpush1.msra.mxu0 %v3694
      %3724 = vmatprep.subr.mxu0 0.0
      %3725 = vmatpush1.msra.mxu0 %v3695
      %3726 = vmatprep.subr.mxu0 0.0
      %3727 = vmatpush1.msra.mxu0 %v3696
      %3728 = vmatprep.subr.mxu0 0.0
      %3729 = vmatpush1.msra.mxu0 %v3697
      %3730 = vmatprep.subr.mxu0 0.0
      %3731 = vmatpush1.msra.mxu0 %v3698
      %3732 = vmatprep.subr.mxu0 0.0
      %3733 = vmatpush1.msra.mxu0 %v3699
      %3734 = vmatprep.subr.mxu0 0.0
      %3735 = vmatpush1.msra.mxu0 0.0
      %3736 = vmatprep.subr.mxu0 0.0
      %3737 = vmatpush1.msra.mxu0 0.0
      %3738 = vmatprep.subr.mxu0 0.0
      %3739 = vmatpush1.msra.mxu0 0.0
      %3740 = vmatprep.subr.mxu0 0.0
      %3741 = vmatpush1.msra.mxu0 0.0
      %3742 = vmatprep.subr.mxu0 0.0
      %3743 = vmatpush1.msra.mxu0 0.0
      %3744 = vmatprep.subr.mxu0 0.0
      %3745 = vmatpush1.msra.mxu0 0.0
      %3746 = vmatprep.subr.mxu0 0.0
      %3747 = vmatpush1.msra.mxu0 0.0
      %3748 = vmatprep.subr.mxu0 0.0
      %3749 = vmatpush1.msra.mxu0 0.0
      %3750 = vmatprep.subr.mxu0 0.0
      %3751 = vmatpush1.msra.mxu0 0.0
      %3752 = vmatprep.subr.mxu0 0.0
      %3753 = vmatpush1.msra.mxu0 0.0
      %3754 = vmatprep.subr.mxu0 0.0
      %3755 = vmatpush1.msra.mxu0 0.0
      %3756 = vmatprep.subr.mxu0 0.0
      %3757 = vmatpush1.msra.mxu0 0.0
      %3758 = vmatprep.subr.mxu0 0.0
      %3759 = vmatpush1.msra.mxu0 0.0
      %3760 = vmatprep.subr.mxu0 0.0
      %3761 = vmatpush1.msra.mxu0 0.0
      %3762 = vmatprep.subr.mxu0 0.0
      %3763 = vmatpush1.msra.mxu0 0.0
      %3764 = vmatprep.subr.mxu0 0.0
      %3765 = vmatpush1.msra.mxu0 0.0
      %3766 = vmatprep.subr.mxu0 0.0
      %3767 = vmatpush1.msra.mxu0 0.0
      %3768 = vmatprep.subr.mxu0 0.0
      %3769 = vmatpush1.msra.mxu0 0.0
      %3770 = vmatprep.mubr.f32.mxu0 0.0
      %3771 = vmatmul.mubr.f32.gmra.mrb[0].mxu0 %v3701
      %v3772 = vpop.f32.mrb[0].mxu0
      %v3773 = vadd.f32 0.0, %v3772
      %v3774 = vpop.f32.mrb[0].mxu0
      %3775 = vmatprep.mubr.f32.mxu0 0.0
      %3776 = vmatmul.mubr.f32.gmra.mrb[0].mxu0 %v3704
      %v3777 = vpop.f32.mrb[0].mxu0
      %v3778 = vadd.f32 0.0, %v3777
      %v3779 = vpop.f32.mrb[0].mxu0
      %3780 = vdwg.mxu0
      %v3781 = vld [vmem:[#allocation3] sm:$0xff]
      %v3782 = vld [vmem:[#allocation3 + $0x8] sm:$0x3f]
      %v3783 = vadd.f32 %v3781, %v3773
      %v3784 = vadd.f32 %v3782, %v3778
      %3785 = vst.msk [vmem:[#allocation3] sm:$0xff] %vm665, %v3783
      %vm3786 = vcmask 521216
      %3787 = vst.msk [vmem:[#allocation3 + $0x8] sm:$0x3f] %vm3786, %v3784
      %s3788 = scalar_lea.vmem %s18, 112
      %v3789 = vld [vmem:[%s3788] sm:$0xff]
      %v3790 = vld [vmem:[%s3788 + $0x8] sm:$0xff]
      %v3791 = vld [vmem:[%s3788 + $0x10] sm:$0xff]
      %v3792 = vld [vmem:[%s3788 + $0x18] sm:$0xff]
      %v3793 = vld [vmem:[%s3788 + $0x20] sm:$0xff]
      %v3794 = vld [vmem:[%s3788 + $0x28] sm:$0xff]
      %v3795 = vld [vmem:[%s3788 + $0x30] sm:$0xff]
      %v3796 = vld [vmem:[%s3788 + $0x38] sm:$0xff]
      %v3797 = vld [vmem:[%s3788 + $0x40] sm:$0xff]
      %v3798 = vld [vmem:[%s3788 + $0x48] sm:$0xff]
      %v3799 = vld [vmem:[%s3788 + $0x50] sm:$0xff]
      %v3800 = vld [vmem:[%s3788 + $0x58] sm:$0xff]
      %v3801 = vld [vmem:[%s3788 + $0x60] sm:$0xff]
      %v3802 = vld [vmem:[%s3788 + $0x68] sm:$0xff]
      %3803 = vmatprep.subr.mxu0 0.0
      %3804 = vmatpush1.msra.mxu0 %v3789
      %3805 = vmatprep.subr.mxu0 0.0
      %3806 = vmatpush1.msra.mxu0 %v3790
      %3807 = vmatprep.subr.mxu0 0.0
      %3808 = vmatpush1.msra.mxu0 %v3791
      %3809 = vmatprep.subr.mxu0 0.0
      %3810 = vmatpush1.msra.mxu0 %v3792
      %3811 = vmatprep.subr.mxu0 0.0
      %3812 = vmatpush1.msra.mxu0 %v3793
      %3813 = vmatprep.subr.mxu0 0.0
      %3814 = vmatpush1.msra.mxu0 %v3794
      %3815 = vmatprep.subr.mxu0 0.0
      %3816 = vmatpush1.msra.mxu0 %v3795
      %3817 = vmatprep.subr.mxu0 0.0
      %3818 = vmatpush1.msra.mxu0 %v3796
      %3819 = vmatprep.subr.mxu0 0.0
      %3820 = vmatpush1.msra.mxu0 %v3797
      %3821 = vmatprep.subr.mxu0 0.0
      %3822 = vmatpush1.msra.mxu0 %v3798
      %3823 = vmatprep.subr.mxu0 0.0
      %3824 = vmatpush1.msra.mxu0 %v3799
      %3825 = vmatprep.subr.mxu0 0.0
      %3826 = vmatpush1.msra.mxu0 %v3800
      %3827 = vmatprep.subr.mxu0 0.0
      %3828 = vmatpush1.msra.mxu0 %v3801
      %3829 = vmatprep.subr.mxu0 0.0
      %3830 = vmatpush1.msra.mxu0 %v3802
      %3831 = vmatprep.subr.mxu0 0.0
      %3832 = vmatpush1.msra.mxu0 0.0
      %3833 = vmatprep.subr.mxu0 0.0
      %3834 = vmatpush1.msra.mxu0 0.0
      %3835 = vmatprep.subr.mxu0 0.0
      %3836 = vmatpush1.msra.mxu0 0.0
      %3837 = vmatprep.subr.mxu0 0.0
      %3838 = vmatpush1.msra.mxu0 0.0
      %3839 = vmatprep.subr.mxu0 0.0
      %3840 = vmatpush1.msra.mxu0 0.0
      %3841 = vmatprep.subr.mxu0 0.0
      %3842 = vmatpush1.msra.mxu0 0.0
      %3843 = vmatprep.subr.mxu0 0.0
      %3844 = vmatpush1.msra.mxu0 0.0
      %3845 = vmatprep.subr.mxu0 0.0
      %3846 = vmatpush1.msra.mxu0 0.0
      %3847 = vmatprep.subr.mxu0 0.0
      %3848 = vmatpush1.msra.mxu0 0.0
      %3849 = vmatprep.subr.mxu0 0.0
      %3850 = vmatpush1.msra.mxu0 0.0
      %3851 = vmatprep.subr.mxu0 0.0
      %3852 = vmatpush1.msra.mxu0 0.0
      %3853 = vmatprep.subr.mxu0 0.0
      %3854 = vmatpush1.msra.mxu0 0.0
      %3855 = vmatprep.subr.mxu0 0.0
      %3856 = vmatpush1.msra.mxu0 0.0
      %3857 = vmatprep.subr.mxu0 0.0
      %3858 = vmatpush1.msra.mxu0 0.0
      %3859 = vmatprep.subr.mxu0 0.0
      %3860 = vmatpush1.msra.mxu0 0.0
      %3861 = vmatprep.subr.mxu0 0.0
      %3862 = vmatpush1.msra.mxu0 0.0
      %3863 = vmatprep.subr.mxu0 0.0
      %3864 = vmatpush1.msra.mxu0 0.0
      %3865 = vmatprep.subr.mxu0 0.0
      %3866 = vmatpush1.msra.mxu0 0.0
      %3867 = vmatprep.mubr.f32.mxu0 0.0
      %3868 = vmatmul.mubr.f32.gmra.mrb[0].mxu0 %v3701
      %v3869 = vpop.f32.mrb[0].mxu0
      %v3870 = vadd.f32 0.0, %v3869
      %v3871 = vpop.f32.mrb[0].mxu0
      %3872 = vmatprep.mubr.f32.mxu0 0.0
      %3873 = vmatmul.mubr.f32.gmra.mrb[0].mxu0 %v3704
      %v3874 = vpop.f32.mrb[0].mxu0
      %v3875 = vadd.f32 0.0, %v3874
      %v3876 = vpop.f32.mrb[0].mxu0
      %3877 = vdwg.mxu0
      %v3878 = vld [vmem:[#allocation3 + $0x1] sm:$0xff]
      %v3879 = vld [vmem:[#allocation3 + $0x9] sm:$0x3f]
      %v3880 = vadd.f32 %v3878, %v3870
      %v3881 = vadd.f32 %v3879, %v3875
      %3882 = vst.msk [vmem:[#allocation3 + $0x1] sm:$0xff] %vm665, %v3880
      %3883 = vst.msk [vmem:[#allocation3 + $0x9] sm:$0x3f] %vm3786, %v3881
      %s3884 = scalar_lea.vmem %s18, 224
      %v3885 = vld [vmem:[%s3884] sm:$0xff]
      %v3886 = vld [vmem:[%s3884 + $0x8] sm:$0xff]
      %v3887 = vld [vmem:[%s3884 + $0x10] sm:$0xff]
      %v3888 = vld [vmem:[%s3884 + $0x18] sm:$0xff]
      %v3889 = vld [vmem:[%s3884 + $0x20] sm:$0xff]
      %v3890 = vld [vmem:[%s3884 + $0x28] sm:$0xff]
      %v3891 = vld [vmem:[%s3884 + $0x30] sm:$0xff]
      %v3892 = vld [vmem:[%s3884 + $0x38] sm:$0xff]
      %v3893 = vld [vmem:[%s3884 + $0x40] sm:$0xff]
      %v3894 = vld [vmem:[%s3884 + $0x48] sm:$0xff]
      %v3895 = vld [vmem:[%s3884 + $0x50] sm:$0xff]
      %v3896 = vld [vmem:[%s3884 + $0x58] sm:$0xff]
      %v3897 = vld [vmem:[%s3884 + $0x60] sm:$0xff]
      %v3898 = vld [vmem:[%s3884 + $0x68] sm:$0xff]
      %3899 = vmatprep.subr.mxu0 0.0
      %3900 = vmatpush1.msra.mxu0 %v3885
      %3901 = vmatprep.subr.mxu0 0.0
      %3902 = vmatpush1.msra.mxu0 %v3886
      %3903 = vmatprep.subr.mxu0 0.0
      %3904 = vmatpush1.msra.mxu0 %v3887
      %3905 = vmatprep.subr.mxu0 0.0
      %3906 = vmatpush1.msra.mxu0 %v3888
      %3907 = vmatprep.subr.mxu0 0.0
      %3908 = vmatpush1.msra.mxu0 %v3889
      %3909 = vmatprep.subr.mxu0 0.0
      %3910 = vmatpush1.msra.mxu0 %v3890
      %3911 = vmatprep.subr.mxu0 0.0
      %3912 = vmatpush1.msra.mxu0 %v3891
      %3913 = vmatprep.subr.mxu0 0.0
      %3914 = vmatpush1.msra.mxu0 %v3892
      %3915 = vmatprep.subr.mxu0 0.0
      %3916 = vmatpush1.msra.mxu0 %v3893
      %3917 = vmatprep.subr.mxu0 0.0
      %3918 = vmatpush1.msra.mxu0 %v3894
      %3919 = vmatprep.subr.mxu0 0.0
      %3920 = vmatpush1.msra.mxu0 %v3895
      %3921 = vmatprep.subr.mxu0 0.0
      %3922 = vmatpush1.msra.mxu0 %v3896
      %3923 = vmatprep.subr.mxu0 0.0
      %3924 = vmatpush1.msra.mxu0 %v3897
      %3925 = vmatprep.subr.mxu0 0.0
      %3926 = vmatpush1.msra.mxu0 %v3898
      %3927 = vmatprep.subr.mxu0 0.0
      %3928 = vmatpush1.msra.mxu0 0.0
      %3929 = vmatprep.subr.mxu0 0.0
      %3930 = vmatpush1.msra.mxu0 0.0
      %3931 = vmatprep.subr.mxu0 0.0
      %3932 = vmatpush1.msra.mxu0 0.0
      %3933 = vmatprep.subr.mxu0 0.0
      %3934 = vmatpush1.msra.mxu0 0.0
      %3935 = vmatprep.subr.mxu0 0.0
      %3936 = vmatpush1.msra.mxu0 0.0
      %3937 = vmatprep.subr.mxu0 0.0
      %3938 = vmatpush1.msra.mxu0 0.0
      %3939 = vmatprep.subr.mxu0 0.0
      %3940 = vmatpush1.msra.mxu0 0.0
      %3941 = vmatprep.subr.mxu0 0.0
      %3942 = vmatpush1.msra.mxu0 0.0
      %3943 = vmatprep.subr.mxu0 0.0
      %3944 = vmatpush1.msra.mxu0 0.0
      %3945 = vmatprep.subr.mxu0 0.0
      %3946 = vmatpush1.msra.mxu0 0.0
      %3947 = vmatprep.subr.mxu0 0.0
      %3948 = vmatpush1.msra.mxu0 0.0
      %3949 = vmatprep.subr.mxu0 0.0
      %3950 = vmatpush1.msra.mxu0 0.0
      %3951 = vmatprep.subr.mxu0 0.0
      %3952 = vmatpush1.msra.mxu0 0.0
      %3953 = vmatprep.subr.mxu0 0.0
      %3954 = vmatpush1.msra.mxu0 0.0
      %3955 = vmatprep.subr.mxu0 0.0
      %3956 = vmatpush1.msra.mxu0 0.0
      %3957 = vmatprep.subr.mxu0 0.0
      %3958 = vmatpush1.msra.mxu0 0.0
      %3959 = vmatprep.subr.mxu0 0.0
      %3960 = vmatpush1.msra.mxu0 0.0
      %3961 = vmatprep.subr.mxu0 0.0
      %3962 = vmatpush1.msra.mxu0 0.0
      %3963 = vmatprep.mubr.f32.mxu0 0.0
      %3964 = vmatmul.mubr.f32.gmra.mrb[0].mxu0 %v3701
      %v3965 = vpop.f32.mrb[0].mxu0
      %v3966 = vadd.f32 0.0, %v3965
      %v3967 = vpop.f32.mrb[0].mxu0
      %3968 = vmatprep.mubr.f32.mxu0 0.0
      %3969 = vmatmul.mubr.f32.gmra.mrb[0].mxu0 %v3704
      %v3970 = vpop.f32.mrb[0].mxu0
      %v3971 = vadd.f32 0.0, %v3970
      %v3972 = vpop.f32.mrb[0].mxu0
      %3973 = vdwg.mxu0
      %v3974 = vld [vmem:[#allocation3 + $0x2] sm:$0xff]
      %v3975 = vld [vmem:[#allocation3 + $0xa] sm:$0x3f]
      %v3976 = vadd.f32 %v3974, %v3966
      %v3977 = vadd.f32 %v3975, %v3971
      %3978 = vst.msk [vmem:[#allocation3 + $0x2] sm:$0xff] %vm665, %v3976
      %3979 = vst.msk [vmem:[#allocation3 + $0xa] sm:$0x3f] %vm3786, %v3977
      %v3980 = vld [vmem:[#allocation3] sm:$0xff]
      %v3981 = vld [vmem:[#allocation3 + $0x8] sm:$0xff]
      %3982 = vst.msk [vmem:[%s629] sm:$0xff] %vm665, %v3980
      %3983 = vst.msk [vmem:[%s629 + $0x8] sm:$0xff] %vm665, %v3981
      %p3984 = scmp.lt.s32.totalorder %s31, 1
      %s3985 = scalar_select %p3984, %s31, 1
      %s3986 = smul.addr %s3985, 2
      %s3987 = smul.addr %s3986, 8
      %s3988 = scalar_lea.vmem %s20, %s3987
      // Predicated region
      $region101: #{lrp_model_forward.1} parent=99 // pred_check
        %p3989 = pneg %p474
      $region102: #{lrp_model_forward.1} parent=99 // pred_check_branch
        %3991 = sbr.rel (%p3989) target = $region104
      $region103: #{lrp_model_forward.1} parent=99 // pred_region
        _
      $region104: #{lrp_model_forward.1} parent=99 // pred_fallthru
        _
    $region100: #{lrp_model_forward.1} parent=5 // pred_fallthru
      _
    %p3992 = scmp.le.s32.totalorder 2, %s26
    // Predicated region
    $region105: #{lrp_model_forward.1} parent=5 // pred_check
      %p3993 = pneg %p3992
    $region106: #{lrp_model_forward.1} parent=5 // pred_check_branch
      %3995 = sbr.rel (%p3993) target = $region108
    $region107: #{lrp_model_forward.1} parent=5 // pred_region
      %s3996 = ssub.s32 %s26, 2
      // Predicated region
      $region109: #{lrp_model_forward.1} parent=107 // pred_check
        %p3997 = pneg %p480
      $region110: #{lrp_model_forward.1} parent=107 // pred_check_branch
        %3999 = sbr.rel (%p3997) target = $region112
      $region111: #{lrp_model_forward.1} parent=107 // pred_region
        %p4000 = scmp.lt.s32.totalorder %s32, 1
        %s4001 = scalar_select %p4000, %s32, 1
        %s4002 = smul.addr %s4001, 2
        %s4003 = smul.addr %s4002, 8
        %s4004 = scalar_lea.vmem %s20, %s4003
      $region112: #{lrp_model_forward.1} parent=107 // pred_fallthru
        _
    $region108: #{lrp_model_forward.1} parent=5 // pred_fallthru
      _
  $region6: #{lrp_model_forward.1} parent=0 // loop_footer
    %s30 = sadd.s32 1, %s26
  $region7: #{lrp_model_forward.1} parent=0 // loop_footer_branch
    %25 = sbr.rel target = $region3
  $region8: #{lrp_model_forward.1} parent=0 // loop_exit
    _

</llo_original>
